<compile_context>
chip_gen: v6e
topology: v6e:2x2x1
jax: 0.10.0
libtpu: 0.0.40
codegen_flags: <defaults>
</compile_context>

<pallas_src>
import functools

import jax
import jax.numpy as jnp
from jax.experimental import pallas as pl
from jax.experimental.pallas import tpu as pltpu


# ------------------------------ fused kernel --------------------------------

def _decoder_layer_kernel(
    # activations / masks (per-batch blocks)
    x_ref, z_ref, tgt_ref, src_ref,
    # LN1
    ln1_g, ln1_b,
    # self-attention (scale already folded into wq/bq by the wrapper)
    s_wq, s_bq, s_wk, s_bk, s_wv, s_bv, s_wo, s_bo,
    # LN2
    ln2_g, ln2_b,
    # cross-attention
    c_wq, c_bq, c_wk, c_bk, c_wv, c_bv, c_wo, c_bo,
    # LN3
    ln3_g, ln3_b,
    # feed-forward
    f_w1, f_b1, f_w2, f_b2,
    # output
    o_ref,
    *, num_heads, d_attn, d_mid, mxu_dtype):

    f32 = jnp.float32

    def mm(a, w):
        # (M, K) @ (K, N): bf16 MXU inputs, f32 accumulation.
        return jax.lax.dot_general(
            a.astype(mxu_dtype), w.astype(mxu_dtype),
            dimension_numbers=(((1,), (0,)), ((), ())),
            preferred_element_type=f32)

    def qk(a, b):
        # contract the last dims of both operands -> no explicit k transpose.
        return jax.lax.dot_general(
            a.astype(mxu_dtype), b.astype(mxu_dtype),
            dimension_numbers=(((1,), (1,)), ((), ())),
            preferred_element_type=f32)

    def ln(v, g_ref, b_ref):
        mu = jnp.mean(v, axis=-1, keepdims=True)
        var = jnp.mean((v - mu) ** 2, axis=-1, keepdims=True)
        return (v - mu) * jax.lax.rsqrt(var + 1e-5) * g_ref[...] + b_ref[...]

    def mha(xq, xkv, bias, wq, bq, wk, bk, wv, bv, wo, bo):
        q = mm(xq, wq[...]) + bq[...]          # (Lq, H*d_attn), scale pre-folded
        k = mm(xkv, wk[...]) + bk[...]         # (Lk, H*d_attn)
        v = mm(xkv, wv[...]) + bv[...]         # (Lk, H*d_mid)
        wo_full = wo[...]
        proj = None
        for h in range(num_heads):             # heads split in-register, no HBM transpose
            qh = q[:, h * d_attn:(h + 1) * d_attn]
            kh = k[:, h * d_attn:(h + 1) * d_attn]
            vh = v[:, h * d_mid:(h + 1) * d_mid]
            s = qk(qh, kh) + bias              # (Lq, Lk)
            m = jnp.max(s, axis=-1, keepdims=True)
            p = jnp.exp(s - m)
            l = jnp.sum(p, axis=-1, keepdims=True)
            oh = mm(p, vh) * pl.reciprocal(l, approx=True)      # (Lq, d_mid)
            # concat(heads) @ Wo  ==  sum_h  head_h @ Wo[h*d_mid:(h+1)*d_mid, :]
            part = mm(oh, wo_full[h * d_mid:(h + 1) * d_mid, :])
            proj = part if proj is None else proj + part
        return proj + bo[...]

    x = x_ref[0].astype(f32)                   # (Lx, d_x)
    z = z_ref[0].astype(f32)                   # (Lz, d_z)

    # combine padding + causal masks ONCE into additive biases.
    # (-1e30 keeps fully-masked rows finite: uniform softmax over V.)
    neg = jnp.float32(-1e30)
    tgt = tgt_ref[0]
    rows = jax.lax.broadcasted_iota(jnp.int32, tgt.shape, 0)
    cols = jax.lax.broadcasted_iota(jnp.int32, tgt.shape, 1)
    self_bias = jnp.where((tgt > 0) & (rows >= cols), 0.0, neg)     # (Lx, Lx)
    cross_bias = jnp.where(src_ref[0] > 0, 0.0, neg)                # (Lx, Lz)

    # --- LN1 + masked self-attention + residual ---
    x1 = ln(x, ln1_g, ln1_b)
    x2 = x1 + mha(x1, x1, self_bias,
                  s_wq, s_bq, s_wk, s_bk, s_wv, s_bv, s_wo, s_bo)
    # --- LN2 + unmasked cross-attention (keys/values from z) + residual ---
    x3 = ln(x2, ln2_g, ln2_b)
    x4 = x3 + mha(x3, z, cross_bias,
                  c_wq, c_bq, c_wk, c_bk, c_wv, c_bv, c_wo, c_bo)
    # --- LN3 + feed-forward + residual ---
    x5 = ln(x4, ln3_g, ln3_b)
    h = jnp.maximum(mm(x5, f_w1[...]) + f_b1[...], 0.0)
    y = mm(h, f_w2[...]) + f_b2[...]
    # TODO(synk): dropout (p_dropout) is identity in eval mode; not applied.

    o_ref[0] = (x5 + y).astype(o_ref.dtype)


# ------------------------------ Python wrapper -------------------------------

def decoder_layer(z, x, src_mask, tgt_mask, params, *, num_heads, d_attn, d_mid,
                  mxu_dtype=jnp.bfloat16):
    B, Lx, d_x = x.shape
    _, Lz, d_z = z.shape
    sa, ca, ff = params["self_attn"], params["cross_attn"], params["ff"]
    assert sa["wo"].shape[1] == d_x, "residual requires d_out == d_x"

    scale = jnp.float32(1.0 / (d_attn ** 0.5))
    r2 = lambda v: v.reshape(1, -1)            # biases / LN params as (1, N)

    inputs = [
        x, z, tgt_mask, src_mask,
        r2(params["ln1_g"]), r2(params["ln1_b"]),
        sa["wq"] * scale, r2(sa["bq"]) * scale,     # fold 1/sqrt(d_attn) into q proj
        sa["wk"], r2(sa["bk"]), sa["wv"], r2(sa["bv"]), sa["wo"], r2(sa["bo"]),
        r2(params["ln2_g"]), r2(params["ln2_b"]),
        ca["wq"] * scale, r2(ca["bq"]) * scale,
        ca["wk"], r2(ca["bk"]), ca["wv"], r2(ca["bv"]), ca["wo"], r2(ca["bo"]),
        r2(params["ln3_g"]), r2(params["ln3_b"]),
        ff["w1"], r2(ff["b1"]), ff["w2"], r2(ff["b2"]),
    ]

    per_batch = lambda a: pl.BlockSpec((1,) + a.shape[1:], lambda b: (b, 0, 0))
    resident = lambda a: pl.BlockSpec(a.shape, lambda b: (0, 0))
    in_specs = ([per_batch(x), per_batch(z), per_batch(tgt_mask), per_batch(src_mask)]
                + [resident(a) for a in inputs[4:]])

    kern = functools.partial(_decoder_layer_kernel, num_heads=num_heads,
                             d_attn=d_attn, d_mid=d_mid, mxu_dtype=mxu_dtype)

    return pl.pallas_call(
        kern,
        out_shape=jax.ShapeDtypeStruct((B, Lx, d_x), jnp.float32),
        grid=(B,),
        in_specs=in_specs,
        out_specs=pl.BlockSpec((1, Lx, d_x), lambda b: (b, 0, 0)),
        compiler_params=pltpu.CompilerParams(
            dimension_semantics=("parallel",)),
    )(*inputs)


# ------------------------------ Parameter init -------------------------------

def init_params(key, *, num_heads, d_attn, d_x, d_z, d_out, d_mid, d_mlp):
    H = num_heads
    ks = jax.random.split(key, 16)
    n = lambda k, shape: (0.02 * jax.random.normal(k, shape)).astype(jnp.float32)
    zeros = lambda shape: jnp.zeros(shape, jnp.float32)

    def attn_params(k0, k1, k2, k3, kv_dim):
        return {
            "wq": n(k0, (d_x, H * d_attn)), "bq": zeros((H * d_attn,)),
            "wk": n(k1, (kv_dim, H * d_attn)), "bk": zeros((H * d_attn,)),
            "wv": n(k2, (kv_dim, H * d_mid)), "bv": zeros((H * d_mid,)),
            "wo": n(k3, (H * d_mid, d_out)), "bo": zeros((d_out,)),
        }

    return {
        "self_attn": attn_params(ks[0], ks[1], ks[2], ks[3], d_x),
        "cross_attn": attn_params(ks[4], ks[5], ks[6], ks[7], d_z),
        "ff": {
            "w1": n(ks[8], (d_x, d_mlp)), "b1": zeros((d_mlp,)),
            "w2": n(ks[9], (d_mlp, d_x)), "b2": zeros((d_x,)),
        },
        "ln1_g": jnp.ones((d_x,), jnp.float32), "ln1_b": zeros((d_x,)),
        "ln2_g": jnp.ones((d_x,), jnp.float32), "ln2_b": zeros((d_x,)),
        "ln3_g": jnp.ones((d_x,), jnp.float32), "ln3_b": zeros((d_x,)),
    }


# ----------------------------------- Main -----------------------------------

if __name__ == "__main__":
    # Lane-dense hyperparameters (H*d_attn = H*d_mid = d_x = 128, d_mlp = 256);
    # d_out == d_x so the residual add is valid, as in the module.
    num_heads, d_attn, d_x, d_z, d_out, d_mid, d_mlp = 4, 32, 128, 128, 128, 32, 256
    B, Lx, Lz = 2, 16, 24

    key = jax.random.PRNGKey(0)
    kx, kz, kp = jax.random.split(key, 3)
    x = jax.random.normal(kx, (B, Lx, d_x), jnp.float32)    # decoder input  [B, Lx, d_x]
    z = jax.random.normal(kz, (B, Lz, d_z), jnp.float32)    # encoder memory [B, Lz, d_z]
    tgt_mask = jnp.ones((B, Lx, Lx), jnp.float32)            # 1 = attend
    src_mask = jnp.ones((B, Lx, Lz), jnp.float32)

    params = init_params(kp, num_heads=num_heads, d_attn=d_attn, d_x=d_x,
                         d_z=d_z, d_out=d_out, d_mid=d_mid, d_mlp=d_mlp)

    fwd = jax.jit(functools.partial(decoder_layer, num_heads=num_heads,
                                    d_attn=d_attn, d_mid=d_mid))
    out = fwd(z, x, src_mask, tgt_mask, params)
    out = jax.block_until_ready(out)
    assert out.shape == (B, Lx, d_x) and bool(jnp.all(jnp.isfinite(out)))
    print("KERNEL_OK")
</pallas_src>

<mosaic_0001>
module attributes {stable_mosaic.version = 11 : i64} {
  func.func @_decoder_layer_kernel(%arg0: i32, %arg1: memref<1x16x128xf32, #tpu.memory_space<vmem>>, %arg2: memref<1x24x128xf32, #tpu.memory_space<vmem>>, %arg3: memref<1x16x16xf32, #tpu.memory_space<vmem>>, %arg4: memref<1x16x24xf32, #tpu.memory_space<vmem>>, %arg5: memref<1x128xf32, #tpu.memory_space<vmem>>, %arg6: memref<1x128xf32, #tpu.memory_space<vmem>>, %arg7: memref<128x128xf32, #tpu.memory_space<vmem>>, %arg8: memref<1x128xf32, #tpu.memory_space<vmem>>, %arg9: memref<128x128xf32, #tpu.memory_space<vmem>>, %arg10: memref<1x128xf32, #tpu.memory_space<vmem>>, %arg11: memref<128x128xf32, #tpu.memory_space<vmem>>, %arg12: memref<1x128xf32, #tpu.memory_space<vmem>>, %arg13: memref<128x128xf32, #tpu.memory_space<vmem>>, %arg14: memref<1x128xf32, #tpu.memory_space<vmem>>, %arg15: memref<1x128xf32, #tpu.memory_space<vmem>>, %arg16: memref<1x128xf32, #tpu.memory_space<vmem>>, %arg17: memref<128x128xf32, #tpu.memory_space<vmem>>, %arg18: memref<1x128xf32, #tpu.memory_space<vmem>>, %arg19: memref<128x128xf32, #tpu.memory_space<vmem>>, %arg20: memref<1x128xf32, #tpu.memory_space<vmem>>, %arg21: memref<128x128xf32, #tpu.memory_space<vmem>>, %arg22: memref<1x128xf32, #tpu.memory_space<vmem>>, %arg23: memref<128x128xf32, #tpu.memory_space<vmem>>, %arg24: memref<1x128xf32, #tpu.memory_space<vmem>>, %arg25: memref<1x128xf32, #tpu.memory_space<vmem>>, %arg26: memref<1x128xf32, #tpu.memory_space<vmem>>, %arg27: memref<128x256xf32, #tpu.memory_space<vmem>>, %arg28: memref<1x256xf32, #tpu.memory_space<vmem>>, %arg29: memref<256x128xf32, #tpu.memory_space<vmem>>, %arg30: memref<1x128xf32, #tpu.memory_space<vmem>>, %arg31: memref<1x16x128xf32, #tpu.memory_space<vmem>>) attributes {dimension_semantics = [#tpu.dimension_semantics<parallel>], iteration_bounds = array<i64: 2>, scalar_prefetch = 0 : i64, scratch_operands = 0 : i64, tpu.core_type = #tpu.core_type<tc>, window_params = [{transform_indices = @transform_0, window_bounds = array<i64: 1, 16, 128>}, {transform_indices = @transform_1, window_bounds = array<i64: 1, 24, 128>}, {transform_indices = @transform_2, window_bounds = array<i64: 1, 16, 16>}, {transform_indices = @transform_3, window_bounds = array<i64: 1, 16, 24>}, {pipeline_mode = #tpu.pipeline_mode<synchronous>, transform_indices = @transform_4, window_bounds = array<i64: 1, 128>}, {pipeline_mode = #tpu.pipeline_mode<synchronous>, transform_indices = @transform_5, window_bounds = array<i64: 1, 128>}, {pipeline_mode = #tpu.pipeline_mode<synchronous>, transform_indices = @transform_6, window_bounds = array<i64: 128, 128>}, {pipeline_mode = #tpu.pipeline_mode<synchronous>, transform_indices = @transform_7, window_bounds = array<i64: 1, 128>}, {pipeline_mode = #tpu.pipeline_mode<synchronous>, transform_indices = @transform_8, window_bounds = array<i64: 128, 128>}, {pipeline_mode = #tpu.pipeline_mode<synchronous>, transform_indices = @transform_9, window_bounds = array<i64: 1, 128>}, {pipeline_mode = #tpu.pipeline_mode<synchronous>, transform_indices = @transform_10, window_bounds = array<i64: 128, 128>}, {pipeline_mode = #tpu.pipeline_mode<synchronous>, transform_indices = @transform_11, window_bounds = array<i64: 1, 128>}, {pipeline_mode = #tpu.pipeline_mode<synchronous>, transform_indices = @transform_12, window_bounds = array<i64: 128, 128>}, {pipeline_mode = #tpu.pipeline_mode<synchronous>, transform_indices = @transform_13, window_bounds = array<i64: 1, 128>}, {pipeline_mode = #tpu.pipeline_mode<synchronous>, transform_indices = @transform_14, window_bounds = array<i64: 1, 128>}, {pipeline_mode = #tpu.pipeline_mode<synchronous>, transform_indices = @transform_15, window_bounds = array<i64: 1, 128>}, {pipeline_mode = #tpu.pipeline_mode<synchronous>, transform_indices = @transform_16, window_bounds = array<i64: 128, 128>}, {pipeline_mode = #tpu.pipeline_mode<synchronous>, transform_indices = @transform_17, window_bounds = array<i64: 1, 128>}, {pipeline_mode = #tpu.pipeline_mode<synchronous>, transform_indices = @transform_18, window_bounds = array<i64: 128, 128>}, {pipeline_mode = #tpu.pipeline_mode<synchronous>, transform_indices = @transform_19, window_bounds = array<i64: 1, 128>}, {pipeline_mode = #tpu.pipeline_mode<synchronous>, transform_indices = @transform_20, window_bounds = array<i64: 128, 128>}, {pipeline_mode = #tpu.pipeline_mode<synchronous>, transform_indices = @transform_21, window_bounds = array<i64: 1, 128>}, {pipeline_mode = #tpu.pipeline_mode<synchronous>, transform_indices = @transform_22, window_bounds = array<i64: 128, 128>}, {pipeline_mode = #tpu.pipeline_mode<synchronous>, transform_indices = @transform_23, window_bounds = array<i64: 1, 128>}, {pipeline_mode = #tpu.pipeline_mode<synchronous>, transform_indices = @transform_24, window_bounds = array<i64: 1, 128>}, {pipeline_mode = #tpu.pipeline_mode<synchronous>, transform_indices = @transform_25, window_bounds = array<i64: 1, 128>}, {pipeline_mode = #tpu.pipeline_mode<synchronous>, transform_indices = @transform_26, window_bounds = array<i64: 128, 256>}, {pipeline_mode = #tpu.pipeline_mode<synchronous>, transform_indices = @transform_27, window_bounds = array<i64: 1, 256>}, {pipeline_mode = #tpu.pipeline_mode<synchronous>, transform_indices = @transform_28, window_bounds = array<i64: 256, 128>}, {pipeline_mode = #tpu.pipeline_mode<synchronous>, transform_indices = @transform_29, window_bounds = array<i64: 1, 128>}, {transform_indices = @transform_30, window_bounds = array<i64: 1, 16, 128>}]} {
    %c0 = arith.constant 0 : index
    %c0_0 = arith.constant 0 : index
    %c0_1 = arith.constant 0 : index
    %0 = vector.load %arg1[%c0, %c0_0, %c0_1] : memref<1x16x128xf32, #tpu.memory_space<vmem>>, vector<1x16x128xf32>
    %1 = vector.shape_cast %0 : vector<1x16x128xf32> to vector<16x128xf32>
    %c0_2 = arith.constant 0 : index
    %c0_3 = arith.constant 0 : index
    %c0_4 = arith.constant 0 : index
    %2 = vector.load %arg2[%c0_2, %c0_3, %c0_4] : memref<1x24x128xf32, #tpu.memory_space<vmem>>, vector<1x24x128xf32>
    %3 = vector.shape_cast %2 : vector<1x24x128xf32> to vector<24x128xf32>
    %c0_5 = arith.constant 0 : index
    %c0_6 = arith.constant 0 : index
    %c0_7 = arith.constant 0 : index
    %4 = vector.load %arg3[%c0_5, %c0_6, %c0_7] : memref<1x16x16xf32, #tpu.memory_space<vmem>>, vector<1x16x16xf32>
    %5 = vector.shape_cast %4 : vector<1x16x16xf32> to vector<16x16xf32>
    %6 = tpu.iota {dimensions = array<i32: 0>} : vector<16x16xi32>
    %7 = tpu.iota {dimensions = array<i32: 1>} : vector<16x16xi32>
    %cst = arith.constant 0.000000e+00 : f32
    %8 = vector.broadcast %cst : f32 to vector<16x16xf32>
    %9 = arith.cmpf ogt, %5, %8 : vector<16x16xf32>
    %10 = arith.cmpi sge, %6, %7 : vector<16x16xi32>
    %11 = arith.andi %9, %10 : vector<16x16xi1>
    %cst_8 = arith.constant 0.000000e+00 : f32
    %cst_9 = arith.constant -1.000000e+30 : f32
    %12 = vector.broadcast %cst_8 : f32 to vector<16x16xf32>
    %13 = vector.broadcast %cst_9 : f32 to vector<16x16xf32>
    %14 = arith.select %11, %12, %13 : vector<16x16xi1>, vector<16x16xf32>
    %c0_10 = arith.constant 0 : index
    %c0_11 = arith.constant 0 : index
    %c0_12 = arith.constant 0 : index
    %15 = vector.load %arg4[%c0_10, %c0_11, %c0_12] : memref<1x16x24xf32, #tpu.memory_space<vmem>>, vector<1x16x24xf32>
    %16 = vector.shape_cast %15 : vector<1x16x24xf32> to vector<16x24xf32>
    %cst_13 = arith.constant 0.000000e+00 : f32
    %17 = vector.broadcast %cst_13 : f32 to vector<16x24xf32>
    %18 = arith.cmpf ogt, %16, %17 : vector<16x24xf32>
    %cst_14 = arith.constant 0.000000e+00 : f32
    %cst_15 = arith.constant -1.000000e+30 : f32
    %19 = vector.broadcast %cst_14 : f32 to vector<16x24xf32>
    %20 = vector.broadcast %cst_15 : f32 to vector<16x24xf32>
    %21 = arith.select %18, %19, %20 : vector<16x24xi1>, vector<16x24xf32>
    %cst_16 = arith.constant dense<0.000000e+00> : vector<16xf32>
    %22 = vector.multi_reduction <add>, %1, %cst_16 [1] : vector<16x128xf32> to vector<16xf32>
    %23 = vector.shape_cast %22 : vector<16xf32> to vector<16x1xf32>
    %cst_17 = arith.constant 1.280000e+02 : f32
    %24 = vector.broadcast %cst_17 : f32 to vector<16x1xf32>
    %25 = arith.divf %23, %24 : vector<16x1xf32>
    %26 = vector.broadcast %25 : vector<16x1xf32> to vector<16x128xf32>
    %27 = arith.subf %1, %26 : vector<16x128xf32>
    %28 = arith.mulf %27, %27 : vector<16x128xf32>
    %cst_18 = arith.constant dense<0.000000e+00> : vector<16xf32>
    %29 = vector.multi_reduction <add>, %28, %cst_18 [1] : vector<16x128xf32> to vector<16xf32>
    %30 = vector.shape_cast %29 : vector<16xf32> to vector<16x1xf32>
    %cst_19 = arith.constant 1.280000e+02 : f32
    %31 = vector.broadcast %cst_19 : f32 to vector<16x1xf32>
    %32 = arith.divf %30, %31 : vector<16x1xf32>
    %33 = vector.broadcast %25 : vector<16x1xf32> to vector<16x128xf32>
    %34 = arith.subf %1, %33 : vector<16x128xf32>
    %cst_20 = arith.constant 9.99999974E-6 : f32
    %35 = vector.broadcast %cst_20 : f32 to vector<16x1xf32>
    %36 = arith.addf %32, %35 : vector<16x1xf32>
    %37 = math.rsqrt %36 : vector<16x1xf32>
    %38 = vector.broadcast %37 : vector<16x1xf32> to vector<16x128xf32>
    %39 = arith.mulf %34, %38 : vector<16x128xf32>
    %c0_21 = arith.constant 0 : index
    %c0_22 = arith.constant 0 : index
    %40 = vector.load %arg5[%c0_21, %c0_22] : memref<1x128xf32, #tpu.memory_space<vmem>>, vector<1x128xf32>
    %41 = vector.broadcast %40 : vector<1x128xf32> to vector<16x128xf32>
    %42 = arith.mulf %39, %41 : vector<16x128xf32>
    %c0_23 = arith.constant 0 : index
    %c0_24 = arith.constant 0 : index
    %43 = vector.load %arg6[%c0_23, %c0_24] : memref<1x128xf32, #tpu.memory_space<vmem>>, vector<1x128xf32>
    %44 = vector.broadcast %43 : vector<1x128xf32> to vector<16x128xf32>
    %45 = arith.addf %42, %44 : vector<16x128xf32>
    %c0_25 = arith.constant 0 : index
    %c0_26 = arith.constant 0 : index
    %46 = vector.load %arg7[%c0_25, %c0_26] : memref<128x128xf32, #tpu.memory_space<vmem>>, vector<128x128xf32>
    %47 = arith.truncf %45 : vector<16x128xf32> to vector<16x128xbf16>
    %48 = arith.truncf %46 : vector<128x128xf32> to vector<128x128xbf16>
    %cst_27 = arith.constant dense<0.000000e+00> : vector<16x128xf32>
    %49 = tpu.matmul %47, %48, %cst_27 {dimension_numbers = #tpu.dot_dimension_numbers<[1], [0], [0], [1], [0, 0, 1, 1], [], []>} : vector<16x128xbf16>, vector<128x128xbf16>, vector<16x128xf32> -> vector<16x128xf32>
    %c0_28 = arith.constant 0 : index
    %c0_29 = arith.constant 0 : index
    %50 = vector.load %arg8[%c0_28, %c0_29] : memref<1x128xf32, #tpu.memory_space<vmem>>, vector<1x128xf32>
    %51 = vector.broadcast %50 : vector<1x128xf32> to vector<16x128xf32>
    %52 = arith.addf %49, %51 : vector<16x128xf32>
    %c0_30 = arith.constant 0 : index
    %c0_31 = arith.constant 0 : index
    %53 = vector.load %arg9[%c0_30, %c0_31] : memref<128x128xf32, #tpu.memory_space<vmem>>, vector<128x128xf32>
    %54 = arith.truncf %45 : vector<16x128xf32> to vector<16x128xbf16>
    %55 = arith.truncf %53 : vector<128x128xf32> to vector<128x128xbf16>
    %cst_32 = arith.constant dense<0.000000e+00> : vector<16x128xf32>
    %56 = tpu.matmul %54, %55, %cst_32 {dimension_numbers = #tpu.dot_dimension_numbers<[1], [0], [0], [1], [0, 0, 1, 1], [], []>} : vector<16x128xbf16>, vector<128x128xbf16>, vector<16x128xf32> -> vector<16x128xf32>
    %c0_33 = arith.constant 0 : index
    %c0_34 = arith.constant 0 : index
    %57 = vector.load %arg10[%c0_33, %c0_34] : memref<1x128xf32, #tpu.memory_space<vmem>>, vector<1x128xf32>
    %58 = vector.broadcast %57 : vector<1x128xf32> to vector<16x128xf32>
    %59 = arith.addf %56, %58 : vector<16x128xf32>
    %c0_35 = arith.constant 0 : index
    %c0_36 = arith.constant 0 : index
    %60 = vector.load %arg11[%c0_35, %c0_36] : memref<128x128xf32, #tpu.memory_space<vmem>>, vector<128x128xf32>
    %61 = arith.truncf %45 : vector<16x128xf32> to vector<16x128xbf16>
    %62 = arith.truncf %60 : vector<128x128xf32> to vector<128x128xbf16>
    %cst_37 = arith.constant dense<0.000000e+00> : vector<16x128xf32>
    %63 = tpu.matmul %61, %62, %cst_37 {dimension_numbers = #tpu.dot_dimension_numbers<[1], [0], [0], [1], [0, 0, 1, 1], [], []>} : vector<16x128xbf16>, vector<128x128xbf16>, vector<16x128xf32> -> vector<16x128xf32>
    %c0_38 = arith.constant 0 : index
    %c0_39 = arith.constant 0 : index
    %64 = vector.load %arg12[%c0_38, %c0_39] : memref<1x128xf32, #tpu.memory_space<vmem>>, vector<1x128xf32>
    %65 = vector.broadcast %64 : vector<1x128xf32> to vector<16x128xf32>
    %66 = arith.addf %63, %65 : vector<16x128xf32>
    %c0_40 = arith.constant 0 : index
    %c0_41 = arith.constant 0 : index
    %67 = vector.load %arg13[%c0_40, %c0_41] : memref<128x128xf32, #tpu.memory_space<vmem>>, vector<128x128xf32>
    %68 = vector.extract_strided_slice %52 {offsets = [0, 0], sizes = [16, 32], strides = [1, 1]} : vector<16x128xf32> to vector<16x32xf32>
    %69 = vector.extract_strided_slice %59 {offsets = [0, 0], sizes = [16, 32], strides = [1, 1]} : vector<16x128xf32> to vector<16x32xf32>
    %70 = vector.extract_strided_slice %66 {offsets = [0, 0], sizes = [16, 32], strides = [1, 1]} : vector<16x128xf32> to vector<16x32xf32>
    %71 = arith.truncf %68 : vector<16x32xf32> to vector<16x32xbf16>
    %72 = arith.truncf %69 : vector<16x32xf32> to vector<16x32xbf16>
    %cst_42 = arith.constant dense<0.000000e+00> : vector<16x16xf32>
    %73 = tpu.matmul %71, %72, %cst_42 {dimension_numbers = #tpu.dot_dimension_numbers<[1], [1], [0], [0], [0, 0, 1, 0], [], []>} : vector<16x32xbf16>, vector<16x32xbf16>, vector<16x16xf32> -> vector<16x16xf32>
    %74 = arith.addf %73, %14 : vector<16x16xf32>
    %cst_43 = arith.constant dense<0xFF800000> : vector<16xf32>
    %75 = vector.multi_reduction <maximumf>, %74, %cst_43 [1] : vector<16x16xf32> to vector<16xf32>
    %76 = vector.shape_cast %75 : vector<16xf32> to vector<16x1xf32>
    %77 = vector.broadcast %76 : vector<16x1xf32> to vector<16x16xf32>
    %78 = arith.subf %74, %77 : vector<16x16xf32>
    %79 = math.exp %78 : vector<16x16xf32>
    %cst_44 = arith.constant dense<0.000000e+00> : vector<16xf32>
    %80 = vector.multi_reduction <add>, %79, %cst_44 [1] : vector<16x16xf32> to vector<16xf32>
    %81 = vector.shape_cast %80 : vector<16xf32> to vector<16x1xf32>
    %82 = arith.truncf %79 : vector<16x16xf32> to vector<16x16xbf16>
    %83 = arith.truncf %70 : vector<16x32xf32> to vector<16x32xbf16>
    %cst_45 = arith.constant dense<0.000000e+00> : vector<16x32xf32>
    %84 = tpu.matmul %82, %83, %cst_45 {dimension_numbers = #tpu.dot_dimension_numbers<[1], [0], [0], [1], [0, 0, 1, 1], [], []>} : vector<16x16xbf16>, vector<16x32xbf16>, vector<16x32xf32> -> vector<16x32xf32>
    %85 = tpu.reciprocal %81 {approx = true} : vector<16x1xf32> -> vector<16x1xf32>
    %86 = vector.broadcast %85 : vector<16x1xf32> to vector<16x32xf32>
    %87 = arith.mulf %84, %86 : vector<16x32xf32>
    %88 = vector.extract_strided_slice %67 {offsets = [0, 0], sizes = [32, 128], strides = [1, 1]} : vector<128x128xf32> to vector<32x128xf32>
    %89 = arith.truncf %87 : vector<16x32xf32> to vector<16x32xbf16>
    %90 = arith.truncf %88 : vector<32x128xf32> to vector<32x128xbf16>
    %cst_46 = arith.constant dense<0.000000e+00> : vector<16x128xf32>
    %91 = tpu.matmul %89, %90, %cst_46 {dimension_numbers = #tpu.dot_dimension_numbers<[1], [0], [0], [1], [0, 0, 1, 1], [], []>} : vector<16x32xbf16>, vector<32x128xbf16>, vector<16x128xf32> -> vector<16x128xf32>
    %92 = vector.extract_strided_slice %52 {offsets = [0, 32], sizes = [16, 32], strides = [1, 1]} : vector<16x128xf32> to vector<16x32xf32>
    %93 = vector.extract_strided_slice %59 {offsets = [0, 32], sizes = [16, 32], strides = [1, 1]} : vector<16x128xf32> to vector<16x32xf32>
    %94 = vector.extract_strided_slice %66 {offsets = [0, 32], sizes = [16, 32], strides = [1, 1]} : vector<16x128xf32> to vector<16x32xf32>
    %95 = arith.truncf %92 : vector<16x32xf32> to vector<16x32xbf16>
    %96 = arith.truncf %93 : vector<16x32xf32> to vector<16x32xbf16>
    %cst_47 = arith.constant dense<0.000000e+00> : vector<16x16xf32>
    %97 = tpu.matmul %95, %96, %cst_47 {dimension_numbers = #tpu.dot_dimension_numbers<[1], [1], [0], [0], [0, 0, 1, 0], [], []>} : vector<16x32xbf16>, vector<16x32xbf16>, vector<16x16xf32> -> vector<16x16xf32>
    %98 = arith.addf %97, %14 : vector<16x16xf32>
    %cst_48 = arith.constant dense<0xFF800000> : vector<16xf32>
    %99 = vector.multi_reduction <maximumf>, %98, %cst_48 [1] : vector<16x16xf32> to vector<16xf32>
    %100 = vector.shape_cast %99 : vector<16xf32> to vector<16x1xf32>
    %101 = vector.broadcast %100 : vector<16x1xf32> to vector<16x16xf32>
    %102 = arith.subf %98, %101 : vector<16x16xf32>
    %103 = math.exp %102 : vector<16x16xf32>
    %cst_49 = arith.constant dense<0.000000e+00> : vector<16xf32>
    %104 = vector.multi_reduction <add>, %103, %cst_49 [1] : vector<16x16xf32> to vector<16xf32>
    %105 = vector.shape_cast %104 : vector<16xf32> to vector<16x1xf32>
    %106 = arith.truncf %103 : vector<16x16xf32> to vector<16x16xbf16>
    %107 = arith.truncf %94 : vector<16x32xf32> to vector<16x32xbf16>
    %cst_50 = arith.constant dense<0.000000e+00> : vector<16x32xf32>
    %108 = tpu.matmul %106, %107, %cst_50 {dimension_numbers = #tpu.dot_dimension_numbers<[1], [0], [0], [1], [0, 0, 1, 1], [], []>} : vector<16x16xbf16>, vector<16x32xbf16>, vector<16x32xf32> -> vector<16x32xf32>
    %109 = tpu.reciprocal %105 {approx = true} : vector<16x1xf32> -> vector<16x1xf32>
    %110 = vector.broadcast %109 : vector<16x1xf32> to vector<16x32xf32>
    %111 = arith.mulf %108, %110 : vector<16x32xf32>
    %112 = vector.extract_strided_slice %67 {offsets = [32, 0], sizes = [32, 128], strides = [1, 1]} : vector<128x128xf32> to vector<32x128xf32>
    %113 = arith.truncf %111 : vector<16x32xf32> to vector<16x32xbf16>
    %114 = arith.truncf %112 : vector<32x128xf32> to vector<32x128xbf16>
    %cst_51 = arith.constant dense<0.000000e+00> : vector<16x128xf32>
    %115 = tpu.matmul %113, %114, %cst_51 {dimension_numbers = #tpu.dot_dimension_numbers<[1], [0], [0], [1], [0, 0, 1, 1], [], []>} : vector<16x32xbf16>, vector<32x128xbf16>, vector<16x128xf32> -> vector<16x128xf32>
    %116 = arith.addf %91, %115 : vector<16x128xf32>
    %117 = vector.extract_strided_slice %52 {offsets = [0, 64], sizes = [16, 32], strides = [1, 1]} : vector<16x128xf32> to vector<16x32xf32>
    %118 = vector.extract_strided_slice %59 {offsets = [0, 64], sizes = [16, 32], strides = [1, 1]} : vector<16x128xf32> to vector<16x32xf32>
    %119 = vector.extract_strided_slice %66 {offsets = [0, 64], sizes = [16, 32], strides = [1, 1]} : vector<16x128xf32> to vector<16x32xf32>
    %120 = arith.truncf %117 : vector<16x32xf32> to vector<16x32xbf16>
    %121 = arith.truncf %118 : vector<16x32xf32> to vector<16x32xbf16>
    %cst_52 = arith.constant dense<0.000000e+00> : vector<16x16xf32>
    %122 = tpu.matmul %120, %121, %cst_52 {dimension_numbers = #tpu.dot_dimension_numbers<[1], [1], [0], [0], [0, 0, 1, 0], [], []>} : vector<16x32xbf16>, vector<16x32xbf16>, vector<16x16xf32> -> vector<16x16xf32>
    %123 = arith.addf %122, %14 : vector<16x16xf32>
    %cst_53 = arith.constant dense<0xFF800000> : vector<16xf32>
    %124 = vector.multi_reduction <maximumf>, %123, %cst_53 [1] : vector<16x16xf32> to vector<16xf32>
    %125 = vector.shape_cast %124 : vector<16xf32> to vector<16x1xf32>
    %126 = vector.broadcast %125 : vector<16x1xf32> to vector<16x16xf32>
    %127 = arith.subf %123, %126 : vector<16x16xf32>
    %128 = math.exp %127 : vector<16x16xf32>
    %cst_54 = arith.constant dense<0.000000e+00> : vector<16xf32>
    %129 = vector.multi_reduction <add>, %128, %cst_54 [1] : vector<16x16xf32> to vector<16xf32>
    %130 = vector.shape_cast %129 : vector<16xf32> to vector<16x1xf32>
    %131 = arith.truncf %128 : vector<16x16xf32> to vector<16x16xbf16>
    %132 = arith.truncf %119 : vector<16x32xf32> to vector<16x32xbf16>
    %cst_55 = arith.constant dense<0.000000e+00> : vector<16x32xf32>
    %133 = tpu.matmul %131, %132, %cst_55 {dimension_numbers = #tpu.dot_dimension_numbers<[1], [0], [0], [1], [0, 0, 1, 1], [], []>} : vector<16x16xbf16>, vector<16x32xbf16>, vector<16x32xf32> -> vector<16x32xf32>
    %134 = tpu.reciprocal %130 {approx = true} : vector<16x1xf32> -> vector<16x1xf32>
    %135 = vector.broadcast %134 : vector<16x1xf32> to vector<16x32xf32>
    %136 = arith.mulf %133, %135 : vector<16x32xf32>
    %137 = vector.extract_strided_slice %67 {offsets = [64, 0], sizes = [32, 128], strides = [1, 1]} : vector<128x128xf32> to vector<32x128xf32>
    %138 = arith.truncf %136 : vector<16x32xf32> to vector<16x32xbf16>
    %139 = arith.truncf %137 : vector<32x128xf32> to vector<32x128xbf16>
    %cst_56 = arith.constant dense<0.000000e+00> : vector<16x128xf32>
    %140 = tpu.matmul %138, %139, %cst_56 {dimension_numbers = #tpu.dot_dimension_numbers<[1], [0], [0], [1], [0, 0, 1, 1], [], []>} : vector<16x32xbf16>, vector<32x128xbf16>, vector<16x128xf32> -> vector<16x128xf32>
    %141 = arith.addf %116, %140 : vector<16x128xf32>
    %142 = vector.extract_strided_slice %52 {offsets = [0, 96], sizes = [16, 32], strides = [1, 1]} : vector<16x128xf32> to vector<16x32xf32>
    %143 = vector.extract_strided_slice %59 {offsets = [0, 96], sizes = [16, 32], strides = [1, 1]} : vector<16x128xf32> to vector<16x32xf32>
    %144 = vector.extract_strided_slice %66 {offsets = [0, 96], sizes = [16, 32], strides = [1, 1]} : vector<16x128xf32> to vector<16x32xf32>
    %145 = arith.truncf %142 : vector<16x32xf32> to vector<16x32xbf16>
    %146 = arith.truncf %143 : vector<16x32xf32> to vector<16x32xbf16>
    %cst_57 = arith.constant dense<0.000000e+00> : vector<16x16xf32>
    %147 = tpu.matmul %145, %146, %cst_57 {dimension_numbers = #tpu.dot_dimension_numbers<[1], [1], [0], [0], [0, 0, 1, 0], [], []>} : vector<16x32xbf16>, vector<16x32xbf16>, vector<16x16xf32> -> vector<16x16xf32>
    %148 = arith.addf %147, %14 : vector<16x16xf32>
    %cst_58 = arith.constant dense<0xFF800000> : vector<16xf32>
    %149 = vector.multi_reduction <maximumf>, %148, %cst_58 [1] : vector<16x16xf32> to vector<16xf32>
    %150 = vector.shape_cast %149 : vector<16xf32> to vector<16x1xf32>
    %151 = vector.broadcast %150 : vector<16x1xf32> to vector<16x16xf32>
    %152 = arith.subf %148, %151 : vector<16x16xf32>
    %153 = math.exp %152 : vector<16x16xf32>
    %cst_59 = arith.constant dense<0.000000e+00> : vector<16xf32>
    %154 = vector.multi_reduction <add>, %153, %cst_59 [1] : vector<16x16xf32> to vector<16xf32>
    %155 = vector.shape_cast %154 : vector<16xf32> to vector<16x1xf32>
    %156 = arith.truncf %153 : vector<16x16xf32> to vector<16x16xbf16>
    %157 = arith.truncf %144 : vector<16x32xf32> to vector<16x32xbf16>
    %cst_60 = arith.constant dense<0.000000e+00> : vector<16x32xf32>
    %158 = tpu.matmul %156, %157, %cst_60 {dimension_numbers = #tpu.dot_dimension_numbers<[1], [0], [0], [1], [0, 0, 1, 1], [], []>} : vector<16x16xbf16>, vector<16x32xbf16>, vector<16x32xf32> -> vector<16x32xf32>
    %159 = tpu.reciprocal %155 {approx = true} : vector<16x1xf32> -> vector<16x1xf32>
    %160 = vector.broadcast %159 : vector<16x1xf32> to vector<16x32xf32>
    %161 = arith.mulf %158, %160 : vector<16x32xf32>
    %162 = vector.extract_strided_slice %67 {offsets = [96, 0], sizes = [32, 128], strides = [1, 1]} : vector<128x128xf32> to vector<32x128xf32>
    %163 = arith.truncf %161 : vector<16x32xf32> to vector<16x32xbf16>
    %164 = arith.truncf %162 : vector<32x128xf32> to vector<32x128xbf16>
    %cst_61 = arith.constant dense<0.000000e+00> : vector<16x128xf32>
    %165 = tpu.matmul %163, %164, %cst_61 {dimension_numbers = #tpu.dot_dimension_numbers<[1], [0], [0], [1], [0, 0, 1, 1], [], []>} : vector<16x32xbf16>, vector<32x128xbf16>, vector<16x128xf32> -> vector<16x128xf32>
    %166 = arith.addf %141, %165 : vector<16x128xf32>
    %c0_62 = arith.constant 0 : index
    %c0_63 = arith.constant 0 : index
    %167 = vector.load %arg14[%c0_62, %c0_63] : memref<1x128xf32, #tpu.memory_space<vmem>>, vector<1x128xf32>
    %168 = vector.broadcast %167 : vector<1x128xf32> to vector<16x128xf32>
    %169 = arith.addf %166, %168 : vector<16x128xf32>
    %170 = arith.addf %45, %169 : vector<16x128xf32>
    %cst_64 = arith.constant dense<0.000000e+00> : vector<16xf32>
    %171 = vector.multi_reduction <add>, %170, %cst_64 [1] : vector<16x128xf32> to vector<16xf32>
    %172 = vector.shape_cast %171 : vector<16xf32> to vector<16x1xf32>
    %cst_65 = arith.constant 1.280000e+02 : f32
    %173 = vector.broadcast %cst_65 : f32 to vector<16x1xf32>
    %174 = arith.divf %172, %173 : vector<16x1xf32>
    %175 = vector.broadcast %174 : vector<16x1xf32> to vector<16x128xf32>
    %176 = arith.subf %170, %175 : vector<16x128xf32>
    %177 = arith.mulf %176, %176 : vector<16x128xf32>
    %cst_66 = arith.constant dense<0.000000e+00> : vector<16xf32>
    %178 = vector.multi_reduction <add>, %177, %cst_66 [1] : vector<16x128xf32> to vector<16xf32>
    %179 = vector.shape_cast %178 : vector<16xf32> to vector<16x1xf32>
    %cst_67 = arith.constant 1.280000e+02 : f32
    %180 = vector.broadcast %cst_67 : f32 to vector<16x1xf32>
    %181 = arith.divf %179, %180 : vector<16x1xf32>
    %182 = vector.broadcast %174 : vector<16x1xf32> to vector<16x128xf32>
    %183 = arith.subf %170, %182 : vector<16x128xf32>
    %cst_68 = arith.constant 9.99999974E-6 : f32
    %184 = vector.broadcast %cst_68 : f32 to vector<16x1xf32>
    %185 = arith.addf %181, %184 : vector<16x1xf32>
    %186 = math.rsqrt %185 : vector<16x1xf32>
    %187 = vector.broadcast %186 : vector<16x1xf32> to vector<16x128xf32>
    %188 = arith.mulf %183, %187 : vector<16x128xf32>
    %c0_69 = arith.constant 0 : index
    %c0_70 = arith.constant 0 : index
    %189 = vector.load %arg15[%c0_69, %c0_70] : memref<1x128xf32, #tpu.memory_space<vmem>>, vector<1x128xf32>
    %190 = vector.broadcast %189 : vector<1x128xf32> to vector<16x128xf32>
    %191 = arith.mulf %188, %190 : vector<16x128xf32>
    %c0_71 = arith.constant 0 : index
    %c0_72 = arith.constant 0 : index
    %192 = vector.load %arg16[%c0_71, %c0_72] : memref<1x128xf32, #tpu.memory_space<vmem>>, vector<1x128xf32>
    %193 = vector.broadcast %192 : vector<1x128xf32> to vector<16x128xf32>
    %194 = arith.addf %191, %193 : vector<16x128xf32>
    %c0_73 = arith.constant 0 : index
    %c0_74 = arith.constant 0 : index
    %195 = vector.load %arg17[%c0_73, %c0_74] : memref<128x128xf32, #tpu.memory_space<vmem>>, vector<128x128xf32>
    %196 = arith.truncf %194 : vector<16x128xf32> to vector<16x128xbf16>
    %197 = arith.truncf %195 : vector<128x128xf32> to vector<128x128xbf16>
    %cst_75 = arith.constant dense<0.000000e+00> : vector<16x128xf32>
    %198 = tpu.matmul %196, %197, %cst_75 {dimension_numbers = #tpu.dot_dimension_numbers<[1], [0], [0], [1], [0, 0, 1, 1], [], []>} : vector<16x128xbf16>, vector<128x128xbf16>, vector<16x128xf32> -> vector<16x128xf32>
    %c0_76 = arith.constant 0 : index
    %c0_77 = arith.constant 0 : index
    %199 = vector.load %arg18[%c0_76, %c0_77] : memref<1x128xf32, #tpu.memory_space<vmem>>, vector<1x128xf32>
    %200 = vector.broadcast %199 : vector<1x128xf32> to vector<16x128xf32>
    %201 = arith.addf %198, %200 : vector<16x128xf32>
    %c0_78 = arith.constant 0 : index
    %c0_79 = arith.constant 0 : index
    %202 = vector.load %arg19[%c0_78, %c0_79] : memref<128x128xf32, #tpu.memory_space<vmem>>, vector<128x128xf32>
    %203 = arith.truncf %3 : vector<24x128xf32> to vector<24x128xbf16>
    %204 = arith.truncf %202 : vector<128x128xf32> to vector<128x128xbf16>
    %cst_80 = arith.constant dense<0.000000e+00> : vector<24x128xf32>
    %205 = tpu.matmul %203, %204, %cst_80 {dimension_numbers = #tpu.dot_dimension_numbers<[1], [0], [0], [1], [0, 0, 1, 1], [], []>} : vector<24x128xbf16>, vector<128x128xbf16>, vector<24x128xf32> -> vector<24x128xf32>
    %c0_81 = arith.constant 0 : index
    %c0_82 = arith.constant 0 : index
    %206 = vector.load %arg20[%c0_81, %c0_82] : memref<1x128xf32, #tpu.memory_space<vmem>>, vector<1x128xf32>
    %207 = vector.broadcast %206 : vector<1x128xf32> to vector<24x128xf32>
    %208 = arith.addf %205, %207 : vector<24x128xf32>
    %c0_83 = arith.constant 0 : index
    %c0_84 = arith.constant 0 : index
    %209 = vector.load %arg21[%c0_83, %c0_84] : memref<128x128xf32, #tpu.memory_space<vmem>>, vector<128x128xf32>
    %210 = arith.truncf %3 : vector<24x128xf32> to vector<24x128xbf16>
    %211 = arith.truncf %209 : vector<128x128xf32> to vector<128x128xbf16>
    %cst_85 = arith.constant dense<0.000000e+00> : vector<24x128xf32>
    %212 = tpu.matmul %210, %211, %cst_85 {dimension_numbers = #tpu.dot_dimension_numbers<[1], [0], [0], [1], [0, 0, 1, 1], [], []>} : vector<24x128xbf16>, vector<128x128xbf16>, vector<24x128xf32> -> vector<24x128xf32>
    %c0_86 = arith.constant 0 : index
    %c0_87 = arith.constant 0 : index
    %213 = vector.load %arg22[%c0_86, %c0_87] : memref<1x128xf32, #tpu.memory_space<vmem>>, vector<1x128xf32>
    %214 = vector.broadcast %213 : vector<1x128xf32> to vector<24x128xf32>
    %215 = arith.addf %212, %214 : vector<24x128xf32>
    %c0_88 = arith.constant 0 : index
    %c0_89 = arith.constant 0 : index
    %216 = vector.load %arg23[%c0_88, %c0_89] : memref<128x128xf32, #tpu.memory_space<vmem>>, vector<128x128xf32>
    %217 = vector.extract_strided_slice %201 {offsets = [0, 0], sizes = [16, 32], strides = [1, 1]} : vector<16x128xf32> to vector<16x32xf32>
    %218 = vector.extract_strided_slice %208 {offsets = [0, 0], sizes = [24, 32], strides = [1, 1]} : vector<24x128xf32> to vector<24x32xf32>
    %219 = vector.extract_strided_slice %215 {offsets = [0, 0], sizes = [24, 32], strides = [1, 1]} : vector<24x128xf32> to vector<24x32xf32>
    %220 = arith.truncf %217 : vector<16x32xf32> to vector<16x32xbf16>
    %221 = arith.truncf %218 : vector<24x32xf32> to vector<24x32xbf16>
    %cst_90 = arith.constant dense<0.000000e+00> : vector<16x24xf32>
    %222 = tpu.matmul %220, %221, %cst_90 {dimension_numbers = #tpu.dot_dimension_numbers<[1], [1], [0], [0], [0, 0, 1, 0], [], []>} : vector<16x32xbf16>, vector<24x32xbf16>, vector<16x24xf32> -> vector<16x24xf32>
    %223 = arith.addf %222, %21 : vector<16x24xf32>
    %cst_91 = arith.constant dense<0xFF800000> : vector<16xf32>
    %224 = vector.multi_reduction <maximumf>, %223, %cst_91 [1] : vector<16x24xf32> to vector<16xf32>
    %225 = vector.shape_cast %224 : vector<16xf32> to vector<16x1xf32>
    %226 = vector.broadcast %225 : vector<16x1xf32> to vector<16x24xf32>
    %227 = arith.subf %223, %226 : vector<16x24xf32>
    %228 = math.exp %227 : vector<16x24xf32>
    %cst_92 = arith.constant dense<0.000000e+00> : vector<16xf32>
    %229 = vector.multi_reduction <add>, %228, %cst_92 [1] : vector<16x24xf32> to vector<16xf32>
    %230 = vector.shape_cast %229 : vector<16xf32> to vector<16x1xf32>
    %231 = arith.truncf %228 : vector<16x24xf32> to vector<16x24xbf16>
    %232 = arith.truncf %219 : vector<24x32xf32> to vector<24x32xbf16>
    %cst_93 = arith.constant dense<0.000000e+00> : vector<16x32xf32>
    %233 = tpu.matmul %231, %232, %cst_93 {dimension_numbers = #tpu.dot_dimension_numbers<[1], [0], [0], [1], [0, 0, 1, 1], [], []>} : vector<16x24xbf16>, vector<24x32xbf16>, vector<16x32xf32> -> vector<16x32xf32>
    %234 = tpu.reciprocal %230 {approx = true} : vector<16x1xf32> -> vector<16x1xf32>
    %235 = vector.broadcast %234 : vector<16x1xf32> to vector<16x32xf32>
    %236 = arith.mulf %233, %235 : vector<16x32xf32>
    %237 = vector.extract_strided_slice %216 {offsets = [0, 0], sizes = [32, 128], strides = [1, 1]} : vector<128x128xf32> to vector<32x128xf32>
    %238 = arith.truncf %236 : vector<16x32xf32> to vector<16x32xbf16>
    %239 = arith.truncf %237 : vector<32x128xf32> to vector<32x128xbf16>
    %cst_94 = arith.constant dense<0.000000e+00> : vector<16x128xf32>
    %240 = tpu.matmul %238, %239, %cst_94 {dimension_numbers = #tpu.dot_dimension_numbers<[1], [0], [0], [1], [0, 0, 1, 1], [], []>} : vector<16x32xbf16>, vector<32x128xbf16>, vector<16x128xf32> -> vector<16x128xf32>
    %241 = vector.extract_strided_slice %201 {offsets = [0, 32], sizes = [16, 32], strides = [1, 1]} : vector<16x128xf32> to vector<16x32xf32>
    %242 = vector.extract_strided_slice %208 {offsets = [0, 32], sizes = [24, 32], strides = [1, 1]} : vector<24x128xf32> to vector<24x32xf32>
    %243 = vector.extract_strided_slice %215 {offsets = [0, 32], sizes = [24, 32], strides = [1, 1]} : vector<24x128xf32> to vector<24x32xf32>
    %244 = arith.truncf %241 : vector<16x32xf32> to vector<16x32xbf16>
    %245 = arith.truncf %242 : vector<24x32xf32> to vector<24x32xbf16>
    %cst_95 = arith.constant dense<0.000000e+00> : vector<16x24xf32>
    %246 = tpu.matmul %244, %245, %cst_95 {dimension_numbers = #tpu.dot_dimension_numbers<[1], [1], [0], [0], [0, 0, 1, 0], [], []>} : vector<16x32xbf16>, vector<24x32xbf16>, vector<16x24xf32> -> vector<16x24xf32>
    %247 = arith.addf %246, %21 : vector<16x24xf32>
    %cst_96 = arith.constant dense<0xFF800000> : vector<16xf32>
    %248 = vector.multi_reduction <maximumf>, %247, %cst_96 [1] : vector<16x24xf32> to vector<16xf32>
    %249 = vector.shape_cast %248 : vector<16xf32> to vector<16x1xf32>
    %250 = vector.broadcast %249 : vector<16x1xf32> to vector<16x24xf32>
    %251 = arith.subf %247, %250 : vector<16x24xf32>
    %252 = math.exp %251 : vector<16x24xf32>
    %cst_97 = arith.constant dense<0.000000e+00> : vector<16xf32>
    %253 = vector.multi_reduction <add>, %252, %cst_97 [1] : vector<16x24xf32> to vector<16xf32>
    %254 = vector.shape_cast %253 : vector<16xf32> to vector<16x1xf32>
    %255 = arith.truncf %252 : vector<16x24xf32> to vector<16x24xbf16>
    %256 = arith.truncf %243 : vector<24x32xf32> to vector<24x32xbf16>
    %cst_98 = arith.constant dense<0.000000e+00> : vector<16x32xf32>
    %257 = tpu.matmul %255, %256, %cst_98 {dimension_numbers = #tpu.dot_dimension_numbers<[1], [0], [0], [1], [0, 0, 1, 1], [], []>} : vector<16x24xbf16>, vector<24x32xbf16>, vector<16x32xf32> -> vector<16x32xf32>
    %258 = tpu.reciprocal %254 {approx = true} : vector<16x1xf32> -> vector<16x1xf32>
    %259 = vector.broadcast %258 : vector<16x1xf32> to vector<16x32xf32>
    %260 = arith.mulf %257, %259 : vector<16x32xf32>
    %261 = vector.extract_strided_slice %216 {offsets = [32, 0], sizes = [32, 128], strides = [1, 1]} : vector<128x128xf32> to vector<32x128xf32>
    %262 = arith.truncf %260 : vector<16x32xf32> to vector<16x32xbf16>
    %263 = arith.truncf %261 : vector<32x128xf32> to vector<32x128xbf16>
    %cst_99 = arith.constant dense<0.000000e+00> : vector<16x128xf32>
    %264 = tpu.matmul %262, %263, %cst_99 {dimension_numbers = #tpu.dot_dimension_numbers<[1], [0], [0], [1], [0, 0, 1, 1], [], []>} : vector<16x32xbf16>, vector<32x128xbf16>, vector<16x128xf32> -> vector<16x128xf32>
    %265 = arith.addf %240, %264 : vector<16x128xf32>
    %266 = vector.extract_strided_slice %201 {offsets = [0, 64], sizes = [16, 32], strides = [1, 1]} : vector<16x128xf32> to vector<16x32xf32>
    %267 = vector.extract_strided_slice %208 {offsets = [0, 64], sizes = [24, 32], strides = [1, 1]} : vector<24x128xf32> to vector<24x32xf32>
    %268 = vector.extract_strided_slice %215 {offsets = [0, 64], sizes = [24, 32], strides = [1, 1]} : vector<24x128xf32> to vector<24x32xf32>
    %269 = arith.truncf %266 : vector<16x32xf32> to vector<16x32xbf16>
    %270 = arith.truncf %267 : vector<24x32xf32> to vector<24x32xbf16>
    %cst_100 = arith.constant dense<0.000000e+00> : vector<16x24xf32>
    %271 = tpu.matmul %269, %270, %cst_100 {dimension_numbers = #tpu.dot_dimension_numbers<[1], [1], [0], [0], [0, 0, 1, 0], [], []>} : vector<16x32xbf16>, vector<24x32xbf16>, vector<16x24xf32> -> vector<16x24xf32>
    %272 = arith.addf %271, %21 : vector<16x24xf32>
    %cst_101 = arith.constant dense<0xFF800000> : vector<16xf32>
    %273 = vector.multi_reduction <maximumf>, %272, %cst_101 [1] : vector<16x24xf32> to vector<16xf32>
    %274 = vector.shape_cast %273 : vector<16xf32> to vector<16x1xf32>
    %275 = vector.broadcast %274 : vector<16x1xf32> to vector<16x24xf32>
    %276 = arith.subf %272, %275 : vector<16x24xf32>
    %277 = math.exp %276 : vector<16x24xf32>
    %cst_102 = arith.constant dense<0.000000e+00> : vector<16xf32>
    %278 = vector.multi_reduction <add>, %277, %cst_102 [1] : vector<16x24xf32> to vector<16xf32>
    %279 = vector.shape_cast %278 : vector<16xf32> to vector<16x1xf32>
    %280 = arith.truncf %277 : vector<16x24xf32> to vector<16x24xbf16>
    %281 = arith.truncf %268 : vector<24x32xf32> to vector<24x32xbf16>
    %cst_103 = arith.constant dense<0.000000e+00> : vector<16x32xf32>
    %282 = tpu.matmul %280, %281, %cst_103 {dimension_numbers = #tpu.dot_dimension_numbers<[1], [0], [0], [1], [0, 0, 1, 1], [], []>} : vector<16x24xbf16>, vector<24x32xbf16>, vector<16x32xf32> -> vector<16x32xf32>
    %283 = tpu.reciprocal %279 {approx = true} : vector<16x1xf32> -> vector<16x1xf32>
    %284 = vector.broadcast %283 : vector<16x1xf32> to vector<16x32xf32>
    %285 = arith.mulf %282, %284 : vector<16x32xf32>
    %286 = vector.extract_strided_slice %216 {offsets = [64, 0], sizes = [32, 128], strides = [1, 1]} : vector<128x128xf32> to vector<32x128xf32>
    %287 = arith.truncf %285 : vector<16x32xf32> to vector<16x32xbf16>
    %288 = arith.truncf %286 : vector<32x128xf32> to vector<32x128xbf16>
    %cst_104 = arith.constant dense<0.000000e+00> : vector<16x128xf32>
    %289 = tpu.matmul %287, %288, %cst_104 {dimension_numbers = #tpu.dot_dimension_numbers<[1], [0], [0], [1], [0, 0, 1, 1], [], []>} : vector<16x32xbf16>, vector<32x128xbf16>, vector<16x128xf32> -> vector<16x128xf32>
    %290 = arith.addf %265, %289 : vector<16x128xf32>
    %291 = vector.extract_strided_slice %201 {offsets = [0, 96], sizes = [16, 32], strides = [1, 1]} : vector<16x128xf32> to vector<16x32xf32>
    %292 = vector.extract_strided_slice %208 {offsets = [0, 96], sizes = [24, 32], strides = [1, 1]} : vector<24x128xf32> to vector<24x32xf32>
    %293 = vector.extract_strided_slice %215 {offsets = [0, 96], sizes = [24, 32], strides = [1, 1]} : vector<24x128xf32> to vector<24x32xf32>
    %294 = arith.truncf %291 : vector<16x32xf32> to vector<16x32xbf16>
    %295 = arith.truncf %292 : vector<24x32xf32> to vector<24x32xbf16>
    %cst_105 = arith.constant dense<0.000000e+00> : vector<16x24xf32>
    %296 = tpu.matmul %294, %295, %cst_105 {dimension_numbers = #tpu.dot_dimension_numbers<[1], [1], [0], [0], [0, 0, 1, 0], [], []>} : vector<16x32xbf16>, vector<24x32xbf16>, vector<16x24xf32> -> vector<16x24xf32>
    %297 = arith.addf %296, %21 : vector<16x24xf32>
    %cst_106 = arith.constant dense<0xFF800000> : vector<16xf32>
    %298 = vector.multi_reduction <maximumf>, %297, %cst_106 [1] : vector<16x24xf32> to vector<16xf32>
    %299 = vector.shape_cast %298 : vector<16xf32> to vector<16x1xf32>
    %300 = vector.broadcast %299 : vector<16x1xf32> to vector<16x24xf32>
    %301 = arith.subf %297, %300 : vector<16x24xf32>
    %302 = math.exp %301 : vector<16x24xf32>
    %cst_107 = arith.constant dense<0.000000e+00> : vector<16xf32>
    %303 = vector.multi_reduction <add>, %302, %cst_107 [1] : vector<16x24xf32> to vector<16xf32>
    %304 = vector.shape_cast %303 : vector<16xf32> to vector<16x1xf32>
    %305 = arith.truncf %302 : vector<16x24xf32> to vector<16x24xbf16>
    %306 = arith.truncf %293 : vector<24x32xf32> to vector<24x32xbf16>
    %cst_108 = arith.constant dense<0.000000e+00> : vector<16x32xf32>
    %307 = tpu.matmul %305, %306, %cst_108 {dimension_numbers = #tpu.dot_dimension_numbers<[1], [0], [0], [1], [0, 0, 1, 1], [], []>} : vector<16x24xbf16>, vector<24x32xbf16>, vector<16x32xf32> -> vector<16x32xf32>
    %308 = tpu.reciprocal %304 {approx = true} : vector<16x1xf32> -> vector<16x1xf32>
    %309 = vector.broadcast %308 : vector<16x1xf32> to vector<16x32xf32>
    %310 = arith.mulf %307, %309 : vector<16x32xf32>
    %311 = vector.extract_strided_slice %216 {offsets = [96, 0], sizes = [32, 128], strides = [1, 1]} : vector<128x128xf32> to vector<32x128xf32>
    %312 = arith.truncf %310 : vector<16x32xf32> to vector<16x32xbf16>
    %313 = arith.truncf %311 : vector<32x128xf32> to vector<32x128xbf16>
    %cst_109 = arith.constant dense<0.000000e+00> : vector<16x128xf32>
    %314 = tpu.matmul %312, %313, %cst_109 {dimension_numbers = #tpu.dot_dimension_numbers<[1], [0], [0], [1], [0, 0, 1, 1], [], []>} : vector<16x32xbf16>, vector<32x128xbf16>, vector<16x128xf32> -> vector<16x128xf32>
    %315 = arith.addf %290, %314 : vector<16x128xf32>
    %c0_110 = arith.constant 0 : index
    %c0_111 = arith.constant 0 : index
    %316 = vector.load %arg24[%c0_110, %c0_111] : memref<1x128xf32, #tpu.memory_space<vmem>>, vector<1x128xf32>
    %317 = vector.broadcast %316 : vector<1x128xf32> to vector<16x128xf32>
    %318 = arith.addf %315, %317 : vector<16x128xf32>
    %319 = arith.addf %194, %318 : vector<16x128xf32>
    %cst_112 = arith.constant dense<0.000000e+00> : vector<16xf32>
    %320 = vector.multi_reduction <add>, %319, %cst_112 [1] : vector<16x128xf32> to vector<16xf32>
    %321 = vector.shape_cast %320 : vector<16xf32> to vector<16x1xf32>
    %cst_113 = arith.constant 1.280000e+02 : f32
    %322 = vector.broadcast %cst_113 : f32 to vector<16x1xf32>
    %323 = arith.divf %321, %322 : vector<16x1xf32>
    %324 = vector.broadcast %323 : vector<16x1xf32> to vector<16x128xf32>
    %325 = arith.subf %319, %324 : vector<16x128xf32>
    %326 = arith.mulf %325, %325 : vector<16x128xf32>
    %cst_114 = arith.constant dense<0.000000e+00> : vector<16xf32>
    %327 = vector.multi_reduction <add>, %326, %cst_114 [1] : vector<16x128xf32> to vector<16xf32>
    %328 = vector.shape_cast %327 : vector<16xf32> to vector<16x1xf32>
    %cst_115 = arith.constant 1.280000e+02 : f32
    %329 = vector.broadcast %cst_115 : f32 to vector<16x1xf32>
    %330 = arith.divf %328, %329 : vector<16x1xf32>
    %331 = vector.broadcast %323 : vector<16x1xf32> to vector<16x128xf32>
    %332 = arith.subf %319, %331 : vector<16x128xf32>
    %cst_116 = arith.constant 9.99999974E-6 : f32
    %333 = vector.broadcast %cst_116 : f32 to vector<16x1xf32>
    %334 = arith.addf %330, %333 : vector<16x1xf32>
    %335 = math.rsqrt %334 : vector<16x1xf32>
    %336 = vector.broadcast %335 : vector<16x1xf32> to vector<16x128xf32>
    %337 = arith.mulf %332, %336 : vector<16x128xf32>
    %c0_117 = arith.constant 0 : index
    %c0_118 = arith.constant 0 : index
    %338 = vector.load %arg25[%c0_117, %c0_118] : memref<1x128xf32, #tpu.memory_space<vmem>>, vector<1x128xf32>
    %339 = vector.broadcast %338 : vector<1x128xf32> to vector<16x128xf32>
    %340 = arith.mulf %337, %339 : vector<16x128xf32>
    %c0_119 = arith.constant 0 : index
    %c0_120 = arith.constant 0 : index
    %341 = vector.load %arg26[%c0_119, %c0_120] : memref<1x128xf32, #tpu.memory_space<vmem>>, vector<1x128xf32>
    %342 = vector.broadcast %341 : vector<1x128xf32> to vector<16x128xf32>
    %343 = arith.addf %340, %342 : vector<16x128xf32>
    %c0_121 = arith.constant 0 : index
    %c0_122 = arith.constant 0 : index
    %344 = vector.load %arg27[%c0_121, %c0_122] : memref<128x256xf32, #tpu.memory_space<vmem>>, vector<128x256xf32>
    %345 = arith.truncf %343 : vector<16x128xf32> to vector<16x128xbf16>
    %346 = arith.truncf %344 : vector<128x256xf32> to vector<128x256xbf16>
    %cst_123 = arith.constant dense<0.000000e+00> : vector<16x256xf32>
    %347 = tpu.matmul %345, %346, %cst_123 {dimension_numbers = #tpu.dot_dimension_numbers<[1], [0], [0], [1], [0, 0, 1, 1], [], []>} : vector<16x128xbf16>, vector<128x256xbf16>, vector<16x256xf32> -> vector<16x256xf32>
    %c0_124 = arith.constant 0 : index
    %c0_125 = arith.constant 0 : index
    %348 = vector.load %arg28[%c0_124, %c0_125] : memref<1x256xf32, #tpu.memory_space<vmem>>, vector<1x256xf32>
    %349 = vector.broadcast %348 : vector<1x256xf32> to vector<16x256xf32>
    %350 = arith.addf %347, %349 : vector<16x256xf32>
    %cst_126 = arith.constant 0.000000e+00 : f32
    %351 = vector.broadcast %cst_126 : f32 to vector<16x256xf32>
    %352 = arith.maximumf %350, %351 : vector<16x256xf32>
    %c0_127 = arith.constant 0 : index
    %c0_128 = arith.constant 0 : index
    %353 = vector.load %arg29[%c0_127, %c0_128] : memref<256x128xf32, #tpu.memory_space<vmem>>, vector<256x128xf32>
    %354 = arith.truncf %352 : vector<16x256xf32> to vector<16x256xbf16>
    %355 = arith.truncf %353 : vector<256x128xf32> to vector<256x128xbf16>
    %cst_129 = arith.constant dense<0.000000e+00> : vector<16x128xf32>
    %356 = tpu.matmul %354, %355, %cst_129 {dimension_numbers = #tpu.dot_dimension_numbers<[1], [0], [0], [1], [0, 0, 1, 1], [], []>} : vector<16x256xbf16>, vector<256x128xbf16>, vector<16x128xf32> -> vector<16x128xf32>
    %c0_130 = arith.constant 0 : index
    %c0_131 = arith.constant 0 : index
    %357 = vector.load %arg30[%c0_130, %c0_131] : memref<1x128xf32, #tpu.memory_space<vmem>>, vector<1x128xf32>
    %358 = vector.broadcast %357 : vector<1x128xf32> to vector<16x128xf32>
    %359 = arith.addf %356, %358 : vector<16x128xf32>
    %360 = arith.addf %343, %359 : vector<16x128xf32>
    %c0_132 = arith.constant 0 : index
    %c0_133 = arith.constant 0 : index
    %c0_134 = arith.constant 0 : index
    %361 = vector.load %arg31[%c0_132, %c0_133, %c0_134] : memref<1x16x128xf32, #tpu.memory_space<vmem>>, vector<1x16x128xf32>
    %362 = vector.shape_cast %361 : vector<1x16x128xf32> to vector<16x128xf32>
    %363 = vector.shape_cast %360 : vector<16x128xf32> to vector<1x16x128xf32>
    tpu.vector_store %arg31[%c0_132, %c0_133, %c0_134], %363 {strides = array<i32>} : memref<1x16x128xf32, #tpu.memory_space<vmem>>, vector<1x16x128xf32>,
    return
  }
  func.func @transform_0(%arg0: i32) -> (i32, i32, i32) {
    %c0_i32 = arith.constant 0 : i32
    %c0_i32_0 = arith.constant 0 : i32
    %c0_i32_1 = arith.constant 0 : i32
    return %arg0, %c0_i32, %c0_i32_0 : i32, i32, i32
  }
  func.func @transform_1(%arg0: i32) -> (i32, i32, i32) {
    %c0_i32 = arith.constant 0 : i32
    %c0_i32_0 = arith.constant 0 : i32
    %c0_i32_1 = arith.constant 0 : i32
    return %arg0, %c0_i32, %c0_i32_0 : i32, i32, i32
  }
  func.func @transform_2(%arg0: i32) -> (i32, i32, i32) {
    %c0_i32 = arith.constant 0 : i32
    %c0_i32_0 = arith.constant 0 : i32
    %c0_i32_1 = arith.constant 0 : i32
    return %arg0, %c0_i32, %c0_i32_0 : i32, i32, i32
  }
  func.func @transform_3(%arg0: i32) -> (i32, i32, i32) {
    %c0_i32 = arith.constant 0 : i32
    %c0_i32_0 = arith.constant 0 : i32
    %c0_i32_1 = arith.constant 0 : i32
    return %arg0, %c0_i32, %c0_i32_0 : i32, i32, i32
  }
  func.func @transform_4(%arg0: i32) -> (i32, i32) {
    %c0_i32 = arith.constant 0 : i32
    %c0_i32_0 = arith.constant 0 : i32
    %c0_i32_1 = arith.constant 0 : i32
    return %c0_i32, %c0_i32_0 : i32, i32
  }
  func.func @transform_5(%arg0: i32) -> (i32, i32) {
    %c0_i32 = arith.constant 0 : i32
    %c0_i32_0 = arith.constant 0 : i32
    %c0_i32_1 = arith.constant 0 : i32
    return %c0_i32, %c0_i32_0 : i32, i32
  }
  func.func @transform_6(%arg0: i32) -> (i32, i32) {
    %c0_i32 = arith.constant 0 : i32
    %c0_i32_0 = arith.constant 0 : i32
    %c0_i32_1 = arith.constant 0 : i32
    return %c0_i32, %c0_i32_0 : i32, i32
  }
  func.func @transform_7(%arg0: i32) -> (i32, i32) {
    %c0_i32 = arith.constant 0 : i32
    %c0_i32_0 = arith.constant 0 : i32
    %c0_i32_1 = arith.constant 0 : i32
    return %c0_i32, %c0_i32_0 : i32, i32
  }
  func.func @transform_8(%arg0: i32) -> (i32, i32) {
    %c0_i32 = arith.constant 0 : i32
    %c0_i32_0 = arith.constant 0 : i32
    %c0_i32_1 = arith.constant 0 : i32
    return %c0_i32, %c0_i32_0 : i32, i32
  }
  func.func @transform_9(%arg0: i32) -> (i32, i32) {
    %c0_i32 = arith.constant 0 : i32
    %c0_i32_0 = arith.constant 0 : i32
    %c0_i32_1 = arith.constant 0 : i32
    return %c0_i32, %c0_i32_0 : i32, i32
  }
  func.func @transform_10(%arg0: i32) -> (i32, i32) {
    %c0_i32 = arith.constant 0 : i32
    %c0_i32_0 = arith.constant 0 : i32
    %c0_i32_1 = arith.constant 0 : i32
    return %c0_i32, %c0_i32_0 : i32, i32
  }
  func.func @transform_11(%arg0: i32) -> (i32, i32) {
    %c0_i32 = arith.constant 0 : i32
    %c0_i32_0 = arith.constant 0 : i32
    %c0_i32_1 = arith.constant 0 : i32
    return %c0_i32, %c0_i32_0 : i32, i32
  }
  func.func @transform_12(%arg0: i32) -> (i32, i32) {
    %c0_i32 = arith.constant 0 : i32
    %c0_i32_0 = arith.constant 0 : i32
    %c0_i32_1 = arith.constant 0 : i32
    return %c0_i32, %c0_i32_0 : i32, i32
  }
  func.func @transform_13(%arg0: i32) -> (i32, i32) {
    %c0_i32 = arith.constant 0 : i32
    %c0_i32_0 = arith.constant 0 : i32
    %c0_i32_1 = arith.constant 0 : i32
    return %c0_i32, %c0_i32_0 : i32, i32
  }
  func.func @transform_14(%arg0: i32) -> (i32, i32) {
    %c0_i32 = arith.constant 0 : i32
    %c0_i32_0 = arith.constant 0 : i32
    %c0_i32_1 = arith.constant 0 : i32
    return %c0_i32, %c0_i32_0 : i32, i32
  }
  func.func @transform_15(%arg0: i32) -> (i32, i32) {
    %c0_i32 = arith.constant 0 : i32
    %c0_i32_0 = arith.constant 0 : i32
    %c0_i32_1 = arith.constant 0 : i32
    return %c0_i32, %c0_i32_0 : i32, i32
  }
  func.func @transform_16(%arg0: i32) -> (i32, i32) {
    %c0_i32 = arith.constant 0 : i32
    %c0_i32_0 = arith.constant 0 : i32
    %c0_i32_1 = arith.constant 0 : i32
    return %c0_i32, %c0_i32_0 : i32, i32
  }
  func.func @transform_17(%arg0: i32) -> (i32, i32) {
    %c0_i32 = arith.constant 0 : i32
    %c0_i32_0 = arith.constant 0 : i32
    %c0_i32_1 = arith.constant 0 : i32
    return %c0_i32, %c0_i32_0 : i32, i32
  }
  func.func @transform_18(%arg0: i32) -> (i32, i32) {
    %c0_i32 = arith.constant 0 : i32
    %c0_i32_0 = arith.constant 0 : i32
    %c0_i32_1 = arith.constant 0 : i32
    return %c0_i32, %c0_i32_0 : i32, i32
  }
  func.func @transform_19(%arg0: i32) -> (i32, i32) {
    %c0_i32 = arith.constant 0 : i32
    %c0_i32_0 = arith.constant 0 : i32
    %c0_i32_1 = arith.constant 0 : i32
    return %c0_i32, %c0_i32_0 : i32, i32
  }
  func.func @transform_20(%arg0: i32) -> (i32, i32) {
    %c0_i32 = arith.constant 0 : i32
    %c0_i32_0 = arith.constant 0 : i32
    %c0_i32_1 = arith.constant 0 : i32
    return %c0_i32, %c0_i32_0 : i32, i32
  }
  func.func @transform_21(%arg0: i32) -> (i32, i32) {
    %c0_i32 = arith.constant 0 : i32
    %c0_i32_0 = arith.constant 0 : i32
    %c0_i32_1 = arith.constant 0 : i32
    return %c0_i32, %c0_i32_0 : i32, i32
  }
  func.func @transform_22(%arg0: i32) -> (i32, i32) {
    %c0_i32 = arith.constant 0 : i32
    %c0_i32_0 = arith.constant 0 : i32
    %c0_i32_1 = arith.constant 0 : i32
    return %c0_i32, %c0_i32_0 : i32, i32
  }
  func.func @transform_23(%arg0: i32) -> (i32, i32) {
    %c0_i32 = arith.constant 0 : i32
    %c0_i32_0 = arith.constant 0 : i32
    %c0_i32_1 = arith.constant 0 : i32
    return %c0_i32, %c0_i32_0 : i32, i32
  }
  func.func @transform_24(%arg0: i32) -> (i32, i32) {
    %c0_i32 = arith.constant 0 : i32
    %c0_i32_0 = arith.constant 0 : i32
    %c0_i32_1 = arith.constant 0 : i32
    return %c0_i32, %c0_i32_0 : i32, i32
  }
  func.func @transform_25(%arg0: i32) -> (i32, i32) {
    %c0_i32 = arith.constant 0 : i32
    %c0_i32_0 = arith.constant 0 : i32
    %c0_i32_1 = arith.constant 0 : i32
    return %c0_i32, %c0_i32_0 : i32, i32
  }
  func.func @transform_26(%arg0: i32) -> (i32, i32) {
    %c0_i32 = arith.constant 0 : i32
    %c0_i32_0 = arith.constant 0 : i32
    %c0_i32_1 = arith.constant 0 : i32
    return %c0_i32, %c0_i32_0 : i32, i32
  }
  func.func @transform_27(%arg0: i32) -> (i32, i32) {
    %c0_i32 = arith.constant 0 : i32
    %c0_i32_0 = arith.constant 0 : i32
    %c0_i32_1 = arith.constant 0 : i32
    return %c0_i32, %c0_i32_0 : i32, i32
  }
  func.func @transform_28(%arg0: i32) -> (i32, i32) {
    %c0_i32 = arith.constant 0 : i32
    %c0_i32_0 = arith.constant 0 : i32
    %c0_i32_1 = arith.constant 0 : i32
    return %c0_i32, %c0_i32_0 : i32, i32
  }
  func.func @transform_29(%arg0: i32) -> (i32, i32) {
    %c0_i32 = arith.constant 0 : i32
    %c0_i32_0 = arith.constant 0 : i32
    %c0_i32_1 = arith.constant 0 : i32
    return %c0_i32, %c0_i32_0 : i32, i32
  }
  func.func @transform_30(%arg0: i32) -> (i32, i32, i32) {
    %c0_i32 = arith.constant 0 : i32
    %c0_i32_0 = arith.constant 0 : i32
    %c0_i32_1 = arith.constant 0 : i32
    return %arg0, %c0_i32, %c0_i32_0 : i32, i32, i32
  }
}

</mosaic_0001>

<llo_original>
// kernel: decoder_layer.1
$region0: #{decoder_layer.1}
  #allocation0 [shape = 'u32[]', space=smem, size = 0x4, offset = 0x4, fixed_abs, tag = 'smem constant byte address 0x4 - core index']
  #allocation1 [shape = 'u32[144,128]{1,0:T(1,128)}', space=vmem, size = 0x12000, scoped, tag = 'internal scratch']
  %s0 = inlined_call_operand.smem [shape: u32[31], index: -1, kind: input, shape index: {}]
  %s1 = sld [smem:[%s0]]
  %s2 = scalar_lea.smem %s0, 1
  %s3 = sld [smem:[%s2]]
  %s4 = scalar_lea.smem %s0, 2
  %s5 = sld [smem:[%s4]]
  %s6 = scalar_lea.smem %s0, 3
  %s7 = sld [smem:[%s6]]
  %s8 = scalar_lea.smem %s0, 4
  %s9 = sld [smem:[%s8]]
  %s10 = scalar_lea.smem %s0, 5
  %s11 = sld [smem:[%s10]]
  %s12 = scalar_lea.smem %s0, 6
  %s13 = sld [smem:[%s12]]
  %s14 = scalar_lea.smem %s0, 7
  %s15 = sld [smem:[%s14]]
  %s16 = scalar_lea.smem %s0, 8
  %s17 = sld [smem:[%s16]]
  %s18 = scalar_lea.smem %s0, 9
  %s19 = sld [smem:[%s18]]
  %s20 = scalar_lea.smem %s0, 10
  %s21 = sld [smem:[%s20]]
  %s22 = scalar_lea.smem %s0, 11
  %s23 = sld [smem:[%s22]]
  %s24 = scalar_lea.smem %s0, 12
  %s25 = sld [smem:[%s24]]
  %s26 = scalar_lea.smem %s0, 13
  %s27 = sld [smem:[%s26]]
  %s28 = scalar_lea.smem %s0, 14
  %s29 = sld [smem:[%s28]]
  %s30 = scalar_lea.smem %s0, 15
  %s31 = sld [smem:[%s30]]
  %s32 = scalar_lea.smem %s0, 16
  %s33 = sld [smem:[%s32]]
  %s34 = scalar_lea.smem %s0, 17
  %s35 = sld [smem:[%s34]]
  %s36 = scalar_lea.smem %s0, 18
  %s37 = sld [smem:[%s36]]
  %s38 = scalar_lea.smem %s0, 19
  %s39 = sld [smem:[%s38]]
  %s40 = scalar_lea.smem %s0, 20
  %s41 = sld [smem:[%s40]]
  %s42 = scalar_lea.smem %s0, 21
  %s43 = sld [smem:[%s42]]
  %s44 = scalar_lea.smem %s0, 22
  %s45 = sld [smem:[%s44]]
  %s46 = scalar_lea.smem %s0, 23
  %s47 = sld [smem:[%s46]]
  %s48 = scalar_lea.smem %s0, 24
  %s49 = sld [smem:[%s48]]
  %s50 = scalar_lea.smem %s0, 25
  %s51 = sld [smem:[%s50]]
  %s52 = scalar_lea.smem %s0, 26
  %s53 = sld [smem:[%s52]]
  %s54 = scalar_lea.smem %s0, 27
  %s55 = sld [smem:[%s54]]
  %s56 = scalar_lea.smem %s0, 28
  %s57 = sld [smem:[%s56]]
  %s58 = scalar_lea.smem %s0, 29
  %s59 = sld [smem:[%s58]]
  %s60 = scalar_lea.smem %s0, 30
  %s61 = sld [smem:[%s60]]
  %s62 = sld [smem:[#allocation0]]
  $region197: #{decoder_layer.1} parent=0
    _
  %s64 = ssub.s32 1, %s62
  %s65 = scalar_select 0, %s64, %s62
  $region1: #{decoder_layer.1} parent=0
    #allocation2 [shape = 'u8[24576]{0}', space=vmem, size = 0x6000, scoped, tag = 'input window, operand 1']
    #allocation3 [shape = 's32[2]{0}', space=sflag, size = 0x8, scoped, tag = 'scoped memory for decoder_layer.1']
    #allocation4 [shape = 's32[2]{0}', space=sflag, size = 0x8, scoped, tag = 'scoped memory for decoder_layer.1']
    #allocation5 [shape = 'u8[16384]{0}', space=vmem, size = 0x4000, scoped, tag = 'input window, operand 2']
    #allocation6 [shape = 's32[2]{0}', space=sflag, size = 0x8, scoped, tag = 'scoped memory for decoder_layer.1']
    #allocation7 [shape = 'u8[16384]{0}', space=vmem, size = 0x4000, scoped, tag = 'input window, operand 3']
    #allocation8 [shape = 'u8[65536]{0}', space=vmem, size = 0x10000, scoped, tag = 'input window, operand 8, single buffered']
    #allocation9 [shape = 's32[1]{0}', space=sflag, size = 0x4, scoped, tag = 'scoped memory for decoder_layer.1']
    #allocation10 [shape = 'u8[65536]{0}', space=vmem, size = 0x10000, scoped, tag = 'input window, operand 10, single buffered']
    #allocation11 [shape = 'u8[65536]{0}', space=vmem, size = 0x10000, scoped, tag = 'input window, operand 12, single buffered']
    #allocation12 [shape = 's32[1]{0}', space=sflag, size = 0x4, scoped, tag = 'scoped memory for decoder_layer.1']
    #allocation13 [shape = 'u8[65536]{0}', space=vmem, size = 0x10000, scoped, tag = 'input window, operand 18, single buffered']
    #allocation14 [shape = 'u8[512]{0}', space=vmem, size = 0x400, scoped, tag = 'input window, operand 19, single buffered']
    #allocation15 [shape = 's32[1]{0}', space=sflag, size = 0x4, scoped, tag = 'scoped memory for decoder_layer.1']
    #allocation16 [shape = 'u8[65536]{0}', space=vmem, size = 0x10000, scoped, tag = 'input window, operand 20, single buffered']
    #allocation17 [shape = 'u8[65536]{0}', space=vmem, size = 0x10000, scoped, tag = 'input window, operand 22, single buffered']
    #allocation18 [shape = 's32[1]{0}', space=sflag, size = 0x4, scoped, tag = 'scoped memory for decoder_layer.1']
    #allocation19 [shape = 'u8[512]{0}', space=vmem, size = 0x400, scoped, tag = 'input window, operand 23, single buffered']
    #allocation20 [shape = 'u8[16384]{0}', space=vmem, size = 0x4000, scoped, tag = 'output window, operand 0']
    %66 = vsyncpa [#allocation3], 0
    %s67 = scalar_lea.sflag [#allocation3], 1
    %68 = vsyncpa %s67, 0
    %69 = vsyncpa [#allocation6], 0
    %s70 = scalar_lea.sflag [#allocation6], 1
    %71 = vsyncpa %s70, 0
    %72 = vsyncpa [#allocation9], 0
    %73 = vsyncpa [#allocation12], 0
    %74 = vsyncpa [#allocation15], 0
    %75 = vsyncpa [#allocation18], 0
    %76 = vsyncpa [#allocation4], 0
    %s77 = scalar_lea.sflag [#allocation4], 1
    %78 = vsyncpa %s77, 0
    loop: start=0, step=1, limit=4
    $region2: #{decoder_layer.1} parent=1 // loop_pre_header
      _
    $region3: #{decoder_layer.1} parent=1 // loop_header
      %s80 = sphi 0, %s84
      %p81 = scmp.ge.s32.totalorder %s80, 4
      %s90 = sphi 0, %s92
      %s93 = sphi 0, %s90
      %s94 = sphi 0, %s93
      %s110 = sphi 0, %s94
      %s116 = sphi 0, %s118
      %s119 = sphi 0, %s116
      %s120 = sphi 0, %s119
      %s136 = sphi 0, %s120
      %s142 = sphi 0, %s144
      %s145 = sphi 0, %s142
      %s146 = sphi 0, %s145
      %s162 = sphi 0, %s146
      %s168 = sphi 0, %s170
      %s171 = sphi 0, %s168
      %s172 = sphi 0, %s171
      %s188 = sphi 0, %s172
      %s192 = sphi 0, %s192
      %s194 = sphi 0, %s192
      %s195 = sphi 0, %s194
      %s209 = sphi 0, %s195
      %s213 = sphi 0, %s213
      %s215 = sphi 0, %s213
      %s216 = sphi 0, %s215
      %s230 = sphi 0, %s216
      %s234 = sphi 0, %s234
      %s236 = sphi 0, %s234
      %s237 = sphi 0, %s236
      %s251 = sphi 0, %s237
      %s255 = sphi 0, %s255
      %s257 = sphi 0, %s255
      %s258 = sphi 0, %s257
      %s272 = sphi 0, %s258
      %s276 = sphi 0, %s276
      %s278 = sphi 0, %s276
      %s279 = sphi 0, %s278
      %s293 = sphi 0, %s279
      %s297 = sphi 0, %s297
      %s299 = sphi 0, %s297
      %s300 = sphi 0, %s299
      %s314 = sphi 0, %s300
      %s318 = sphi 0, %s318
      %s320 = sphi 0, %s318
      %s321 = sphi 0, %s320
      %s335 = sphi 0, %s321
      %s339 = sphi 0, %s339
      %s341 = sphi 0, %s339
      %s342 = sphi 0, %s341
      %s356 = sphi 0, %s342
      %s360 = sphi 0, %s360
      %s362 = sphi 0, %s360
      %s363 = sphi 0, %s362
      %s377 = sphi 0, %s363
      %s381 = sphi 0, %s381
      %s383 = sphi 0, %s381
      %s384 = sphi 0, %s383
      %s398 = sphi 0, %s384
      %s402 = sphi 0, %s402
      %s404 = sphi 0, %s402
      %s405 = sphi 0, %s404
      %s419 = sphi 0, %s405
      %s423 = sphi 0, %s423
      %s425 = sphi 0, %s423
      %s426 = sphi 0, %s425
      %s440 = sphi 0, %s426
      %s444 = sphi 0, %s444
      %s446 = sphi 0, %s444
      %s447 = sphi 0, %s446
      %s461 = sphi 0, %s447
      %s465 = sphi 0, %s465
      %s467 = sphi 0, %s465
      %s468 = sphi 0, %s467
      %s482 = sphi 0, %s468
      %s486 = sphi 0, %s486
      %s488 = sphi 0, %s486
      %s489 = sphi 0, %s488
      %s503 = sphi 0, %s489
      %s507 = sphi 0, %s507
      %s509 = sphi 0, %s507
      %s510 = sphi 0, %s509
      %s524 = sphi 0, %s510
      %s528 = sphi 0, %s528
      %s530 = sphi 0, %s528
      %s531 = sphi 0, %s530
      %s545 = sphi 0, %s531
      %s549 = sphi 0, %s549
      %s551 = sphi 0, %s549
      %s552 = sphi 0, %s551
      %s566 = sphi 0, %s552
      %s570 = sphi 0, %s570
      %s572 = sphi 0, %s570
      %s573 = sphi 0, %s572
      %s587 = sphi 0, %s573
      %s591 = sphi 0, %s591
      %s593 = sphi 0, %s591
      %s594 = sphi 0, %s593
      %s608 = sphi 0, %s594
      %s612 = sphi 0, %s612
      %s614 = sphi 0, %s612
      %s615 = sphi 0, %s614
      %s629 = sphi 0, %s615
      %s633 = sphi 0, %s633
      %s635 = sphi 0, %s633
      %s636 = sphi 0, %s635
      %s650 = sphi 0, %s636
      %s654 = sphi 0, %s654
      %s656 = sphi 0, %s654
      %s657 = sphi 0, %s656
      %s671 = sphi 0, %s657
      %s675 = sphi 0, %s675
      %s677 = sphi 0, %s675
      %s678 = sphi 0, %s677
      %s692 = sphi 0, %s678
      %s696 = sphi 0, %s696
      %s698 = sphi 0, %s696
      %s699 = sphi 0, %s698
      %s713 = sphi 0, %s699
      %s717 = sphi 0, %s717
      %s719 = sphi 0, %s717
      %s720 = sphi 0, %s719
      %s734 = sphi 0, %s720
      %s740 = sphi 0, %s742
      %s743 = sphi 0, %s740
      %s744 = sphi 0, %s743
      %s760 = sphi 0, %s744
    $region4: #{decoder_layer.1} parent=1 // loop_header_branch
      %83 = sbr.rel (%p81) target = $region8
    $region5: #{decoder_layer.1} parent=1 // loop_body
      %s85 = ssub.s32 %s80, 1
      %s86 = ssub.s32 %s80, 2
      %s87 = sadd.s32 %s80, 1
      %s88 = ssub.s32 %s80, %s87
      %p89 = scmp.eq.s32.totalorder %s88, 0
      %s91 = sadd.s32 %s90, 1
      %s92 = scalar_select %p89, %s90, %s91
      %p95 = pneg %p89
      %p96 = scmp.eq.s32.totalorder %s80, 1
      %p97 = por %p95, %p96
      %p98 = scmp.ne.s32.totalorder %s90, %s93
      %p99 = scmp.eq.s32.totalorder %s80, 0
      %p100 = por %p98, %p99
      %p101 = scmp.ne.s32.totalorder %s90, %s93
      %p102 = scmp.eq.s32.totalorder %s85, 1
      %p103 = por %p101, %p102
      %p104 = scmp.ne.s32.totalorder %s93, %s94
      %p105 = scmp.eq.s32.totalorder %s85, 0
      %p106 = por %p104, %p105
      %p107 = scmp.ne.s32.totalorder %s93, %s94
      %p108 = scmp.eq.s32.totalorder %s86, 1
      %p109 = por %p107, %p108
      %p111 = scmp.ne.s32.totalorder %s94, %s110
      %p112 = scmp.eq.s32.totalorder %s86, 0
      %p113 = por %p111, %p112
      %s114 = ssub.s32 %s80, %s87
      %p115 = scmp.eq.s32.totalorder %s114, 0
      %s117 = sadd.s32 %s116, 1
      %s118 = scalar_select %p115, %s116, %s117
      %p121 = pneg %p115
      %p122 = scmp.eq.s32.totalorder %s80, 1
      %p123 = por %p121, %p122
      %p124 = scmp.ne.s32.totalorder %s116, %s119
      %p125 = scmp.eq.s32.totalorder %s80, 0
      %p126 = por %p124, %p125
      %p127 = scmp.ne.s32.totalorder %s116, %s119
      %p128 = scmp.eq.s32.totalorder %s85, 1
      %p129 = por %p127, %p128
      %p130 = scmp.ne.s32.totalorder %s119, %s120
      %p131 = scmp.eq.s32.totalorder %s85, 0
      %p132 = por %p130, %p131
      %p133 = scmp.ne.s32.totalorder %s119, %s120
      %p134 = scmp.eq.s32.totalorder %s86, 1
      %p135 = por %p133, %p134
      %p137 = scmp.ne.s32.totalorder %s120, %s136
      %p138 = scmp.eq.s32.totalorder %s86, 0
      %p139 = por %p137, %p138
      %s140 = ssub.s32 %s80, %s87
      %p141 = scmp.eq.s32.totalorder %s140, 0
      %s143 = sadd.s32 %s142, 1
      %s144 = scalar_select %p141, %s142, %s143
      %p147 = pneg %p141
      %p148 = scmp.eq.s32.totalorder %s80, 1
      %p149 = por %p147, %p148
      %p150 = scmp.ne.s32.totalorder %s142, %s145
      %p151 = scmp.eq.s32.totalorder %s80, 0
      %p152 = por %p150, %p151
      %p153 = scmp.ne.s32.totalorder %s142, %s145
      %p154 = scmp.eq.s32.totalorder %s85, 1
      %p155 = por %p153, %p154
      %p156 = scmp.ne.s32.totalorder %s145, %s146
      %p157 = scmp.eq.s32.totalorder %s85, 0
      %p158 = por %p156, %p157
      %p159 = scmp.ne.s32.totalorder %s145, %s146
      %p160 = scmp.eq.s32.totalorder %s86, 1
      %p161 = por %p159, %p160
      %p163 = scmp.ne.s32.totalorder %s146, %s162
      %p164 = scmp.eq.s32.totalorder %s86, 0
      %p165 = por %p163, %p164
      %s166 = ssub.s32 %s80, %s87
      %p167 = scmp.eq.s32.totalorder %s166, 0
      %s169 = sadd.s32 %s168, 1
      %s170 = scalar_select %p167, %s168, %s169
      %p173 = pneg %p167
      %p174 = scmp.eq.s32.totalorder %s80, 1
      %p175 = por %p173, %p174
      %p176 = scmp.ne.s32.totalorder %s168, %s171
      %p177 = scmp.eq.s32.totalorder %s80, 0
      %p178 = por %p176, %p177
      %p179 = scmp.ne.s32.totalorder %s168, %s171
      %p180 = scmp.eq.s32.totalorder %s85, 1
      %p181 = por %p179, %p180
      %p182 = scmp.ne.s32.totalorder %s171, %s172
      %p183 = scmp.eq.s32.totalorder %s85, 0
      %p184 = por %p182, %p183
      %p185 = scmp.ne.s32.totalorder %s171, %s172
      %p186 = scmp.eq.s32.totalorder %s86, 1
      %p187 = por %p185, %p186
      %p189 = scmp.ne.s32.totalorder %s172, %s188
      %p190 = scmp.eq.s32.totalorder %s86, 0
      %p191 = por %p189, %p190
      %s193 = sadd.s32 %s192, 1
      %p196 = scmp.eq.s32.totalorder %s80, 1
      %p197 = scmp.ne.s32.totalorder %s192, %s194
      %p198 = scmp.eq.s32.totalorder %s80, 0
      %p199 = por %p197, %p198
      %p200 = scmp.ne.s32.totalorder %s192, %s194
      %p201 = scmp.eq.s32.totalorder %s85, 1
      %p202 = por %p200, %p201
      %p203 = scmp.ne.s32.totalorder %s194, %s195
      %p204 = scmp.eq.s32.totalorder %s85, 0
      %p205 = por %p203, %p204
      %p206 = scmp.ne.s32.totalorder %s194, %s195
      %p207 = scmp.eq.s32.totalorder %s86, 1
      %p208 = por %p206, %p207
      %p210 = scmp.ne.s32.totalorder %s195, %s209
      %p211 = scmp.eq.s32.totalorder %s86, 0
      %p212 = por %p210, %p211
      %s214 = sadd.s32 %s213, 1
      %p217 = scmp.eq.s32.totalorder %s80, 1
      %p218 = scmp.ne.s32.totalorder %s213, %s215
      %p219 = scmp.eq.s32.totalorder %s80, 0
      %p220 = por %p218, %p219
      %p221 = scmp.ne.s32.totalorder %s213, %s215
      %p222 = scmp.eq.s32.totalorder %s85, 1
      %p223 = por %p221, %p222
      %p224 = scmp.ne.s32.totalorder %s215, %s216
      %p225 = scmp.eq.s32.totalorder %s85, 0
      %p226 = por %p224, %p225
      %p227 = scmp.ne.s32.totalorder %s215, %s216
      %p228 = scmp.eq.s32.totalorder %s86, 1
      %p229 = por %p227, %p228
      %p231 = scmp.ne.s32.totalorder %s216, %s230
      %p232 = scmp.eq.s32.totalorder %s86, 0
      %p233 = por %p231, %p232
      %s235 = sadd.s32 %s234, 1
      %p238 = scmp.eq.s32.totalorder %s80, 1
      %p239 = scmp.ne.s32.totalorder %s234, %s236
      %p240 = scmp.eq.s32.totalorder %s80, 0
      %p241 = por %p239, %p240
      %p242 = scmp.ne.s32.totalorder %s234, %s236
      %p243 = scmp.eq.s32.totalorder %s85, 1
      %p244 = por %p242, %p243
      %p245 = scmp.ne.s32.totalorder %s236, %s237
      %p246 = scmp.eq.s32.totalorder %s85, 0
      %p247 = por %p245, %p246
      %p248 = scmp.ne.s32.totalorder %s236, %s237
      %p249 = scmp.eq.s32.totalorder %s86, 1
      %p250 = por %p248, %p249
      %p252 = scmp.ne.s32.totalorder %s237, %s251
      %p253 = scmp.eq.s32.totalorder %s86, 0
      %p254 = por %p252, %p253
      %s256 = sadd.s32 %s255, 1
      %p259 = scmp.eq.s32.totalorder %s80, 1
      %p260 = scmp.ne.s32.totalorder %s255, %s257
      %p261 = scmp.eq.s32.totalorder %s80, 0
      %p262 = por %p260, %p261
      %p263 = scmp.ne.s32.totalorder %s255, %s257
      %p264 = scmp.eq.s32.totalorder %s85, 1
      %p265 = por %p263, %p264
      %p266 = scmp.ne.s32.totalorder %s257, %s258
      %p267 = scmp.eq.s32.totalorder %s85, 0
      %p268 = por %p266, %p267
      %p269 = scmp.ne.s32.totalorder %s257, %s258
      %p270 = scmp.eq.s32.totalorder %s86, 1
      %p271 = por %p269, %p270
      %p273 = scmp.ne.s32.totalorder %s258, %s272
      %p274 = scmp.eq.s32.totalorder %s86, 0
      %p275 = por %p273, %p274
      %s277 = sadd.s32 %s276, 1
      %p280 = scmp.eq.s32.totalorder %s80, 1
      %p281 = scmp.ne.s32.totalorder %s276, %s278
      %p282 = scmp.eq.s32.totalorder %s80, 0
      %p283 = por %p281, %p282
      %p284 = scmp.ne.s32.totalorder %s276, %s278
      %p285 = scmp.eq.s32.totalorder %s85, 1
      %p286 = por %p284, %p285
      %p287 = scmp.ne.s32.totalorder %s278, %s279
      %p288 = scmp.eq.s32.totalorder %s85, 0
      %p289 = por %p287, %p288
      %p290 = scmp.ne.s32.totalorder %s278, %s279
      %p291 = scmp.eq.s32.totalorder %s86, 1
      %p292 = por %p290, %p291
      %p294 = scmp.ne.s32.totalorder %s279, %s293
      %p295 = scmp.eq.s32.totalorder %s86, 0
      %p296 = por %p294, %p295
      %s298 = sadd.s32 %s297, 1
      %p301 = scmp.eq.s32.totalorder %s80, 1
      %p302 = scmp.ne.s32.totalorder %s297, %s299
      %p303 = scmp.eq.s32.totalorder %s80, 0
      %p304 = por %p302, %p303
      %p305 = scmp.ne.s32.totalorder %s297, %s299
      %p306 = scmp.eq.s32.totalorder %s85, 1
      %p307 = por %p305, %p306
      %p308 = scmp.ne.s32.totalorder %s299, %s300
      %p309 = scmp.eq.s32.totalorder %s85, 0
      %p310 = por %p308, %p309
      %p311 = scmp.ne.s32.totalorder %s299, %s300
      %p312 = scmp.eq.s32.totalorder %s86, 1
      %p313 = por %p311, %p312
      %p315 = scmp.ne.s32.totalorder %s300, %s314
      %p316 = scmp.eq.s32.totalorder %s86, 0
      %p317 = por %p315, %p316
      %s319 = sadd.s32 %s318, 1
      %p322 = scmp.eq.s32.totalorder %s80, 1
      %p323 = scmp.ne.s32.totalorder %s318, %s320
      %p324 = scmp.eq.s32.totalorder %s80, 0
      %p325 = por %p323, %p324
      %p326 = scmp.ne.s32.totalorder %s318, %s320
      %p327 = scmp.eq.s32.totalorder %s85, 1
      %p328 = por %p326, %p327
      %p329 = scmp.ne.s32.totalorder %s320, %s321
      %p330 = scmp.eq.s32.totalorder %s85, 0
      %p331 = por %p329, %p330
      %p332 = scmp.ne.s32.totalorder %s320, %s321
      %p333 = scmp.eq.s32.totalorder %s86, 1
      %p334 = por %p332, %p333
      %p336 = scmp.ne.s32.totalorder %s321, %s335
      %p337 = scmp.eq.s32.totalorder %s86, 0
      %p338 = por %p336, %p337
      %s340 = sadd.s32 %s339, 1
      %p343 = scmp.eq.s32.totalorder %s80, 1
      %p344 = scmp.ne.s32.totalorder %s339, %s341
      %p345 = scmp.eq.s32.totalorder %s80, 0
      %p346 = por %p344, %p345
      %p347 = scmp.ne.s32.totalorder %s339, %s341
      %p348 = scmp.eq.s32.totalorder %s85, 1
      %p349 = por %p347, %p348
      %p350 = scmp.ne.s32.totalorder %s341, %s342
      %p351 = scmp.eq.s32.totalorder %s85, 0
      %p352 = por %p350, %p351
      %p353 = scmp.ne.s32.totalorder %s341, %s342
      %p354 = scmp.eq.s32.totalorder %s86, 1
      %p355 = por %p353, %p354
      %p357 = scmp.ne.s32.totalorder %s342, %s356
      %p358 = scmp.eq.s32.totalorder %s86, 0
      %p359 = por %p357, %p358
      %s361 = sadd.s32 %s360, 1
      %p364 = scmp.eq.s32.totalorder %s80, 1
      %p365 = scmp.ne.s32.totalorder %s360, %s362
      %p366 = scmp.eq.s32.totalorder %s80, 0
      %p367 = por %p365, %p366
      %p368 = scmp.ne.s32.totalorder %s360, %s362
      %p369 = scmp.eq.s32.totalorder %s85, 1
      %p370 = por %p368, %p369
      %p371 = scmp.ne.s32.totalorder %s362, %s363
      %p372 = scmp.eq.s32.totalorder %s85, 0
      %p373 = por %p371, %p372
      %p374 = scmp.ne.s32.totalorder %s362, %s363
      %p375 = scmp.eq.s32.totalorder %s86, 1
      %p376 = por %p374, %p375
      %p378 = scmp.ne.s32.totalorder %s363, %s377
      %p379 = scmp.eq.s32.totalorder %s86, 0
      %p380 = por %p378, %p379
      %s382 = sadd.s32 %s381, 1
      %p385 = scmp.eq.s32.totalorder %s80, 1
      %p386 = scmp.ne.s32.totalorder %s381, %s383
      %p387 = scmp.eq.s32.totalorder %s80, 0
      %p388 = por %p386, %p387
      %p389 = scmp.ne.s32.totalorder %s381, %s383
      %p390 = scmp.eq.s32.totalorder %s85, 1
      %p391 = por %p389, %p390
      %p392 = scmp.ne.s32.totalorder %s383, %s384
      %p393 = scmp.eq.s32.totalorder %s85, 0
      %p394 = por %p392, %p393
      %p395 = scmp.ne.s32.totalorder %s383, %s384
      %p396 = scmp.eq.s32.totalorder %s86, 1
      %p397 = por %p395, %p396
      %p399 = scmp.ne.s32.totalorder %s384, %s398
      %p400 = scmp.eq.s32.totalorder %s86, 0
      %p401 = por %p399, %p400
      %s403 = sadd.s32 %s402, 1
      %p406 = scmp.eq.s32.totalorder %s80, 1
      %p407 = scmp.ne.s32.totalorder %s402, %s404
      %p408 = scmp.eq.s32.totalorder %s80, 0
      %p409 = por %p407, %p408
      %p410 = scmp.ne.s32.totalorder %s402, %s404
      %p411 = scmp.eq.s32.totalorder %s85, 1
      %p412 = por %p410, %p411
      %p413 = scmp.ne.s32.totalorder %s404, %s405
      %p414 = scmp.eq.s32.totalorder %s85, 0
      %p415 = por %p413, %p414
      %p416 = scmp.ne.s32.totalorder %s404, %s405
      %p417 = scmp.eq.s32.totalorder %s86, 1
      %p418 = por %p416, %p417
      %p420 = scmp.ne.s32.totalorder %s405, %s419
      %p421 = scmp.eq.s32.totalorder %s86, 0
      %p422 = por %p420, %p421
      %s424 = sadd.s32 %s423, 1
      %p427 = scmp.eq.s32.totalorder %s80, 1
      %p428 = scmp.ne.s32.totalorder %s423, %s425
      %p429 = scmp.eq.s32.totalorder %s80, 0
      %p430 = por %p428, %p429
      %p431 = scmp.ne.s32.totalorder %s423, %s425
      %p432 = scmp.eq.s32.totalorder %s85, 1
      %p433 = por %p431, %p432
      %p434 = scmp.ne.s32.totalorder %s425, %s426
      %p435 = scmp.eq.s32.totalorder %s85, 0
      %p436 = por %p434, %p435
      %p437 = scmp.ne.s32.totalorder %s425, %s426
      %p438 = scmp.eq.s32.totalorder %s86, 1
      %p439 = por %p437, %p438
      %p441 = scmp.ne.s32.totalorder %s426, %s440
      %p442 = scmp.eq.s32.totalorder %s86, 0
      %p443 = por %p441, %p442
      %s445 = sadd.s32 %s444, 1
      %p448 = scmp.eq.s32.totalorder %s80, 1
      %p449 = scmp.ne.s32.totalorder %s444, %s446
      %p450 = scmp.eq.s32.totalorder %s80, 0
      %p451 = por %p449, %p450
      %p452 = scmp.ne.s32.totalorder %s444, %s446
      %p453 = scmp.eq.s32.totalorder %s85, 1
      %p454 = por %p452, %p453
      %p455 = scmp.ne.s32.totalorder %s446, %s447
      %p456 = scmp.eq.s32.totalorder %s85, 0
      %p457 = por %p455, %p456
      %p458 = scmp.ne.s32.totalorder %s446, %s447
      %p459 = scmp.eq.s32.totalorder %s86, 1
      %p460 = por %p458, %p459
      %p462 = scmp.ne.s32.totalorder %s447, %s461
      %p463 = scmp.eq.s32.totalorder %s86, 0
      %p464 = por %p462, %p463
      %s466 = sadd.s32 %s465, 1
      %p469 = scmp.eq.s32.totalorder %s80, 1
      %p470 = scmp.ne.s32.totalorder %s465, %s467
      %p471 = scmp.eq.s32.totalorder %s80, 0
      %p472 = por %p470, %p471
      %p473 = scmp.ne.s32.totalorder %s465, %s467
      %p474 = scmp.eq.s32.totalorder %s85, 1
      %p475 = por %p473, %p474
      %p476 = scmp.ne.s32.totalorder %s467, %s468
      %p477 = scmp.eq.s32.totalorder %s85, 0
      %p478 = por %p476, %p477
      %p479 = scmp.ne.s32.totalorder %s467, %s468
      %p480 = scmp.eq.s32.totalorder %s86, 1
      %p481 = por %p479, %p480
      %p483 = scmp.ne.s32.totalorder %s468, %s482
      %p484 = scmp.eq.s32.totalorder %s86, 0
      %p485 = por %p483, %p484
      %s487 = sadd.s32 %s486, 1
      %p490 = scmp.eq.s32.totalorder %s80, 1
      %p491 = scmp.ne.s32.totalorder %s486, %s488
      %p492 = scmp.eq.s32.totalorder %s80, 0
      %p493 = por %p491, %p492
      %p494 = scmp.ne.s32.totalorder %s486, %s488
      %p495 = scmp.eq.s32.totalorder %s85, 1
      %p496 = por %p494, %p495
      %p497 = scmp.ne.s32.totalorder %s488, %s489
      %p498 = scmp.eq.s32.totalorder %s85, 0
      %p499 = por %p497, %p498
      %p500 = scmp.ne.s32.totalorder %s488, %s489
      %p501 = scmp.eq.s32.totalorder %s86, 1
      %p502 = por %p500, %p501
      %p504 = scmp.ne.s32.totalorder %s489, %s503
      %p505 = scmp.eq.s32.totalorder %s86, 0
      %p506 = por %p504, %p505
      %s508 = sadd.s32 %s507, 1
      %p511 = scmp.eq.s32.totalorder %s80, 1
      %p512 = scmp.ne.s32.totalorder %s507, %s509
      %p513 = scmp.eq.s32.totalorder %s80, 0
      %p514 = por %p512, %p513
      %p515 = scmp.ne.s32.totalorder %s507, %s509
      %p516 = scmp.eq.s32.totalorder %s85, 1
      %p517 = por %p515, %p516
      %p518 = scmp.ne.s32.totalorder %s509, %s510
      %p519 = scmp.eq.s32.totalorder %s85, 0
      %p520 = por %p518, %p519
      %p521 = scmp.ne.s32.totalorder %s509, %s510
      %p522 = scmp.eq.s32.totalorder %s86, 1
      %p523 = por %p521, %p522
      %p525 = scmp.ne.s32.totalorder %s510, %s524
      %p526 = scmp.eq.s32.totalorder %s86, 0
      %p527 = por %p525, %p526
      %s529 = sadd.s32 %s528, 1
      %p532 = scmp.eq.s32.totalorder %s80, 1
      %p533 = scmp.ne.s32.totalorder %s528, %s530
      %p534 = scmp.eq.s32.totalorder %s80, 0
      %p535 = por %p533, %p534
      %p536 = scmp.ne.s32.totalorder %s528, %s530
      %p537 = scmp.eq.s32.totalorder %s85, 1
      %p538 = por %p536, %p537
      %p539 = scmp.ne.s32.totalorder %s530, %s531
      %p540 = scmp.eq.s32.totalorder %s85, 0
      %p541 = por %p539, %p540
      %p542 = scmp.ne.s32.totalorder %s530, %s531
      %p543 = scmp.eq.s32.totalorder %s86, 1
      %p544 = por %p542, %p543
      %p546 = scmp.ne.s32.totalorder %s531, %s545
      %p547 = scmp.eq.s32.totalorder %s86, 0
      %p548 = por %p546, %p547
      %s550 = sadd.s32 %s549, 1
      %p553 = scmp.eq.s32.totalorder %s80, 1
      %p554 = scmp.ne.s32.totalorder %s549, %s551
      %p555 = scmp.eq.s32.totalorder %s80, 0
      %p556 = por %p554, %p555
      %p557 = scmp.ne.s32.totalorder %s549, %s551
      %p558 = scmp.eq.s32.totalorder %s85, 1
      %p559 = por %p557, %p558
      %p560 = scmp.ne.s32.totalorder %s551, %s552
      %p561 = scmp.eq.s32.totalorder %s85, 0
      %p562 = por %p560, %p561
      %p563 = scmp.ne.s32.totalorder %s551, %s552
      %p564 = scmp.eq.s32.totalorder %s86, 1
      %p565 = por %p563, %p564
      %p567 = scmp.ne.s32.totalorder %s552, %s566
      %p568 = scmp.eq.s32.totalorder %s86, 0
      %p569 = por %p567, %p568
      %s571 = sadd.s32 %s570, 1
      %p574 = scmp.eq.s32.totalorder %s80, 1
      %p575 = scmp.ne.s32.totalorder %s570, %s572
      %p576 = scmp.eq.s32.totalorder %s80, 0
      %p577 = por %p575, %p576
      %p578 = scmp.ne.s32.totalorder %s570, %s572
      %p579 = scmp.eq.s32.totalorder %s85, 1
      %p580 = por %p578, %p579
      %p581 = scmp.ne.s32.totalorder %s572, %s573
      %p582 = scmp.eq.s32.totalorder %s85, 0
      %p583 = por %p581, %p582
      %p584 = scmp.ne.s32.totalorder %s572, %s573
      %p585 = scmp.eq.s32.totalorder %s86, 1
      %p586 = por %p584, %p585
      %p588 = scmp.ne.s32.totalorder %s573, %s587
      %p589 = scmp.eq.s32.totalorder %s86, 0
      %p590 = por %p588, %p589
      %s592 = sadd.s32 %s591, 1
      %p595 = scmp.eq.s32.totalorder %s80, 1
      %p596 = scmp.ne.s32.totalorder %s591, %s593
      %p597 = scmp.eq.s32.totalorder %s80, 0
      %p598 = por %p596, %p597
      %p599 = scmp.ne.s32.totalorder %s591, %s593
      %p600 = scmp.eq.s32.totalorder %s85, 1
      %p601 = por %p599, %p600
      %p602 = scmp.ne.s32.totalorder %s593, %s594
      %p603 = scmp.eq.s32.totalorder %s85, 0
      %p604 = por %p602, %p603
      %p605 = scmp.ne.s32.totalorder %s593, %s594
      %p606 = scmp.eq.s32.totalorder %s86, 1
      %p607 = por %p605, %p606
      %p609 = scmp.ne.s32.totalorder %s594, %s608
      %p610 = scmp.eq.s32.totalorder %s86, 0
      %p611 = por %p609, %p610
      %s613 = sadd.s32 %s612, 1
      %p616 = scmp.eq.s32.totalorder %s80, 1
      %p617 = scmp.ne.s32.totalorder %s612, %s614
      %p618 = scmp.eq.s32.totalorder %s80, 0
      %p619 = por %p617, %p618
      %p620 = scmp.ne.s32.totalorder %s612, %s614
      %p621 = scmp.eq.s32.totalorder %s85, 1
      %p622 = por %p620, %p621
      %p623 = scmp.ne.s32.totalorder %s614, %s615
      %p624 = scmp.eq.s32.totalorder %s85, 0
      %p625 = por %p623, %p624
      %p626 = scmp.ne.s32.totalorder %s614, %s615
      %p627 = scmp.eq.s32.totalorder %s86, 1
      %p628 = por %p626, %p627
      %p630 = scmp.ne.s32.totalorder %s615, %s629
      %p631 = scmp.eq.s32.totalorder %s86, 0
      %p632 = por %p630, %p631
      %s634 = sadd.s32 %s633, 1
      %p637 = scmp.eq.s32.totalorder %s80, 1
      %p638 = scmp.ne.s32.totalorder %s633, %s635
      %p639 = scmp.eq.s32.totalorder %s80, 0
      %p640 = por %p638, %p639
      %p641 = scmp.ne.s32.totalorder %s633, %s635
      %p642 = scmp.eq.s32.totalorder %s85, 1
      %p643 = por %p641, %p642
      %p644 = scmp.ne.s32.totalorder %s635, %s636
      %p645 = scmp.eq.s32.totalorder %s85, 0
      %p646 = por %p644, %p645
      %p647 = scmp.ne.s32.totalorder %s635, %s636
      %p648 = scmp.eq.s32.totalorder %s86, 1
      %p649 = por %p647, %p648
      %p651 = scmp.ne.s32.totalorder %s636, %s650
      %p652 = scmp.eq.s32.totalorder %s86, 0
      %p653 = por %p651, %p652
      %s655 = sadd.s32 %s654, 1
      %p658 = scmp.eq.s32.totalorder %s80, 1
      %p659 = scmp.ne.s32.totalorder %s654, %s656
      %p660 = scmp.eq.s32.totalorder %s80, 0
      %p661 = por %p659, %p660
      %p662 = scmp.ne.s32.totalorder %s654, %s656
      %p663 = scmp.eq.s32.totalorder %s85, 1
      %p664 = por %p662, %p663
      %p665 = scmp.ne.s32.totalorder %s656, %s657
      %p666 = scmp.eq.s32.totalorder %s85, 0
      %p667 = por %p665, %p666
      %p668 = scmp.ne.s32.totalorder %s656, %s657
      %p669 = scmp.eq.s32.totalorder %s86, 1
      %p670 = por %p668, %p669
      %p672 = scmp.ne.s32.totalorder %s657, %s671
      %p673 = scmp.eq.s32.totalorder %s86, 0
      %p674 = por %p672, %p673
      %s676 = sadd.s32 %s675, 1
      %p679 = scmp.eq.s32.totalorder %s80, 1
      %p680 = scmp.ne.s32.totalorder %s675, %s677
      %p681 = scmp.eq.s32.totalorder %s80, 0
      %p682 = por %p680, %p681
      %p683 = scmp.ne.s32.totalorder %s675, %s677
      %p684 = scmp.eq.s32.totalorder %s85, 1
      %p685 = por %p683, %p684
      %p686 = scmp.ne.s32.totalorder %s677, %s678
      %p687 = scmp.eq.s32.totalorder %s85, 0
      %p688 = por %p686, %p687
      %p689 = scmp.ne.s32.totalorder %s677, %s678
      %p690 = scmp.eq.s32.totalorder %s86, 1
      %p691 = por %p689, %p690
      %p693 = scmp.ne.s32.totalorder %s678, %s692
      %p694 = scmp.eq.s32.totalorder %s86, 0
      %p695 = por %p693, %p694
      %s697 = sadd.s32 %s696, 1
      %p700 = scmp.eq.s32.totalorder %s80, 1
      %p701 = scmp.ne.s32.totalorder %s696, %s698
      %p702 = scmp.eq.s32.totalorder %s80, 0
      %p703 = por %p701, %p702
      %p704 = scmp.ne.s32.totalorder %s696, %s698
      %p705 = scmp.eq.s32.totalorder %s85, 1
      %p706 = por %p704, %p705
      %p707 = scmp.ne.s32.totalorder %s698, %s699
      %p708 = scmp.eq.s32.totalorder %s85, 0
      %p709 = por %p707, %p708
      %p710 = scmp.ne.s32.totalorder %s698, %s699
      %p711 = scmp.eq.s32.totalorder %s86, 1
      %p712 = por %p710, %p711
      %p714 = scmp.ne.s32.totalorder %s699, %s713
      %p715 = scmp.eq.s32.totalorder %s86, 0
      %p716 = por %p714, %p715
      %s718 = sadd.s32 %s717, 1
      %p721 = scmp.eq.s32.totalorder %s80, 1
      %p722 = scmp.ne.s32.totalorder %s717, %s719
      %p723 = scmp.eq.s32.totalorder %s80, 0
      %p724 = por %p722, %p723
      %p725 = scmp.ne.s32.totalorder %s717, %s719
      %p726 = scmp.eq.s32.totalorder %s85, 1
      %p727 = por %p725, %p726
      %p728 = scmp.ne.s32.totalorder %s719, %s720
      %p729 = scmp.eq.s32.totalorder %s85, 0
      %p730 = por %p728, %p729
      %p731 = scmp.ne.s32.totalorder %s719, %s720
      %p732 = scmp.eq.s32.totalorder %s86, 1
      %p733 = por %p731, %p732
      %p735 = scmp.ne.s32.totalorder %s720, %s734
      %p736 = scmp.eq.s32.totalorder %s86, 0
      %p737 = por %p735, %p736
      %s738 = ssub.s32 %s80, %s87
      %p739 = scmp.eq.s32.totalorder %s738, 0
      %s741 = sadd.s32 %s740, 1
      %s742 = scalar_select %p739, %s740, %s741
      %p745 = pneg %p739
      %p746 = scmp.eq.s32.totalorder %s80, 1
      %p747 = por %p745, %p746
      %p748 = scmp.ne.s32.totalorder %s740, %s743
      %p749 = scmp.eq.s32.totalorder %s80, 0
      %p750 = por %p748, %p749
      %p751 = scmp.ne.s32.totalorder %s740, %s743
      %p752 = scmp.eq.s32.totalorder %s85, 1
      %p753 = por %p751, %p752
      %p754 = scmp.ne.s32.totalorder %s743, %s744
      %p755 = scmp.eq.s32.totalorder %s85, 0
      %p756 = por %p754, %p755
      %p757 = scmp.ne.s32.totalorder %s743, %s744
      %p758 = scmp.eq.s32.totalorder %s86, 1
      %p759 = por %p757, %p758
      %p761 = scmp.ne.s32.totalorder %s744, %s760
      %p762 = scmp.eq.s32.totalorder %s86, 0
      %p763 = por %p761, %p762
      %p764 = scmp.le.s32.totalorder 1, %s80
      %p765 = scmp.lt.s32.totalorder %s80, 3
      %p766 = pnand %p764, %p765
      %p767 = pneg %p766
      // Predicated region
      $region9: #{decoder_layer.1} parent=5 // pred_check
        _
      $region10: #{decoder_layer.1} parent=5 // pred_check_branch
        %769 = sbr.rel (%p766) target = $region12
      $region11: #{decoder_layer.1} parent=5 // pred_region
        %s770 = ssub.s32 %s80, 1
        // Predicated region
        $region13: #{decoder_layer.1} parent=11 // pred_check
          %p771 = pneg %p205
        $region14: #{decoder_layer.1} parent=11 // pred_check_branch
          %773 = sbr.rel (%p771) target = $region16
        $region15: #{decoder_layer.1} parent=11 // pred_region
          _
        $region16: #{decoder_layer.1} parent=11 // pred_fallthru
          _
        // Predicated region
        $region17: #{decoder_layer.1} parent=11 // pred_check
          %p774 = pneg %p226
        $region18: #{decoder_layer.1} parent=11 // pred_check_branch
          %776 = sbr.rel (%p774) target = $region20
        $region19: #{decoder_layer.1} parent=11 // pred_region
          _
        $region20: #{decoder_layer.1} parent=11 // pred_fallthru
          _
        // Predicated region
        $region21: #{decoder_layer.1} parent=11 // pred_check
          %p777 = pneg %p247
        $region22: #{decoder_layer.1} parent=11 // pred_check_branch
          %779 = sbr.rel (%p777) target = $region24
        $region23: #{decoder_layer.1} parent=11 // pred_region
          _
        $region24: #{decoder_layer.1} parent=11 // pred_fallthru
          _
        // Predicated region
        $region25: #{decoder_layer.1} parent=11 // pred_check
          %p780 = pneg %p268
        $region26: #{decoder_layer.1} parent=11 // pred_check_branch
          %782 = sbr.rel (%p780) target = $region28
        $region27: #{decoder_layer.1} parent=11 // pred_region
          _
        $region28: #{decoder_layer.1} parent=11 // pred_fallthru
          _
        // Predicated region
        $region29: #{decoder_layer.1} parent=11 // pred_check
          %p783 = pneg %p289
        $region30: #{decoder_layer.1} parent=11 // pred_check_branch
          %785 = sbr.rel (%p783) target = $region32
        $region31: #{decoder_layer.1} parent=11 // pred_region
          %s787 = ssub.s32 2048, 2048
          %788 = vsyncadd [#allocation9], %s787
          %s789 = sshll.u32 [#allocation8], 4
          %s790 = int_to_ptr.vmem [resolvable:$true] %s789
          %795 = dma.hbm_to_vmem [thread:$0]  %s17, 2048, %s790, [#allocation9], 128, 128, 8
        $region32: #{decoder_layer.1} parent=11 // pred_fallthru
          _
        // Predicated region
        $region33: #{decoder_layer.1} parent=11 // pred_check
          %p796 = pneg %p310
        $region34: #{decoder_layer.1} parent=11 // pred_check_branch
          %798 = sbr.rel (%p796) target = $region36
        $region35: #{decoder_layer.1} parent=11 // pred_region
          _
        $region36: #{decoder_layer.1} parent=11 // pred_fallthru
          _
        // Predicated region
        $region37: #{decoder_layer.1} parent=11 // pred_check
          %p799 = pneg %p331
        $region38: #{decoder_layer.1} parent=11 // pred_check_branch
          %801 = sbr.rel (%p799) target = $region40
        $region39: #{decoder_layer.1} parent=11 // pred_region
          %s803 = ssub.s32 2048, 2048
          %804 = vsyncadd [#allocation9], %s803
          %s805 = sshll.u32 [#allocation10], 4
          %s806 = int_to_ptr.vmem [resolvable:$true] %s805
          %811 = dma.hbm_to_vmem [thread:$0]  %s21, 2048, %s806, [#allocation9], 128, 128, 8
        $region40: #{decoder_layer.1} parent=11 // pred_fallthru
          _
        // Predicated region
        $region41: #{decoder_layer.1} parent=11 // pred_check
          %p812 = pneg %p352
        $region42: #{decoder_layer.1} parent=11 // pred_check_branch
          %814 = sbr.rel (%p812) target = $region44
        $region43: #{decoder_layer.1} parent=11 // pred_region
          _
        $region44: #{decoder_layer.1} parent=11 // pred_fallthru
          _
        // Predicated region
        $region45: #{decoder_layer.1} parent=11 // pred_check
          %p815 = pneg %p373
        $region46: #{decoder_layer.1} parent=11 // pred_check_branch
          %817 = sbr.rel (%p815) target = $region48
        $region47: #{decoder_layer.1} parent=11 // pred_region
          %s819 = ssub.s32 2048, 2048
          %820 = vsyncadd [#allocation12], %s819
          %s821 = sshll.u32 [#allocation11], 4
          %s822 = int_to_ptr.vmem [resolvable:$true] %s821
          %827 = dma.hbm_to_vmem [thread:$0]  %s25, 2048, %s822, [#allocation12], 128, 128, 8
        $region48: #{decoder_layer.1} parent=11 // pred_fallthru
          _
        // Predicated region
        $region49: #{decoder_layer.1} parent=11 // pred_check
          %p828 = pneg %p394
        $region50: #{decoder_layer.1} parent=11 // pred_check_branch
          %830 = sbr.rel (%p828) target = $region52
        $region51: #{decoder_layer.1} parent=11 // pred_region
          _
        $region52: #{decoder_layer.1} parent=11 // pred_fallthru
          _
        // Predicated region
        $region53: #{decoder_layer.1} parent=11 // pred_check
          %p831 = pneg %p415
        $region54: #{decoder_layer.1} parent=11 // pred_check_branch
          %833 = sbr.rel (%p831) target = $region56
        $region55: #{decoder_layer.1} parent=11 // pred_region
          _
        $region56: #{decoder_layer.1} parent=11 // pred_fallthru
          _
        // Predicated region
        $region57: #{decoder_layer.1} parent=11 // pred_check
          %p834 = pneg %p436
        $region58: #{decoder_layer.1} parent=11 // pred_check_branch
          %836 = sbr.rel (%p834) target = $region60
        $region59: #{decoder_layer.1} parent=11 // pred_region
          _
        $region60: #{decoder_layer.1} parent=11 // pred_fallthru
          _
        // Predicated region
        $region61: #{decoder_layer.1} parent=11 // pred_check
          %p837 = pneg %p457
        $region62: #{decoder_layer.1} parent=11 // pred_check_branch
          %839 = sbr.rel (%p837) target = $region64
        $region63: #{decoder_layer.1} parent=11 // pred_region
          _
        $region64: #{decoder_layer.1} parent=11 // pred_fallthru
          _
        // Predicated region
        $region65: #{decoder_layer.1} parent=11 // pred_check
          %p840 = pneg %p478
        $region66: #{decoder_layer.1} parent=11 // pred_check_branch
          %842 = sbr.rel (%p840) target = $region68
        $region67: #{decoder_layer.1} parent=11 // pred_region
          _
        $region68: #{decoder_layer.1} parent=11 // pred_fallthru
          _
        // Predicated region
        $region69: #{decoder_layer.1} parent=11 // pred_check
          %p843 = pneg %p499
        $region70: #{decoder_layer.1} parent=11 // pred_check_branch
          %845 = sbr.rel (%p843) target = $region72
        $region71: #{decoder_layer.1} parent=11 // pred_region
          %s847 = ssub.s32 2048, 2048
          %848 = vsyncadd [#allocation12], %s847
          %s849 = sshll.u32 [#allocation13], 4
          %s850 = int_to_ptr.vmem [resolvable:$true] %s849
          %855 = dma.hbm_to_vmem [thread:$0]  %s37, 2048, %s850, [#allocation12], 128, 128, 8
        $region72: #{decoder_layer.1} parent=11 // pred_fallthru
          _
        // Predicated region
        $region73: #{decoder_layer.1} parent=11 // pred_check
          %p856 = pneg %p520
        $region74: #{decoder_layer.1} parent=11 // pred_check_branch
          %858 = sbr.rel (%p856) target = $region76
        $region75: #{decoder_layer.1} parent=11 // pred_region
          %s860 = ssub.s32 16, 16
          %861 = vsyncadd [#allocation15], %s860
          %s863 = sshll.u32 [#allocation14], 4
          %s864 = int_to_ptr.vmem [resolvable:$true] %s863
          %866 = dma.hbm_to_vmem [thread:$0]  %s39, 16, %s864, [#allocation15]
        $region76: #{decoder_layer.1} parent=11 // pred_fallthru
          _
        // Predicated region
        $region77: #{decoder_layer.1} parent=11 // pred_check
          %p867 = pneg %p541
        $region78: #{decoder_layer.1} parent=11 // pred_check_branch
          %869 = sbr.rel (%p867) target = $region80
        $region79: #{decoder_layer.1} parent=11 // pred_region
          %s871 = ssub.s32 2048, 2048
          %872 = vsyncadd [#allocation15], %s871
          %s873 = sshll.u32 [#allocation16], 4
          %s874 = int_to_ptr.vmem [resolvable:$true] %s873
          %879 = dma.hbm_to_vmem [thread:$0]  %s41, 2048, %s874, [#allocation15], 128, 128, 8
        $region80: #{decoder_layer.1} parent=11 // pred_fallthru
          _
        // Predicated region
        $region81: #{decoder_layer.1} parent=11 // pred_check
          %p880 = pneg %p562
        $region82: #{decoder_layer.1} parent=11 // pred_check_branch
          %882 = sbr.rel (%p880) target = $region84
        $region83: #{decoder_layer.1} parent=11 // pred_region
          _
        $region84: #{decoder_layer.1} parent=11 // pred_fallthru
          _
        // Predicated region
        $region85: #{decoder_layer.1} parent=11 // pred_check
          %p883 = pneg %p583
        $region86: #{decoder_layer.1} parent=11 // pred_check_branch
          %885 = sbr.rel (%p883) target = $region88
        $region87: #{decoder_layer.1} parent=11 // pred_region
          %s887 = ssub.s32 2048, 2048
          %888 = vsyncadd [#allocation18], %s887
          %s889 = sshll.u32 [#allocation17], 4
          %s890 = int_to_ptr.vmem [resolvable:$true] %s889
          %895 = dma.hbm_to_vmem [thread:$0]  %s45, 2048, %s890, [#allocation18], 128, 128, 8
        $region88: #{decoder_layer.1} parent=11 // pred_fallthru
          _
        // Predicated region
        $region89: #{decoder_layer.1} parent=11 // pred_check
          %p896 = pneg %p604
        $region90: #{decoder_layer.1} parent=11 // pred_check_branch
          %898 = sbr.rel (%p896) target = $region92
        $region91: #{decoder_layer.1} parent=11 // pred_region
          %s900 = ssub.s32 16, 16
          %901 = vsyncadd [#allocation18], %s900
          %s903 = sshll.u32 [#allocation19], 4
          %s904 = int_to_ptr.vmem [resolvable:$true] %s903
          %906 = dma.hbm_to_vmem [thread:$0]  %s47, 16, %s904, [#allocation18]
        $region92: #{decoder_layer.1} parent=11 // pred_fallthru
          _
        // Predicated region
        $region93: #{decoder_layer.1} parent=11 // pred_check
          %p907 = pneg %p625
        $region94: #{decoder_layer.1} parent=11 // pred_check_branch
          %909 = sbr.rel (%p907) target = $region96
        $region95: #{decoder_layer.1} parent=11 // pred_region
          _
        $region96: #{decoder_layer.1} parent=11 // pred_fallthru
          _
        // Predicated region
        $region97: #{decoder_layer.1} parent=11 // pred_check
          %p910 = pneg %p646
        $region98: #{decoder_layer.1} parent=11 // pred_check_branch
          %912 = sbr.rel (%p910) target = $region100
        $region99: #{decoder_layer.1} parent=11 // pred_region
          _
        $region100: #{decoder_layer.1} parent=11 // pred_fallthru
          _
        // Predicated region
        $region101: #{decoder_layer.1} parent=11 // pred_check
          %p913 = pneg %p667
        $region102: #{decoder_layer.1} parent=11 // pred_check_branch
          %915 = sbr.rel (%p913) target = $region104
        $region103: #{decoder_layer.1} parent=11 // pred_region
          _
        $region104: #{decoder_layer.1} parent=11 // pred_fallthru
          _
        // Predicated region
        $region105: #{decoder_layer.1} parent=11 // pred_check
          %p916 = pneg %p688
        $region106: #{decoder_layer.1} parent=11 // pred_check_branch
          %918 = sbr.rel (%p916) target = $region108
        $region107: #{decoder_layer.1} parent=11 // pred_region
          _
        $region108: #{decoder_layer.1} parent=11 // pred_fallthru
          _
        // Predicated region
        $region109: #{decoder_layer.1} parent=11 // pred_check
          %p919 = pneg %p709
        $region110: #{decoder_layer.1} parent=11 // pred_check_branch
          %921 = sbr.rel (%p919) target = $region112
        $region111: #{decoder_layer.1} parent=11 // pred_region
          _
        $region112: #{decoder_layer.1} parent=11 // pred_fallthru
          _
        // Predicated region
        $region113: #{decoder_layer.1} parent=11 // pred_check
          %p922 = pneg %p730
        $region114: #{decoder_layer.1} parent=11 // pred_check_branch
          %924 = sbr.rel (%p922) target = $region116
        $region115: #{decoder_layer.1} parent=11 // pred_region
          _
        $region116: #{decoder_layer.1} parent=11 // pred_fallthru
          _
      $region12: #{decoder_layer.1} parent=5 // pred_fallthru
        _
      %p925 = scmp.lt.s32.totalorder %s80, 2
      // Predicated region
      $region117: #{decoder_layer.1} parent=5 // pred_check
        %p926 = pneg %p925
      $region118: #{decoder_layer.1} parent=5 // pred_check_branch
        %928 = sbr.rel (%p926) target = $region120
      $region119: #{decoder_layer.1} parent=5 // pred_region
        // Predicated region
        $region121: #{decoder_layer.1} parent=119 // pred_check
          %p929 = pneg %p100
        $region122: #{decoder_layer.1} parent=119 // pred_check_branch
          %931 = sbr.rel (%p929) target = $region124
        $region123: #{decoder_layer.1} parent=119 // pred_region
          %p932 = scmp.lt.s32.totalorder %s80, 1
          %s933 = scalar_select %p932, %s80, 1
          %s934 = smul.addr %s933, 2
          %s935 = smul.addr %s934, 8
          %s936 = scalar_lea.vmem %s1, %s935
        $region124: #{decoder_layer.1} parent=119 // pred_fallthru
          _
        // Predicated region
        $region125: #{decoder_layer.1} parent=119 // pred_check
          %p937 = pneg %p126
        $region126: #{decoder_layer.1} parent=119 // pred_check_branch
          %939 = sbr.rel (%p937) target = $region128
        $region127: #{decoder_layer.1} parent=119 // pred_region
          %s940 = sand.u32 %s116, 1
          %s941 = scalar_lea.sflag [#allocation3], %s940
          %s942 = sand.u32 %s116, 1
          %s943 = smul.addr %s942, 24
          %s944 = scalar_lea.vmem [#allocation2], %s943
          %s946 = ssub.s32 384, 384
          %947 = vsyncadd %s941, %s946
          %s948 = smul.addr %s80, 3
          %s949 = smul.addr %s948, 128
          %s950 = scalar_lea.hbm %s3, %s949
          %s951 = sshll.u32 %s944, 4
          %s952 = int_to_ptr.vmem [resolvable:$true] %s951
          %957 = dma.hbm_to_vmem [thread:$0]  %s950, 384, %s952, %s941, 128, 128, 8
        $region128: #{decoder_layer.1} parent=119 // pred_fallthru
          _
        // Predicated region
        $region129: #{decoder_layer.1} parent=119 // pred_check
          %p958 = pneg %p152
        $region130: #{decoder_layer.1} parent=119 // pred_check_branch
          %960 = sbr.rel (%p958) target = $region132
        $region131: #{decoder_layer.1} parent=119 // pred_region
          %s961 = sand.u32 %s80, 1
          %s962 = scalar_lea.sflag [#allocation6], %s961
          %s963 = sand.u32 %s142, 1
          %s964 = smul.addr %s963, 16
          %s965 = scalar_lea.vmem [#allocation5], %s964
          %s967 = ssub.s32 256, 256
          %968 = vsyncadd %s962, %s967
          %s969 = smul.addr %s80, 2
          %s970 = smul.addr %s969, 128
          %s971 = scalar_lea.hbm %s5, %s970
          %s972 = sshll.u32 %s965, 4
          %s973 = int_to_ptr.vmem [resolvable:$true] %s972
          %978 = dma.hbm_to_vmem [thread:$0]  %s971, 256, %s973, %s962, 128, 128, 8
        $region132: #{decoder_layer.1} parent=119 // pred_fallthru
          _
        // Predicated region
        $region133: #{decoder_layer.1} parent=119 // pred_check
          %p979 = pneg %p178
        $region134: #{decoder_layer.1} parent=119 // pred_check_branch
          %981 = sbr.rel (%p979) target = $region136
        $region135: #{decoder_layer.1} parent=119 // pred_region
          %s982 = sand.u32 %s80, 1
          %s983 = scalar_lea.sflag [#allocation6], %s982
          %s984 = sand.u32 %s168, 1
          %s985 = smul.addr %s984, 16
          %s986 = scalar_lea.vmem [#allocation7], %s985
          %s988 = ssub.s32 256, 256
          %989 = vsyncadd %s983, %s988
          %s990 = smul.addr %s80, 2
          %s991 = smul.addr %s990, 128
          %s992 = scalar_lea.hbm %s7, %s991
          %s993 = sshll.u32 %s986, 4
          %s994 = int_to_ptr.vmem [resolvable:$true] %s993
          %999 = dma.hbm_to_vmem [thread:$0]  %s992, 256, %s994, %s983, 128, 128, 8
        $region136: #{decoder_layer.1} parent=119 // pred_fallthru
          _
      $region120: #{decoder_layer.1} parent=5 // pred_fallthru
        _
      %p1000 = scmp.le.s32.totalorder 1, %s80
      %p1001 = scmp.lt.s32.totalorder %s80, 3
      %p1002 = pnand %p1000, %p1001
      %p1003 = pneg %p1002
      // Predicated region
      $region137: #{decoder_layer.1} parent=5 // pred_check
        _
      $region138: #{decoder_layer.1} parent=5 // pred_check_branch
        %1005 = sbr.rel (%p1002) target = $region140
      $region139: #{decoder_layer.1} parent=5 // pred_region
        %s1006 = ssub.s32 %s80, 1
        %s1007 = sand.u32 %s119, 1
        %s1008 = scalar_lea.sflag [#allocation3], %s1007
        %s1009 = sand.u32 %s119, 1
        %s1010 = smul.addr %s1009, 24
        %s1011 = scalar_lea.vmem [#allocation2], %s1010
        // Predicated region
        $region141: #{decoder_layer.1} parent=139 // pred_check
          %p1012 = pneg %p132
        $region142: #{decoder_layer.1} parent=139 // pred_check_branch
          %1014 = sbr.rel (%p1012) target = $region144
        $region143: #{decoder_layer.1} parent=139 // pred_region
          %1015 = dma.done %s1008, 384
        $region144: #{decoder_layer.1} parent=139 // pred_fallthru
          _
        %s1016 = sand.u32 %s85, 1
        %s1017 = scalar_lea.sflag [#allocation6], %s1016
        %s1018 = sand.u32 %s145, 1
        %s1019 = smul.addr %s1018, 16
        %s1020 = scalar_lea.vmem [#allocation5], %s1019
        // Predicated region
        $region145: #{decoder_layer.1} parent=139 // pred_check
          %p1021 = pneg %p158
        $region146: #{decoder_layer.1} parent=139 // pred_check_branch
          %1023 = sbr.rel (%p1021) target = $region148
        $region147: #{decoder_layer.1} parent=139 // pred_region
          %1024 = dma.done %s1017, 256
        $region148: #{decoder_layer.1} parent=139 // pred_fallthru
          _
        %s1025 = sand.u32 %s85, 1
        %s1026 = scalar_lea.sflag [#allocation6], %s1025
        %s1027 = sand.u32 %s171, 1
        %s1028 = smul.addr %s1027, 16
        %s1029 = scalar_lea.vmem [#allocation7], %s1028
        // Predicated region
        $region149: #{decoder_layer.1} parent=139 // pred_check
          %p1030 = pneg %p184
        $region150: #{decoder_layer.1} parent=139 // pred_check_branch
          %1032 = sbr.rel (%p1030) target = $region152
        $region151: #{decoder_layer.1} parent=139 // pred_region
          %1033 = dma.done %s1026, 256
        $region152: #{decoder_layer.1} parent=139 // pred_fallthru
          _
        // Predicated region
        $region153: #{decoder_layer.1} parent=139 // pred_check
          %p1034 = pneg %p289
        $region154: #{decoder_layer.1} parent=139 // pred_check_branch
          %1036 = sbr.rel (%p1034) target = $region156
        $region155: #{decoder_layer.1} parent=139 // pred_region
          %1037 = dma.done [#allocation9], 2048
        $region156: #{decoder_layer.1} parent=139 // pred_fallthru
          _
        // Predicated region
        $region157: #{decoder_layer.1} parent=139 // pred_check
          %p1038 = pneg %p331
        $region158: #{decoder_layer.1} parent=139 // pred_check_branch
          %1040 = sbr.rel (%p1038) target = $region160
        $region159: #{decoder_layer.1} parent=139 // pred_region
          %1041 = dma.done [#allocation9], 2048
        $region160: #{decoder_layer.1} parent=139 // pred_fallthru
          _
        // Predicated region
        $region161: #{decoder_layer.1} parent=139 // pred_check
          %p1042 = pneg %p373
        $region162: #{decoder_layer.1} parent=139 // pred_check_branch
          %1044 = sbr.rel (%p1042) target = $region164
        $region163: #{decoder_layer.1} parent=139 // pred_region
          %1045 = dma.done [#allocation12], 2048
        $region164: #{decoder_layer.1} parent=139 // pred_fallthru
          _
        // Predicated region
        $region165: #{decoder_layer.1} parent=139 // pred_check
          %p1046 = pneg %p499
        $region166: #{decoder_layer.1} parent=139 // pred_check_branch
          %1048 = sbr.rel (%p1046) target = $region168
        $region167: #{decoder_layer.1} parent=139 // pred_region
          %1049 = dma.done [#allocation12], 2048
        $region168: #{decoder_layer.1} parent=139 // pred_fallthru
          _
        // Predicated region
        $region169: #{decoder_layer.1} parent=139 // pred_check
          %p1050 = pneg %p520
        $region170: #{decoder_layer.1} parent=139 // pred_check_branch
          %1052 = sbr.rel (%p1050) target = $region172
        $region171: #{decoder_layer.1} parent=139 // pred_region
          %1053 = dma.done [#allocation15], 16
        $region172: #{decoder_layer.1} parent=139 // pred_fallthru
          _
        // Predicated region
        $region173: #{decoder_layer.1} parent=139 // pred_check
          %p1054 = pneg %p541
        $region174: #{decoder_layer.1} parent=139 // pred_check_branch
          %1056 = sbr.rel (%p1054) target = $region176
        $region175: #{decoder_layer.1} parent=139 // pred_region
          %1057 = dma.done [#allocation15], 2048
        $region176: #{decoder_layer.1} parent=139 // pred_fallthru
          _
        // Predicated region
        $region177: #{decoder_layer.1} parent=139 // pred_check
          %p1058 = pneg %p583
        $region178: #{decoder_layer.1} parent=139 // pred_check_branch
          %1060 = sbr.rel (%p1058) target = $region180
        $region179: #{decoder_layer.1} parent=139 // pred_region
          %1061 = dma.done [#allocation18], 2048
        $region180: #{decoder_layer.1} parent=139 // pred_fallthru
          _
        // Predicated region
        $region181: #{decoder_layer.1} parent=139 // pred_check
          %p1062 = pneg %p604
        $region182: #{decoder_layer.1} parent=139 // pred_check_branch
          %1064 = sbr.rel (%p1062) target = $region184
        $region183: #{decoder_layer.1} parent=139 // pred_region
          %1065 = dma.done [#allocation18], 16
        $region184: #{decoder_layer.1} parent=139 // pred_fallthru
          _
        %p1066 = scmp.lt.s32.totalorder %s85, 1
        %s1067 = scalar_select %p1066, %s85, 1
        %s1068 = smul.addr %s1067, 2
        %s1069 = smul.addr %s1068, 8
        %s1070 = scalar_lea.vmem %s1, %s1069
        %p1071 = pneg %p106
        %p1072 = pneg %p103
        %s1073 = sand.u32 %s119, 1
        %s1074 = scalar_lea.sflag [#allocation3], %s1073
        %s1075 = sand.u32 %s119, 1
        %s1076 = smul.addr %s1075, 24
        %s1077 = scalar_lea.vmem [#allocation2], %s1076
        %p1078 = pneg %p132
        %p1079 = pneg %p129
        %s1080 = sand.u32 %s85, 1
        %s1081 = scalar_lea.sflag [#allocation6], %s1080
        %s1082 = sand.u32 %s145, 1
        %s1083 = smul.addr %s1082, 16
        %s1084 = scalar_lea.vmem [#allocation5], %s1083
        %p1085 = pneg %p158
        %p1086 = pneg %p155
        %s1087 = sand.u32 %s85, 1
        %s1088 = scalar_lea.sflag [#allocation6], %s1087
        %s1089 = sand.u32 %s171, 1
        %s1090 = smul.addr %s1089, 16
        %s1091 = scalar_lea.vmem [#allocation7], %s1090
        %p1092 = pneg %p184
        %p1093 = pneg %p181
        %p1094 = pneg %p205
        %p1095 = pneg %p202
        %p1096 = pneg %p226
        %p1097 = pneg %p223
        %p1098 = pneg %p247
        %p1099 = pneg %p244
        %p1100 = pneg %p268
        %p1101 = pneg %p265
        %p1102 = pneg %p289
        %p1103 = pneg %p286
        %p1104 = pneg %p310
        %p1105 = pneg %p307
        %p1106 = pneg %p331
        %p1107 = pneg %p328
        %p1108 = pneg %p352
        %p1109 = pneg %p349
        %p1110 = pneg %p373
        %p1111 = pneg %p370
        %p1112 = pneg %p394
        %p1113 = pneg %p391
        %p1114 = pneg %p415
        %p1115 = pneg %p412
        %p1116 = pneg %p436
        %p1117 = pneg %p433
        %p1118 = pneg %p457
        %p1119 = pneg %p454
        %p1120 = pneg %p478
        %p1121 = pneg %p475
        %p1122 = pneg %p499
        %p1123 = pneg %p496
        %p1124 = pneg %p520
        %p1125 = pneg %p517
        %p1126 = pneg %p541
        %p1127 = pneg %p538
        %p1128 = pneg %p562
        %p1129 = pneg %p559
        %p1130 = pneg %p583
        %p1131 = pneg %p580
        %p1132 = pneg %p604
        %p1133 = pneg %p601
        %p1134 = pneg %p625
        %p1135 = pneg %p622
        %p1136 = pneg %p646
        %p1137 = pneg %p643
        %p1138 = pneg %p667
        %p1139 = pneg %p664
        %p1140 = pneg %p688
        %p1141 = pneg %p685
        %p1142 = pneg %p709
        %p1143 = pneg %p706
        %p1144 = pneg %p730
        %p1145 = pneg %p727
        %p1146 = pneg %p756
        %p1147 = pneg %p753
        %s1148 = sand.u32 %s743, 1
        %s1149 = scalar_lea.sflag [#allocation4], %s1148
        %s1150 = sand.u32 %s743, 1
        %s1151 = smul.addr %s1150, 16
        %s1152 = scalar_lea.vmem [#allocation20], %s1151
        %p1153 = scmp.lt.s32.totalorder %s85, 1
        %s1154 = scalar_select %p1153, %s85, 1
        %s1155 = smul.addr %s1154, 2
        %s1156 = smul.addr %s1155, 8
        %s1157 = scalar_lea.vmem %s1, %s1156
        %v1159 = vld [vmem:[%s1157] sm:$0xff]
        %v1160 = vld [vmem:[%s1157 + $0x8] sm:$0xff]
        %v1161 = vld [vmem:[%s1011] sm:$0xff]
        %v1162 = vld [vmem:[%s1011 + $0x8] sm:$0xff]
        %v1163 = vld [vmem:[%s1011 + $0x10] sm:$0xff]
        %v1164 = vld [vmem:[%s1020] sm:$0xff]
        %v1165 = vld [vmem:[%s1020 + $0x8] sm:$0xff]
        %v1166 = vlaneseq
        %v1167 = vshrl.u32 %v1166, 7
        %v1168 = vadd.s32 %v1167, 8
        %v1169 = vlaneseq
        %v1170 = vand.u32 %v1169, 127
        %vm1171 = vcmp.gt.f32.partialorder %v1164, 0.0
        %vm1172 = vcmp.gt.f32.partialorder %v1165, 0.0
        %vm1173 = vcmp.ge.s32.totalorder %v1167, %v1170
        %vm1174 = vcmp.ge.s32.totalorder %v1168, %v1170
        %vm1175 = vmand %vm1171, %vm1173
        %vm1176 = vmand %vm1172, %vm1174
        %v1177 = vsel %vm1175, 0.0, -1e+30
        %v1178 = vsel %vm1176, 0.0, -1e+30
        %v1179 = vld [vmem:[%s1029] sm:$0xff]
        %v1180 = vld [vmem:[%s1029 + $0x8] sm:$0xff]
        %vm1181 = vcmp.gt.f32.partialorder %v1179, 0.0
        %vm1182 = vcmp.gt.f32.partialorder %v1180, 0.0
        %v1183 = vsel %vm1181, 0.0, -1e+30
        %v1184 = vsel %vm1182, 0.0, -1e+30
        %1185 = vadd.xlane.f32.xlu0 %v1159
        %v1186 = vpop.xlane.xlu0 %1185
        %1187 = vadd.xlane.f32.xlu0 %v1160
        %v1188 = vpop.xlane.xlu0 %1187
        %v1189 = vrcp.pop 128.0
        %v1190 = vmul.f32 %v1186, %v1189
        %v1191 = vmul.f32 %v1188, %v1189
        %v1192 = vsub.f32 %v1159, %v1190
        %v1193 = vsub.f32 %v1160, %v1191
        %v1194 = vmul.f32 %v1192, %v1192
        %v1195 = vmul.f32 %v1193, %v1193
        %1196 = vadd.xlane.f32.xlu0 %v1194
        %v1197 = vpop.xlane.xlu0 %1196
        %1198 = vadd.xlane.f32.xlu0 %v1195
        %v1199 = vpop.xlane.xlu0 %1198
        %v1200 = vmul.f32 %v1197, %v1189
        %v1201 = vmul.f32 %v1199, %v1189
        %v1202 = vadd.f32 %v1200, 1e-05
        %v1203 = vadd.f32 %v1201, 1e-05
        %v1204 = vrsqrt.pop %v1202
        %v1205 = vrsqrt.pop %v1203
        %v1206 = vmul.f32 %v1192, %v1204
        %v1207 = vmul.f32 %v1193, %v1205
        %v1208 = vld [vmem:[%s9] sm:$0x1]
        %v1210 = vlaneseq
        %v1211 = vshrl.u32 %v1210, 7
        %v1212 = vsub.s32 0, %v1211
        %v1213 = vrot.slane %v1208, %v1212
        %v1215 = vmul.f32 %v1206, %v1213
        %v1216 = vmul.f32 %v1207, %v1213
        %v1217 = vld [vmem:[%s11] sm:$0x1]
        %v1219 = vlaneseq
        %v1220 = vshrl.u32 %v1219, 7
        %v1221 = vsub.s32 0, %v1220
        %v1222 = vrot.slane %v1217, %v1221
        %v1224 = vadd.f32 %v1215, %v1222
        %v1225 = vadd.f32 %v1216, %v1222
        %v1226 = vld [vmem:[%s13] sm:$0xff]
        %v1227 = vld [vmem:[%s13 + $0x8] sm:$0xff]
        %v1228 = vld [vmem:[%s13 + $0x10] sm:$0xff]
        %v1229 = vld [vmem:[%s13 + $0x18] sm:$0xff]
        %v1230 = vld [vmem:[%s13 + $0x20] sm:$0xff]
        %v1231 = vld [vmem:[%s13 + $0x28] sm:$0xff]
        %v1232 = vld [vmem:[%s13 + $0x30] sm:$0xff]
        %v1233 = vld [vmem:[%s13 + $0x38] sm:$0xff]
        %v1234 = vld [vmem:[%s13 + $0x40] sm:$0xff]
        %v1235 = vld [vmem:[%s13 + $0x48] sm:$0xff]
        %v1236 = vld [vmem:[%s13 + $0x50] sm:$0xff]
        %v1237 = vld [vmem:[%s13 + $0x58] sm:$0xff]
        %v1238 = vld [vmem:[%s13 + $0x60] sm:$0xff]
        %v1239 = vld [vmem:[%s13 + $0x68] sm:$0xff]
        %v1240 = vld [vmem:[%s13 + $0x70] sm:$0xff]
        %v1241 = vld [vmem:[%s13 + $0x78] sm:$0xff]
        %v1242 = vpack.c.bf16 %v1225, %v1224
        %v1243 = vpack.c.bf16 %v1227, %v1226
        %v1244 = vpack.c.bf16 %v1229, %v1228
        %v1245 = vpack.c.bf16 %v1231, %v1230
        %v1246 = vpack.c.bf16 %v1233, %v1232
        %v1247 = vpack.c.bf16 %v1235, %v1234
        %v1248 = vpack.c.bf16 %v1237, %v1236
        %v1249 = vpack.c.bf16 %v1239, %v1238
        %v1250 = vpack.c.bf16 %v1241, %v1240
        %v1251 = vld [vmem:[%s15] sm:$0x1]
        %v1253 = vlaneseq
        %v1254 = vshrl.u32 %v1253, 7
        %v1255 = vsub.s32 0, %v1254
        %v1256 = vrot.slane %v1251, %v1255
        %1258 = vmatprep.subr.bf16.mxu0 0
        %1259 = vmatpush1.bf16.msra.mxu0 %v1250
        %1260 = vmatprep.subr.bf16.mxu0 0
        %1261 = vmatpush1.bf16.msra.mxu0 %v1249
        %1262 = vmatprep.subr.bf16.mxu0 0
        %1263 = vmatpush1.bf16.msra.mxu0 %v1248
        %1264 = vmatprep.subr.bf16.mxu0 0
        %1265 = vmatpush1.bf16.msra.mxu0 %v1247
        %1266 = vmatprep.subr.bf16.mxu0 0
        %1267 = vmatpush1.bf16.msra.mxu0 %v1246
        %1268 = vmatprep.subr.bf16.mxu0 0
        %1269 = vmatpush1.bf16.msra.mxu0 %v1245
        %1270 = vmatprep.subr.bf16.mxu0 0
        %1271 = vmatpush1.bf16.msra.mxu0 %v1244
        %1272 = vmatprep.subr.bf16.mxu0 0
        %1273 = vmatpush1.bf16.msra.mxu0 %v1243
        %1274 = vmatprep.subr.bf16.mxu0 0
        %1275 = vmatpush2.bf16.msra.mxu0 0
        %1276 = vmatprep.subr.bf16.mxu0 0
        %1277 = vmatpush2.bf16.msra.mxu0 0
        %1278 = vmatprep.subr.bf16.mxu0 0
        %1279 = vmatpush2.bf16.msra.mxu0 0
        %1280 = vmatprep.subr.bf16.mxu0 0
        %1281 = vmatpush2.bf16.msra.mxu0 0
        %1282 = vmatprep.subr.bf16.mxu0 0
        %1283 = vmatpush2.bf16.msra.mxu0 0
        %1284 = vmatprep.subr.bf16.mxu0 0
        %1285 = vmatpush2.bf16.msra.mxu0 0
        %1286 = vmatprep.subr.bf16.mxu0 0
        %1287 = vmatpush2.bf16.msra.mxu0 0
        %1288 = vmatprep.subr.bf16.mxu0 0
        %1289 = vmatpush2.bf16.msra.mxu0 0
        %1290 = vmatprep.mubr.bf16.mxu0 0
        %1291 = vmatmul.mubr.bf16.gmra.mxu0 %v1242
        %v1292 = vpop.f32.mrf.mxu0
        %v1293 = vadd.f32 %v1256, %v1292
        %v1294 = vpop.f32.mrf.mxu0
        %v1295 = vpop.f32.mrf.mxu0
        %v1296 = vadd.f32 %v1256, %v1295
        %v1297 = vpop.f32.mrf.mxu0
        %1298 = vdwg.mxu0
        %v1299 = vld [vmem:[#allocation8] sm:$0xff]
        %v1300 = vld [vmem:[#allocation8 + $0x8] sm:$0xff]
        %v1301 = vld [vmem:[#allocation8 + $0x10] sm:$0xff]
        %v1302 = vld [vmem:[#allocation8 + $0x18] sm:$0xff]
        %v1303 = vld [vmem:[#allocation8 + $0x20] sm:$0xff]
        %v1304 = vld [vmem:[#allocation8 + $0x28] sm:$0xff]
        %v1305 = vld [vmem:[#allocation8 + $0x30] sm:$0xff]
        %v1306 = vld [vmem:[#allocation8 + $0x38] sm:$0xff]
        %v1307 = vld [vmem:[#allocation8 + $0x40] sm:$0xff]
        %v1308 = vld [vmem:[#allocation8 + $0x48] sm:$0xff]
        %v1309 = vld [vmem:[#allocation8 + $0x50] sm:$0xff]
        %v1310 = vld [vmem:[#allocation8 + $0x58] sm:$0xff]
        %v1311 = vld [vmem:[#allocation8 + $0x60] sm:$0xff]
        %v1312 = vld [vmem:[#allocation8 + $0x68] sm:$0xff]
        %v1313 = vld [vmem:[#allocation8 + $0x70] sm:$0xff]
        %v1314 = vld [vmem:[#allocation8 + $0x78] sm:$0xff]
        %v1315 = vpack.c.bf16 %v1300, %v1299
        %v1316 = vpack.c.bf16 %v1302, %v1301
        %v1317 = vpack.c.bf16 %v1304, %v1303
        %v1318 = vpack.c.bf16 %v1306, %v1305
        %v1319 = vpack.c.bf16 %v1308, %v1307
        %v1320 = vpack.c.bf16 %v1310, %v1309
        %v1321 = vpack.c.bf16 %v1312, %v1311
        %v1322 = vpack.c.bf16 %v1314, %v1313
        %v1323 = vld [vmem:[%s19] sm:$0x1]
        %v1325 = vlaneseq
        %v1326 = vshrl.u32 %v1325, 7
        %v1327 = vsub.s32 0, %v1326
        %v1328 = vrot.slane %v1323, %v1327
        %1330 = vmatprep.subr.bf16.mxu0 0
        %1331 = vmatpush1.bf16.msra.mxu0 %v1322
        %1332 = vmatprep.subr.bf16.mxu0 0
        %1333 = vmatpush1.bf16.msra.mxu0 %v1321
        %1334 = vmatprep.subr.bf16.mxu0 0
        %1335 = vmatpush1.bf16.msra.mxu0 %v1320
        %1336 = vmatprep.subr.bf16.mxu0 0
        %1337 = vmatpush1.bf16.msra.mxu0 %v1319
        %1338 = vmatprep.subr.bf16.mxu0 0
        %1339 = vmatpush1.bf16.msra.mxu0 %v1318
        %1340 = vmatprep.subr.bf16.mxu0 0
        %1341 = vmatpush1.bf16.msra.mxu0 %v1317
        %1342 = vmatprep.subr.bf16.mxu0 0
        %1343 = vmatpush1.bf16.msra.mxu0 %v1316
        %1344 = vmatprep.subr.bf16.mxu0 0
        %1345 = vmatpush1.bf16.msra.mxu0 %v1315
        %1346 = vmatprep.subr.bf16.mxu0 0
        %1347 = vmatpush2.bf16.msra.mxu0 0
        %1348 = vmatprep.subr.bf16.mxu0 0
        %1349 = vmatpush2.bf16.msra.mxu0 0
        %1350 = vmatprep.subr.bf16.mxu0 0
        %1351 = vmatpush2.bf16.msra.mxu0 0
        %1352 = vmatprep.subr.bf16.mxu0 0
        %1353 = vmatpush2.bf16.msra.mxu0 0
        %1354 = vmatprep.subr.bf16.mxu0 0
        %1355 = vmatpush2.bf16.msra.mxu0 0
        %1356 = vmatprep.subr.bf16.mxu0 0
        %1357 = vmatpush2.bf16.msra.mxu0 0
        %1358 = vmatprep.subr.bf16.mxu0 0
        %1359 = vmatpush2.bf16.msra.mxu0 0
        %1360 = vmatprep.subr.bf16.mxu0 0
        %1361 = vmatpush2.bf16.msra.mxu0 0
        %1362 = vmatprep.mubr.bf16.mxu0 0
        %1363 = vmatmul.mubr.bf16.gmra.mxu0 %v1242
        %v1364 = vpop.f32.mrf.mxu0
        %v1365 = vadd.f32 %v1328, %v1364
        %v1366 = vpop.f32.mrf.mxu0
        %v1367 = vpop.f32.mrf.mxu0
        %v1368 = vadd.f32 %v1328, %v1367
        %v1369 = vpop.f32.mrf.mxu0
        %1370 = vdwg.mxu0
        %v1371 = vld [vmem:[#allocation10] sm:$0xff]
        %v1372 = vld [vmem:[#allocation10 + $0x8] sm:$0xff]
        %v1373 = vld [vmem:[#allocation10 + $0x10] sm:$0xff]
        %v1374 = vld [vmem:[#allocation10 + $0x18] sm:$0xff]
        %v1375 = vld [vmem:[#allocation10 + $0x20] sm:$0xff]
        %v1376 = vld [vmem:[#allocation10 + $0x28] sm:$0xff]
        %v1377 = vld [vmem:[#allocation10 + $0x30] sm:$0xff]
        %v1378 = vld [vmem:[#allocation10 + $0x38] sm:$0xff]
        %v1379 = vld [vmem:[#allocation10 + $0x40] sm:$0xff]
        %v1380 = vld [vmem:[#allocation10 + $0x48] sm:$0xff]
        %v1381 = vld [vmem:[#allocation10 + $0x50] sm:$0xff]
        %v1382 = vld [vmem:[#allocation10 + $0x58] sm:$0xff]
        %v1383 = vld [vmem:[#allocation10 + $0x60] sm:$0xff]
        %v1384 = vld [vmem:[#allocation10 + $0x68] sm:$0xff]
        %v1385 = vld [vmem:[#allocation10 + $0x70] sm:$0xff]
        %v1386 = vld [vmem:[#allocation10 + $0x78] sm:$0xff]
        %v1387 = vpack.c.bf16 %v1372, %v1371
        %v1388 = vpack.c.bf16 %v1374, %v1373
        %v1389 = vpack.c.bf16 %v1376, %v1375
        %v1390 = vpack.c.bf16 %v1378, %v1377
        %v1391 = vpack.c.bf16 %v1380, %v1379
        %v1392 = vpack.c.bf16 %v1382, %v1381
        %v1393 = vpack.c.bf16 %v1384, %v1383
        %v1394 = vpack.c.bf16 %v1386, %v1385
        %v1395 = vld [vmem:[%s23] sm:$0x1]
        %v1397 = vlaneseq
        %v1398 = vshrl.u32 %v1397, 7
        %v1399 = vsub.s32 0, %v1398
        %v1400 = vrot.slane %v1395, %v1399
        %1402 = vmatprep.subr.bf16.mxu0 0
        %1403 = vmatpush1.bf16.msra.mxu0 %v1394
        %1404 = vmatprep.subr.bf16.mxu0 0
        %1405 = vmatpush1.bf16.msra.mxu0 %v1393
        %1406 = vmatprep.subr.bf16.mxu0 0
        %1407 = vmatpush1.bf16.msra.mxu0 %v1392
        %1408 = vmatprep.subr.bf16.mxu0 0
        %1409 = vmatpush1.bf16.msra.mxu0 %v1391
        %1410 = vmatprep.subr.bf16.mxu0 0
        %1411 = vmatpush1.bf16.msra.mxu0 %v1390
        %1412 = vmatprep.subr.bf16.mxu0 0
        %1413 = vmatpush1.bf16.msra.mxu0 %v1389
        %1414 = vmatprep.subr.bf16.mxu0 0
        %1415 = vmatpush1.bf16.msra.mxu0 %v1388
        %1416 = vmatprep.subr.bf16.mxu0 0
        %1417 = vmatpush1.bf16.msra.mxu0 %v1387
        %1418 = vmatprep.subr.bf16.mxu0 0
        %1419 = vmatpush2.bf16.msra.mxu0 0
        %1420 = vmatprep.subr.bf16.mxu0 0
        %1421 = vmatpush2.bf16.msra.mxu0 0
        %1422 = vmatprep.subr.bf16.mxu0 0
        %1423 = vmatpush2.bf16.msra.mxu0 0
        %1424 = vmatprep.subr.bf16.mxu0 0
        %1425 = vmatpush2.bf16.msra.mxu0 0
        %1426 = vmatprep.subr.bf16.mxu0 0
        %1427 = vmatpush2.bf16.msra.mxu0 0
        %1428 = vmatprep.subr.bf16.mxu0 0
        %1429 = vmatpush2.bf16.msra.mxu0 0
        %1430 = vmatprep.subr.bf16.mxu0 0
        %1431 = vmatpush2.bf16.msra.mxu0 0
        %1432 = vmatprep.subr.bf16.mxu0 0
        %1433 = vmatpush2.bf16.msra.mxu0 0
        %1434 = vmatprep.mubr.bf16.mxu0 0
        %1435 = vmatmul.mubr.bf16.gmra.mxu0 %v1242
        %v1436 = vpop.f32.mrf.mxu0
        %v1437 = vadd.f32 %v1400, %v1436
        %v1438 = vpop.f32.mrf.mxu0
        %v1439 = vpop.f32.mrf.mxu0
        %v1440 = vadd.f32 %v1400, %v1439
        %v1441 = vpop.f32.mrf.mxu0
        %1442 = vdwg.mxu0
        %v1443 = vld [vmem:[#allocation11] sm:$0xff]
        %v1444 = vld [vmem:[#allocation11 + $0x8] sm:$0xff]
        %v1445 = vld [vmem:[#allocation11 + $0x10] sm:$0xff]
        %v1446 = vld [vmem:[#allocation11 + $0x18] sm:$0xff]
        %v1447 = vld [vmem:[#allocation11 + $0x20] sm:$0xff]
        %v1448 = vld [vmem:[#allocation11 + $0x28] sm:$0xff]
        %v1449 = vld [vmem:[#allocation11 + $0x30] sm:$0xff]
        %v1450 = vld [vmem:[#allocation11 + $0x38] sm:$0xff]
        %v1451 = vld [vmem:[#allocation11 + $0x40] sm:$0xff]
        %v1452 = vld [vmem:[#allocation11 + $0x48] sm:$0xff]
        %v1453 = vld [vmem:[#allocation11 + $0x50] sm:$0xff]
        %v1454 = vld [vmem:[#allocation11 + $0x58] sm:$0xff]
        %v1455 = vld [vmem:[#allocation11 + $0x60] sm:$0xff]
        %v1456 = vld [vmem:[#allocation11 + $0x68] sm:$0xff]
        %v1457 = vld [vmem:[#allocation11 + $0x70] sm:$0xff]
        %v1458 = vld [vmem:[#allocation11 + $0x78] sm:$0xff]
        %v1459 = vpack.c.bf16 %v1296, %v1293
        %v1460 = vpack.c.bf16 %v1368, %v1365
        %vm1461 = vcmask 261120
        %v1463 = vsel %vm1461, %v1459, 0
        %v1466 = vsel %vm1461, %v1460, 0
        %1468 = vmatprep.subr.bf16.mxu0 0
        %1469 = vmatpush1.bf16.xpose.msra.mxu0 0
        %1470 = vmatprep.subr.bf16.mxu0 0
        %1471 = vmatpush1.bf16.xpose.msra.mxu0 0
        %1472 = vmatprep.subr.bf16.mxu0 0
        %1473 = vmatpush1.bf16.xpose.msra.mxu0 0
        %1474 = vmatprep.subr.bf16.mxu0 0
        %1475 = vmatpush1.bf16.xpose.msra.mxu0 0
        %1476 = vmatprep.subr.bf16.mxu0 0
        %1477 = vmatpush1.bf16.xpose.msra.mxu0 0
        %1478 = vmatprep.subr.bf16.mxu0 0
        %1479 = vmatpush1.bf16.xpose.msra.mxu0 0
        %1480 = vmatprep.subr.bf16.mxu0 0
        %1481 = vmatpush1.bf16.xpose.msra.mxu0 0
        %1482 = vmatprep.subr.bf16.mxu0 0
        %1483 = vmatpush1.bf16.xpose.msra.mxu0 %v1466
        %1484 = vmatprep.subr.bf16.mxu0 0
        %1485 = vmatpush2.bf16.xpose.msra.mxu0 0
        %1486 = vmatprep.subr.bf16.mxu0 0
        %1487 = vmatpush2.bf16.xpose.msra.mxu0 0
        %1488 = vmatprep.subr.bf16.mxu0 0
        %1489 = vmatpush2.bf16.xpose.msra.mxu0 0
        %1490 = vmatprep.subr.bf16.mxu0 0
        %1491 = vmatpush2.bf16.xpose.msra.mxu0 0
        %1492 = vmatprep.subr.bf16.mxu0 0
        %1493 = vmatpush2.bf16.xpose.msra.mxu0 0
        %1494 = vmatprep.subr.bf16.mxu0 0
        %1495 = vmatpush2.bf16.xpose.msra.mxu0 0
        %1496 = vmatprep.subr.bf16.mxu0 0
        %1497 = vmatpush2.bf16.xpose.msra.mxu0 0
        %1498 = vmatprep.subr.bf16.mxu0 0
        %1499 = vmatpush2.bf16.xpose.msra.mxu0 0
        %1500 = vmatprep.mubr.bf16.mxu0 0
        %1501 = vmatmul.mubr.bf16.gmra.mxu0 %v1463
        %v1502 = vpop.f32.mrf.mxu0
        %v1503 = vadd.f32 %v1177, %v1502
        %v1504 = vpop.f32.mrf.mxu0
        %v1505 = vpop.f32.mrf.mxu0
        %v1506 = vadd.f32 %v1178, %v1505
        %v1507 = vpop.f32.mrf.mxu0
        %1508 = vdwg.mxu0
        %vm1509 = vcmask 130048
        %v1510 = vsel %vm1509, %v1503, -inf
        %1511 = vmax.xlane.f32.xlu0 %v1510
        %v1512 = vpop.xlane.xlu0 %1511
        %v1513 = vsel %vm1509, %v1506, -inf
        %1514 = vmax.xlane.f32.xlu0 %v1513
        %v1515 = vpop.xlane.xlu0 %1514
        %v1516 = vsub.f32 %v1503, %v1512
        %v1517 = vsub.f32 %v1506, %v1515
        %v1518 = vmul.f32 %v1516, 1.442695
        %v1519 = vpow.pop %v1518
        %v1520 = vmul.f32 %v1517, 1.442695
        %v1521 = vpow.pop %v1520
        %v1522 = vsel %vm1509, %v1519, 0.0
        %1523 = vadd.xlane.f32.xlu0 %v1522
        %v1524 = vpop.xlane.xlu0 %1523
        %v1525 = vsel %vm1509, %v1521, 0.0
        %1526 = vadd.xlane.f32.xlu0 %v1525
        %v1527 = vpop.xlane.xlu0 %1526
        %v1528 = vpack.c.bf16 %v1521, %v1519
        %v1529 = vpack.c.bf16 %v1440, %v1437
        %v1531 = vsel %vm1509, %v1528, 0
        %1533 = vmatprep.subr.bf16.mxu0 0
        %1534 = vmatpush1.bf16.msra.mxu0 0
        %1535 = vmatprep.subr.bf16.mxu0 0
        %1536 = vmatpush1.bf16.msra.mxu0 0
        %1537 = vmatprep.subr.bf16.mxu0 0
        %1538 = vmatpush1.bf16.msra.mxu0 0
        %1539 = vmatprep.subr.bf16.mxu0 0
        %1540 = vmatpush1.bf16.msra.mxu0 0
        %1541 = vmatprep.subr.bf16.mxu0 0
        %1542 = vmatpush1.bf16.msra.mxu0 0
        %1543 = vmatprep.subr.bf16.mxu0 0
        %1544 = vmatpush1.bf16.msra.mxu0 0
        %1545 = vmatprep.subr.bf16.mxu0 0
        %1546 = vmatpush1.bf16.msra.mxu0 0
        %1547 = vmatprep.subr.bf16.mxu0 0
        %1548 = vmatpush1.bf16.msra.mxu0 %v1529
        %1549 = vmatprep.subr.bf16.mxu0 0
        %1550 = vmatpush2.bf16.msra.mxu0 0
        %1551 = vmatprep.subr.bf16.mxu0 0
        %1552 = vmatpush2.bf16.msra.mxu0 0
        %1553 = vmatprep.subr.bf16.mxu0 0
        %1554 = vmatpush2.bf16.msra.mxu0 0
        %1555 = vmatprep.subr.bf16.mxu0 0
        %1556 = vmatpush2.bf16.msra.mxu0 0
        %1557 = vmatprep.subr.bf16.mxu0 0
        %1558 = vmatpush2.bf16.msra.mxu0 0
        %1559 = vmatprep.subr.bf16.mxu0 0
        %1560 = vmatpush2.bf16.msra.mxu0 0
        %1561 = vmatprep.subr.bf16.mxu0 0
        %1562 = vmatpush2.bf16.msra.mxu0 0
        %1563 = vmatprep.subr.bf16.mxu0 0
        %1564 = vmatpush2.bf16.msra.mxu0 0
        %1565 = vmatprep.mubr.bf16.mxu0 0
        %1566 = vmatmul.mubr.bf16.gmra.mxu0 %v1531
        %v1567 = vpop.f32.mrf.mxu0
        %v1568 = vadd.f32 0.0, %v1567
        %v1569 = vpop.f32.mrf.mxu0
        %v1570 = vpop.f32.mrf.mxu0
        %v1571 = vadd.f32 0.0, %v1570
        %v1572 = vpop.f32.mrf.mxu0
        %1573 = vdwg.mxu0
        %v1574 = vrcp.pop %v1524
        %v1575 = vrcp.pop %v1527
        %v1576 = vmul.f32 %v1568, %v1574
        %v1577 = vmul.f32 %v1571, %v1575
        %v1578 = vpack.c.bf16 %v1577, %v1576
        %v1579 = vpack.c.bf16 %v1444, %v1443
        %v1580 = vpack.c.bf16 %v1446, %v1445
        %1582 = vrot.lane.b32.xlu0 %v1459, 96
        %v1583 = vpop.permute.xlu0 %1582
        %1585 = vrot.lane.b32.xlu0 %v1460, 96
        %v1586 = vpop.permute.xlu0 %1585
        %v1588 = vsel %vm1461, %v1583, 0
        %v1591 = vsel %vm1461, %v1586, 0
        %1593 = vmatprep.subr.bf16.mxu0 0
        %1594 = vmatpush1.bf16.xpose.msra.mxu0 0
        %1595 = vmatprep.subr.bf16.mxu0 0
        %1596 = vmatpush1.bf16.xpose.msra.mxu0 0
        %1597 = vmatprep.subr.bf16.mxu0 0
        %1598 = vmatpush1.bf16.xpose.msra.mxu0 0
        %1599 = vmatprep.subr.bf16.mxu0 0
        %1600 = vmatpush1.bf16.xpose.msra.mxu0 0
        %1601 = vmatprep.subr.bf16.mxu0 0
        %1602 = vmatpush1.bf16.xpose.msra.mxu0 0
        %1603 = vmatprep.subr.bf16.mxu0 0
        %1604 = vmatpush1.bf16.xpose.msra.mxu0 0
        %1605 = vmatprep.subr.bf16.mxu0 0
        %1606 = vmatpush1.bf16.xpose.msra.mxu0 0
        %1607 = vmatprep.subr.bf16.mxu0 0
        %1608 = vmatpush1.bf16.xpose.msra.mxu0 %v1591
        %1609 = vmatprep.subr.bf16.mxu0 0
        %1610 = vmatpush2.bf16.xpose.msra.mxu0 0
        %1611 = vmatprep.subr.bf16.mxu0 0
        %1612 = vmatpush2.bf16.xpose.msra.mxu0 0
        %1613 = vmatprep.subr.bf16.mxu0 0
        %1614 = vmatpush2.bf16.xpose.msra.mxu0 0
        %1615 = vmatprep.subr.bf16.mxu0 0
        %1616 = vmatpush2.bf16.xpose.msra.mxu0 0
        %1617 = vmatprep.subr.bf16.mxu0 0
        %1618 = vmatpush2.bf16.xpose.msra.mxu0 0
        %1619 = vmatprep.subr.bf16.mxu0 0
        %1620 = vmatpush2.bf16.xpose.msra.mxu0 0
        %1621 = vmatprep.subr.bf16.mxu0 0
        %1622 = vmatpush2.bf16.xpose.msra.mxu0 0
        %1623 = vmatprep.subr.bf16.mxu0 0
        %1624 = vmatpush2.bf16.xpose.msra.mxu0 0
        %1625 = vmatprep.mubr.bf16.mxu0 0
        %1626 = vmatmul.mubr.bf16.gmra.mxu0 %v1588
        %v1627 = vpop.f32.mrf.mxu0
        %v1628 = vadd.f32 %v1177, %v1627
        %v1629 = vpop.f32.mrf.mxu0
        %v1630 = vpop.f32.mrf.mxu0
        %v1631 = vadd.f32 %v1178, %v1630
        %v1632 = vpop.f32.mrf.mxu0
        %1633 = vdwg.mxu0
        %v1634 = vsel %vm1509, %v1628, -inf
        %1635 = vmax.xlane.f32.xlu0 %v1634
        %v1636 = vpop.xlane.xlu0 %1635
        %v1637 = vsel %vm1509, %v1631, -inf
        %1638 = vmax.xlane.f32.xlu0 %v1637
        %v1639 = vpop.xlane.xlu0 %1638
        %v1640 = vsub.f32 %v1628, %v1636
        %v1641 = vsub.f32 %v1631, %v1639
        %v1642 = vmul.f32 %v1640, 1.442695
        %v1643 = vpow.pop %v1642
        %v1644 = vmul.f32 %v1641, 1.442695
        %v1645 = vpow.pop %v1644
        %v1646 = vsel %vm1509, %v1643, 0.0
        %1647 = vadd.xlane.f32.xlu0 %v1646
        %v1648 = vpop.xlane.xlu0 %1647
        %v1649 = vsel %vm1509, %v1645, 0.0
        %1650 = vadd.xlane.f32.xlu0 %v1649
        %v1651 = vpop.xlane.xlu0 %1650
        %v1652 = vpack.c.bf16 %v1645, %v1643
        %1654 = vrot.lane.b32.xlu0 %v1529, 96
        %v1655 = vpop.permute.xlu0 %1654
        %v1658 = vsel %vm1509, %v1652, 0
        %1660 = vmatprep.subr.bf16.mxu0 0
        %1661 = vmatpush1.bf16.msra.mxu0 0
        %1662 = vmatprep.subr.bf16.mxu0 0
        %1663 = vmatpush1.bf16.msra.mxu0 0
        %1664 = vmatprep.subr.bf16.mxu0 0
        %1665 = vmatpush1.bf16.msra.mxu0 0
        %1666 = vmatprep.subr.bf16.mxu0 0
        %1667 = vmatpush1.bf16.msra.mxu0 0
        %1668 = vmatprep.subr.bf16.mxu0 0
        %1669 = vmatpush1.bf16.msra.mxu0 0
        %1670 = vmatprep.subr.bf16.mxu0 0
        %1671 = vmatpush1.bf16.msra.mxu0 0
        %1672 = vmatprep.subr.bf16.mxu0 0
        %1673 = vmatpush1.bf16.msra.mxu0 0
        %1674 = vmatprep.subr.bf16.mxu0 0
        %1675 = vmatpush1.bf16.msra.mxu0 %v1655
        %1676 = vmatprep.subr.bf16.mxu0 0
        %1677 = vmatpush2.bf16.msra.mxu0 0
        %1678 = vmatprep.subr.bf16.mxu0 0
        %1679 = vmatpush2.bf16.msra.mxu0 0
        %1680 = vmatprep.subr.bf16.mxu0 0
        %1681 = vmatpush2.bf16.msra.mxu0 0
        %1682 = vmatprep.subr.bf16.mxu0 0
        %1683 = vmatpush2.bf16.msra.mxu0 0
        %1684 = vmatprep.subr.bf16.mxu0 0
        %1685 = vmatpush2.bf16.msra.mxu0 0
        %1686 = vmatprep.subr.bf16.mxu0 0
        %1687 = vmatpush2.bf16.msra.mxu0 0
        %1688 = vmatprep.subr.bf16.mxu0 0
        %1689 = vmatpush2.bf16.msra.mxu0 0
        %1690 = vmatprep.subr.bf16.mxu0 0
        %1691 = vmatpush2.bf16.msra.mxu0 0
        %1692 = vmatprep.mubr.bf16.mxu0 0
        %1693 = vmatmul.mubr.bf16.gmra.mxu0 %v1658
        %v1694 = vpop.f32.mrf.mxu0
        %v1695 = vadd.f32 0.0, %v1694
        %v1696 = vpop.f32.mrf.mxu0
        %v1697 = vpop.f32.mrf.mxu0
        %v1698 = vadd.f32 0.0, %v1697
        %v1699 = vpop.f32.mrf.mxu0
        %1700 = vdwg.mxu0
        %v1701 = vrcp.pop %v1648
        %v1702 = vrcp.pop %v1651
        %v1703 = vmul.f32 %v1695, %v1701
        %v1704 = vmul.f32 %v1698, %v1702
        %v1705 = vpack.c.bf16 %v1704, %v1703
        %v1706 = vpack.c.bf16 %v1448, %v1447
        %v1707 = vpack.c.bf16 %v1450, %v1449
        %v1709 = vsel %vm1461, %v1705, 0
        %1711 = vmatprep.subr.bf16.mxu0 0
        %1712 = vmatpush1.bf16.msra.mxu0 0
        %1713 = vmatprep.subr.bf16.mxu0 0
        %1714 = vmatpush1.bf16.msra.mxu0 0
        %1715 = vmatprep.subr.bf16.mxu0 0
        %1716 = vmatpush1.bf16.msra.mxu0 0
        %1717 = vmatprep.subr.bf16.mxu0 0
        %1718 = vmatpush1.bf16.msra.mxu0 0
        %1719 = vmatprep.subr.bf16.mxu0 0
        %1720 = vmatpush1.bf16.msra.mxu0 0
        %1721 = vmatprep.subr.bf16.mxu0 0
        %1722 = vmatpush1.bf16.msra.mxu0 0
        %1723 = vmatprep.subr.bf16.mxu0 0
        %1724 = vmatpush1.bf16.msra.mxu0 %v1707
        %1725 = vmatprep.subr.bf16.mxu0 0
        %1726 = vmatpush1.bf16.msra.mxu0 %v1706
        %1727 = vmatprep.subr.bf16.mxu0 0
        %1728 = vmatpush2.bf16.msra.mxu0 0
        %1729 = vmatprep.subr.bf16.mxu0 0
        %1730 = vmatpush2.bf16.msra.mxu0 0
        %1731 = vmatprep.subr.bf16.mxu0 0
        %1732 = vmatpush2.bf16.msra.mxu0 0
        %1733 = vmatprep.subr.bf16.mxu0 0
        %1734 = vmatpush2.bf16.msra.mxu0 0
        %1735 = vmatprep.subr.bf16.mxu0 0
        %1736 = vmatpush2.bf16.msra.mxu0 0
        %1737 = vmatprep.subr.bf16.mxu0 0
        %1738 = vmatpush2.bf16.msra.mxu0 0
        %1739 = vmatprep.subr.bf16.mxu0 0
        %1740 = vmatpush2.bf16.msra.mxu0 0
        %1741 = vmatprep.subr.bf16.mxu0 0
        %1742 = vmatpush2.bf16.msra.mxu0 0
        %1743 = vmatprep.mubr.bf16.mxu0 0
        %1744 = vmatmul.mubr.bf16.gmra.mxu0 %v1709
        %v1745 = vpop.f32.mrf.mxu0
        %v1746 = vadd.f32 0.0, %v1745
        %v1747 = vpop.f32.mrf.mxu0
        %v1748 = vpop.f32.mrf.mxu0
        %v1749 = vadd.f32 0.0, %v1748
        %v1750 = vpop.f32.mrf.mxu0
        %1751 = vdwg.mxu0
        %v1753 = vsel %vm1461, %v1578, 0
        %1755 = vmatprep.subr.bf16.mxu0 0
        %1756 = vmatpush1.bf16.msra.mxu0 0
        %1757 = vmatprep.subr.bf16.mxu0 0
        %1758 = vmatpush1.bf16.msra.mxu0 0
        %1759 = vmatprep.subr.bf16.mxu0 0
        %1760 = vmatpush1.bf16.msra.mxu0 0
        %1761 = vmatprep.subr.bf16.mxu0 0
        %1762 = vmatpush1.bf16.msra.mxu0 0
        %1763 = vmatprep.subr.bf16.mxu0 0
        %1764 = vmatpush1.bf16.msra.mxu0 0
        %1765 = vmatprep.subr.bf16.mxu0 0
        %1766 = vmatpush1.bf16.msra.mxu0 0
        %1767 = vmatprep.subr.bf16.mxu0 0
        %1768 = vmatpush1.bf16.msra.mxu0 %v1580
        %1769 = vmatprep.subr.bf16.mxu0 0
        %1770 = vmatpush1.bf16.msra.mxu0 %v1579
        %1771 = vmatprep.subr.bf16.mxu0 0
        %1772 = vmatpush2.bf16.msra.mxu0 0
        %1773 = vmatprep.subr.bf16.mxu0 0
        %1774 = vmatpush2.bf16.msra.mxu0 0
        %1775 = vmatprep.subr.bf16.mxu0 0
        %1776 = vmatpush2.bf16.msra.mxu0 0
        %1777 = vmatprep.subr.bf16.mxu0 0
        %1778 = vmatpush2.bf16.msra.mxu0 0
        %1779 = vmatprep.subr.bf16.mxu0 0
        %1780 = vmatpush2.bf16.msra.mxu0 0
        %1781 = vmatprep.subr.bf16.mxu0 0
        %1782 = vmatpush2.bf16.msra.mxu0 0
        %1783 = vmatprep.subr.bf16.mxu0 0
        %1784 = vmatpush2.bf16.msra.mxu0 0
        %1785 = vmatprep.subr.bf16.mxu0 0
        %1786 = vmatpush2.bf16.msra.mxu0 0
        %1787 = vmatprep.mubr.bf16.mxu0 0
        %1788 = vmatmul.mubr.bf16.gmra.mxu0 %v1753
        %v1789 = vpop.f32.mrf.mxu0
        %v1790 = vadd.f32 %v1746, %v1789
        %v1791 = vpop.f32.mrf.mxu0
        %v1792 = vpop.f32.mrf.mxu0
        %v1793 = vadd.f32 %v1749, %v1792
        %v1794 = vpop.f32.mrf.mxu0
        %1795 = vdwg.mxu0
        %1796 = vrot.lane.b32.xlu0 %v1459, 64
        %v1797 = vpop.permute.xlu0 %1796
        %1798 = vrot.lane.b32.xlu0 %v1460, 64
        %v1799 = vpop.permute.xlu0 %1798
        %v1801 = vsel %vm1461, %v1797, 0
        %v1804 = vsel %vm1461, %v1799, 0
        %1806 = vmatprep.subr.bf16.mxu0 0
        %1807 = vmatpush1.bf16.xpose.msra.mxu0 0
        %1808 = vmatprep.subr.bf16.mxu0 0
        %1809 = vmatpush1.bf16.xpose.msra.mxu0 0
        %1810 = vmatprep.subr.bf16.mxu0 0
        %1811 = vmatpush1.bf16.xpose.msra.mxu0 0
        %1812 = vmatprep.subr.bf16.mxu0 0
        %1813 = vmatpush1.bf16.xpose.msra.mxu0 0
        %1814 = vmatprep.subr.bf16.mxu0 0
        %1815 = vmatpush1.bf16.xpose.msra.mxu0 0
        %1816 = vmatprep.subr.bf16.mxu0 0
        %1817 = vmatpush1.bf16.xpose.msra.mxu0 0
        %1818 = vmatprep.subr.bf16.mxu0 0
        %1819 = vmatpush1.bf16.xpose.msra.mxu0 0
        %1820 = vmatprep.subr.bf16.mxu0 0
        %1821 = vmatpush1.bf16.xpose.msra.mxu0 %v1804
        %1822 = vmatprep.subr.bf16.mxu0 0
        %1823 = vmatpush2.bf16.xpose.msra.mxu0 0
        %1824 = vmatprep.subr.bf16.mxu0 0
        %1825 = vmatpush2.bf16.xpose.msra.mxu0 0
        %1826 = vmatprep.subr.bf16.mxu0 0
        %1827 = vmatpush2.bf16.xpose.msra.mxu0 0
        %1828 = vmatprep.subr.bf16.mxu0 0
        %1829 = vmatpush2.bf16.xpose.msra.mxu0 0
        %1830 = vmatprep.subr.bf16.mxu0 0
        %1831 = vmatpush2.bf16.xpose.msra.mxu0 0
        %1832 = vmatprep.subr.bf16.mxu0 0
        %1833 = vmatpush2.bf16.xpose.msra.mxu0 0
        %1834 = vmatprep.subr.bf16.mxu0 0
        %1835 = vmatpush2.bf16.xpose.msra.mxu0 0
        %1836 = vmatprep.subr.bf16.mxu0 0
        %1837 = vmatpush2.bf16.xpose.msra.mxu0 0
        %1838 = vmatprep.mubr.bf16.mxu0 0
        %1839 = vmatmul.mubr.bf16.gmra.mxu0 %v1801
        %v1840 = vpop.f32.mrf.mxu0
        %v1841 = vadd.f32 %v1177, %v1840
        %v1842 = vpop.f32.mrf.mxu0
        %v1843 = vpop.f32.mrf.mxu0
        %v1844 = vadd.f32 %v1178, %v1843
        %v1845 = vpop.f32.mrf.mxu0
        %1846 = vdwg.mxu0
        %v1847 = vsel %vm1509, %v1841, -inf
        %1848 = vmax.xlane.f32.xlu0 %v1847
        %v1849 = vpop.xlane.xlu0 %1848
        %v1850 = vsel %vm1509, %v1844, -inf
        %1851 = vmax.xlane.f32.xlu0 %v1850
        %v1852 = vpop.xlane.xlu0 %1851
        %v1853 = vsub.f32 %v1841, %v1849
        %v1854 = vsub.f32 %v1844, %v1852
        %v1855 = vmul.f32 %v1853, 1.442695
        %v1856 = vpow.pop %v1855
        %v1857 = vmul.f32 %v1854, 1.442695
        %v1858 = vpow.pop %v1857
        %v1859 = vsel %vm1509, %v1856, 0.0
        %1860 = vadd.xlane.f32.xlu0 %v1859
        %v1861 = vpop.xlane.xlu0 %1860
        %v1862 = vsel %vm1509, %v1858, 0.0
        %1863 = vadd.xlane.f32.xlu0 %v1862
        %v1864 = vpop.xlane.xlu0 %1863
        %v1865 = vpack.c.bf16 %v1858, %v1856
        %1866 = vrot.lane.b32.xlu0 %v1529, 64
        %v1867 = vpop.permute.xlu0 %1866
        %v1870 = vsel %vm1509, %v1865, 0
        %1872 = vmatprep.subr.bf16.mxu0 0
        %1873 = vmatpush1.bf16.msra.mxu0 0
        %1874 = vmatprep.subr.bf16.mxu0 0
        %1875 = vmatpush1.bf16.msra.mxu0 0
        %1876 = vmatprep.subr.bf16.mxu0 0
        %1877 = vmatpush1.bf16.msra.mxu0 0
        %1878 = vmatprep.subr.bf16.mxu0 0
        %1879 = vmatpush1.bf16.msra.mxu0 0
        %1880 = vmatprep.subr.bf16.mxu0 0
        %1881 = vmatpush1.bf16.msra.mxu0 0
        %1882 = vmatprep.subr.bf16.mxu0 0
        %1883 = vmatpush1.bf16.msra.mxu0 0
        %1884 = vmatprep.subr.bf16.mxu0 0
        %1885 = vmatpush1.bf16.msra.mxu0 0
        %1886 = vmatprep.subr.bf16.mxu0 0
        %1887 = vmatpush1.bf16.msra.mxu0 %v1867
        %1888 = vmatprep.subr.bf16.mxu0 0
        %1889 = vmatpush2.bf16.msra.mxu0 0
        %1890 = vmatprep.subr.bf16.mxu0 0
        %1891 = vmatpush2.bf16.msra.mxu0 0
        %1892 = vmatprep.subr.bf16.mxu0 0
        %1893 = vmatpush2.bf16.msra.mxu0 0
        %1894 = vmatprep.subr.bf16.mxu0 0
        %1895 = vmatpush2.bf16.msra.mxu0 0
        %1896 = vmatprep.subr.bf16.mxu0 0
        %1897 = vmatpush2.bf16.msra.mxu0 0
        %1898 = vmatprep.subr.bf16.mxu0 0
        %1899 = vmatpush2.bf16.msra.mxu0 0
        %1900 = vmatprep.subr.bf16.mxu0 0
        %1901 = vmatpush2.bf16.msra.mxu0 0
        %1902 = vmatprep.subr.bf16.mxu0 0
        %1903 = vmatpush2.bf16.msra.mxu0 0
        %1904 = vmatprep.mubr.bf16.mxu0 0
        %1905 = vmatmul.mubr.bf16.gmra.mxu0 %v1870
        %v1906 = vpop.f32.mrf.mxu0
        %v1907 = vadd.f32 0.0, %v1906
        %v1908 = vpop.f32.mrf.mxu0
        %v1909 = vpop.f32.mrf.mxu0
        %v1910 = vadd.f32 0.0, %v1909
        %v1911 = vpop.f32.mrf.mxu0
        %1912 = vdwg.mxu0
        %v1913 = vrcp.pop %v1861
        %v1914 = vrcp.pop %v1864
        %v1915 = vmul.f32 %v1907, %v1913
        %v1916 = vmul.f32 %v1910, %v1914
        %v1917 = vpack.c.bf16 %v1916, %v1915
        %v1918 = vpack.c.bf16 %v1452, %v1451
        %v1919 = vpack.c.bf16 %v1454, %v1453
        %v1921 = vsel %vm1461, %v1917, 0
        %1923 = vmatprep.subr.bf16.mxu0 0
        %1924 = vmatpush1.bf16.msra.mxu0 0
        %1925 = vmatprep.subr.bf16.mxu0 0
        %1926 = vmatpush1.bf16.msra.mxu0 0
        %1927 = vmatprep.subr.bf16.mxu0 0
        %1928 = vmatpush1.bf16.msra.mxu0 0
        %1929 = vmatprep.subr.bf16.mxu0 0
        %1930 = vmatpush1.bf16.msra.mxu0 0
        %1931 = vmatprep.subr.bf16.mxu0 0
        %1932 = vmatpush1.bf16.msra.mxu0 0
        %1933 = vmatprep.subr.bf16.mxu0 0
        %1934 = vmatpush1.bf16.msra.mxu0 0
        %1935 = vmatprep.subr.bf16.mxu0 0
        %1936 = vmatpush1.bf16.msra.mxu0 %v1919
        %1937 = vmatprep.subr.bf16.mxu0 0
        %1938 = vmatpush1.bf16.msra.mxu0 %v1918
        %1939 = vmatprep.subr.bf16.mxu0 0
        %1940 = vmatpush2.bf16.msra.mxu0 0
        %1941 = vmatprep.subr.bf16.mxu0 0
        %1942 = vmatpush2.bf16.msra.mxu0 0
        %1943 = vmatprep.subr.bf16.mxu0 0
        %1944 = vmatpush2.bf16.msra.mxu0 0
        %1945 = vmatprep.subr.bf16.mxu0 0
        %1946 = vmatpush2.bf16.msra.mxu0 0
        %1947 = vmatprep.subr.bf16.mxu0 0
        %1948 = vmatpush2.bf16.msra.mxu0 0
        %1949 = vmatprep.subr.bf16.mxu0 0
        %1950 = vmatpush2.bf16.msra.mxu0 0
        %1951 = vmatprep.subr.bf16.mxu0 0
        %1952 = vmatpush2.bf16.msra.mxu0 0
        %1953 = vmatprep.subr.bf16.mxu0 0
        %1954 = vmatpush2.bf16.msra.mxu0 0
        %1955 = vmatprep.mubr.bf16.mxu0 0
        %1956 = vmatmul.mubr.bf16.gmra.mxu0 %v1921
        %v1957 = vpop.f32.mrf.mxu0
        %v1958 = vadd.f32 0.0, %v1957
        %v1959 = vpop.f32.mrf.mxu0
        %v1960 = vpop.f32.mrf.mxu0
        %v1961 = vadd.f32 0.0, %v1960
        %v1962 = vpop.f32.mrf.mxu0
        %1963 = vdwg.mxu0
        %v1964 = vadd.f32 %v1790, %v1958
        %v1965 = vadd.f32 %v1793, %v1961
        %1966 = vrot.lane.b32.xlu0 %v1459, 32
        %v1967 = vpop.permute.xlu0 %1966
        %1968 = vrot.lane.b32.xlu0 %v1460, 32
        %v1969 = vpop.permute.xlu0 %1968
        %v1971 = vsel %vm1461, %v1967, 0
        %v1974 = vsel %vm1461, %v1969, 0
        %1976 = vmatprep.subr.bf16.mxu0 0
        %1977 = vmatpush1.bf16.xpose.msra.mxu0 0
        %1978 = vmatprep.subr.bf16.mxu0 0
        %1979 = vmatpush1.bf16.xpose.msra.mxu0 0
        %1980 = vmatprep.subr.bf16.mxu0 0
        %1981 = vmatpush1.bf16.xpose.msra.mxu0 0
        %1982 = vmatprep.subr.bf16.mxu0 0
        %1983 = vmatpush1.bf16.xpose.msra.mxu0 0
        %1984 = vmatprep.subr.bf16.mxu0 0
        %1985 = vmatpush1.bf16.xpose.msra.mxu0 0
        %1986 = vmatprep.subr.bf16.mxu0 0
        %1987 = vmatpush1.bf16.xpose.msra.mxu0 0
        %1988 = vmatprep.subr.bf16.mxu0 0
        %1989 = vmatpush1.bf16.xpose.msra.mxu0 0
        %1990 = vmatprep.subr.bf16.mxu0 0
        %1991 = vmatpush1.bf16.xpose.msra.mxu0 %v1974
        %1992 = vmatprep.subr.bf16.mxu0 0
        %1993 = vmatpush2.bf16.xpose.msra.mxu0 0
        %1994 = vmatprep.subr.bf16.mxu0 0
        %1995 = vmatpush2.bf16.xpose.msra.mxu0 0
        %1996 = vmatprep.subr.bf16.mxu0 0
        %1997 = vmatpush2.bf16.xpose.msra.mxu0 0
        %1998 = vmatprep.subr.bf16.mxu0 0
        %1999 = vmatpush2.bf16.xpose.msra.mxu0 0
        %2000 = vmatprep.subr.bf16.mxu0 0
        %2001 = vmatpush2.bf16.xpose.msra.mxu0 0
        %2002 = vmatprep.subr.bf16.mxu0 0
        %2003 = vmatpush2.bf16.xpose.msra.mxu0 0
        %2004 = vmatprep.subr.bf16.mxu0 0
        %2005 = vmatpush2.bf16.xpose.msra.mxu0 0
        %2006 = vmatprep.subr.bf16.mxu0 0
        %2007 = vmatpush2.bf16.xpose.msra.mxu0 0
        %2008 = vmatprep.mubr.bf16.mxu0 0
        %2009 = vmatmul.mubr.bf16.gmra.mxu0 %v1971
        %v2010 = vpop.f32.mrf.mxu0
        %v2011 = vadd.f32 %v1177, %v2010
        %v2012 = vpop.f32.mrf.mxu0
        %v2013 = vpop.f32.mrf.mxu0
        %v2014 = vadd.f32 %v1178, %v2013
        %v2015 = vpop.f32.mrf.mxu0
        %2016 = vdwg.mxu0
        %v2017 = vsel %vm1509, %v2011, -inf
        %2018 = vmax.xlane.f32.xlu0 %v2017
        %v2019 = vpop.xlane.xlu0 %2018
        %v2020 = vsel %vm1509, %v2014, -inf
        %2021 = vmax.xlane.f32.xlu0 %v2020
        %v2022 = vpop.xlane.xlu0 %2021
        %v2023 = vsub.f32 %v2011, %v2019
        %v2024 = vsub.f32 %v2014, %v2022
        %v2025 = vmul.f32 %v2023, 1.442695
        %v2026 = vpow.pop %v2025
        %v2027 = vmul.f32 %v2024, 1.442695
        %v2028 = vpow.pop %v2027
        %v2029 = vsel %vm1509, %v2026, 0.0
        %2030 = vadd.xlane.f32.xlu0 %v2029
        %v2031 = vpop.xlane.xlu0 %2030
        %v2032 = vsel %vm1509, %v2028, 0.0
        %2033 = vadd.xlane.f32.xlu0 %v2032
        %v2034 = vpop.xlane.xlu0 %2033
        %v2035 = vpack.c.bf16 %v2028, %v2026
        %2036 = vrot.lane.b32.xlu0 %v1529, 32
        %v2037 = vpop.permute.xlu0 %2036
        %v2040 = vsel %vm1509, %v2035, 0
        %2042 = vmatprep.subr.bf16.mxu0 0
        %2043 = vmatpush1.bf16.msra.mxu0 0
        %2044 = vmatprep.subr.bf16.mxu0 0
        %2045 = vmatpush1.bf16.msra.mxu0 0
        %2046 = vmatprep.subr.bf16.mxu0 0
        %2047 = vmatpush1.bf16.msra.mxu0 0
        %2048 = vmatprep.subr.bf16.mxu0 0
        %2049 = vmatpush1.bf16.msra.mxu0 0
        %2050 = vmatprep.subr.bf16.mxu0 0
        %2051 = vmatpush1.bf16.msra.mxu0 0
        %2052 = vmatprep.subr.bf16.mxu0 0
        %2053 = vmatpush1.bf16.msra.mxu0 0
        %2054 = vmatprep.subr.bf16.mxu0 0
        %2055 = vmatpush1.bf16.msra.mxu0 0
        %2056 = vmatprep.subr.bf16.mxu0 0
        %2057 = vmatpush1.bf16.msra.mxu0 %v2037
        %2058 = vmatprep.subr.bf16.mxu0 0
        %2059 = vmatpush2.bf16.msra.mxu0 0
        %2060 = vmatprep.subr.bf16.mxu0 0
        %2061 = vmatpush2.bf16.msra.mxu0 0
        %2062 = vmatprep.subr.bf16.mxu0 0
        %2063 = vmatpush2.bf16.msra.mxu0 0
        %2064 = vmatprep.subr.bf16.mxu0 0
        %2065 = vmatpush2.bf16.msra.mxu0 0
        %2066 = vmatprep.subr.bf16.mxu0 0
        %2067 = vmatpush2.bf16.msra.mxu0 0
        %2068 = vmatprep.subr.bf16.mxu0 0
        %2069 = vmatpush2.bf16.msra.mxu0 0
        %2070 = vmatprep.subr.bf16.mxu0 0
        %2071 = vmatpush2.bf16.msra.mxu0 0
        %2072 = vmatprep.subr.bf16.mxu0 0
        %2073 = vmatpush2.bf16.msra.mxu0 0
        %2074 = vmatprep.mubr.bf16.mxu0 0
        %2075 = vmatmul.mubr.bf16.gmra.mxu0 %v2040
        %v2076 = vpop.f32.mrf.mxu0
        %v2077 = vadd.f32 0.0, %v2076
        %v2078 = vpop.f32.mrf.mxu0
        %v2079 = vpop.f32.mrf.mxu0
        %v2080 = vadd.f32 0.0, %v2079
        %v2081 = vpop.f32.mrf.mxu0
        %2082 = vdwg.mxu0
        %v2083 = vrcp.pop %v2031
        %v2084 = vrcp.pop %v2034
        %v2085 = vmul.f32 %v2077, %v2083
        %v2086 = vmul.f32 %v2080, %v2084
        %v2087 = vpack.c.bf16 %v2086, %v2085
        %v2088 = vpack.c.bf16 %v1456, %v1455
        %v2089 = vpack.c.bf16 %v1458, %v1457
        %v2091 = vsel %vm1461, %v2087, 0
        %2093 = vmatprep.subr.bf16.mxu0 0
        %2094 = vmatpush1.bf16.msra.mxu0 0
        %2095 = vmatprep.subr.bf16.mxu0 0
        %2096 = vmatpush1.bf16.msra.mxu0 0
        %2097 = vmatprep.subr.bf16.mxu0 0
        %2098 = vmatpush1.bf16.msra.mxu0 0
        %2099 = vmatprep.subr.bf16.mxu0 0
        %2100 = vmatpush1.bf16.msra.mxu0 0
        %2101 = vmatprep.subr.bf16.mxu0 0
        %2102 = vmatpush1.bf16.msra.mxu0 0
        %2103 = vmatprep.subr.bf16.mxu0 0
        %2104 = vmatpush1.bf16.msra.mxu0 0
        %2105 = vmatprep.subr.bf16.mxu0 0
        %2106 = vmatpush1.bf16.msra.mxu0 %v2089
        %2107 = vmatprep.subr.bf16.mxu0 0
        %2108 = vmatpush1.bf16.msra.mxu0 %v2088
        %2109 = vmatprep.subr.bf16.mxu0 0
        %2110 = vmatpush2.bf16.msra.mxu0 0
        %2111 = vmatprep.subr.bf16.mxu0 0
        %2112 = vmatpush2.bf16.msra.mxu0 0
        %2113 = vmatprep.subr.bf16.mxu0 0
        %2114 = vmatpush2.bf16.msra.mxu0 0
        %2115 = vmatprep.subr.bf16.mxu0 0
        %2116 = vmatpush2.bf16.msra.mxu0 0
        %2117 = vmatprep.subr.bf16.mxu0 0
        %2118 = vmatpush2.bf16.msra.mxu0 0
        %2119 = vmatprep.subr.bf16.mxu0 0
        %2120 = vmatpush2.bf16.msra.mxu0 0
        %2121 = vmatprep.subr.bf16.mxu0 0
        %2122 = vmatpush2.bf16.msra.mxu0 0
        %2123 = vmatprep.subr.bf16.mxu0 0
        %2124 = vmatpush2.bf16.msra.mxu0 0
        %2125 = vmatprep.mubr.bf16.mxu0 0
        %2126 = vmatmul.mubr.bf16.gmra.mxu0 %v2091
        %v2127 = vpop.f32.mrf.mxu0
        %v2128 = vadd.f32 0.0, %v2127
        %v2129 = vpop.f32.mrf.mxu0
        %v2130 = vpop.f32.mrf.mxu0
        %v2131 = vadd.f32 0.0, %v2130
        %v2132 = vpop.f32.mrf.mxu0
        %2133 = vdwg.mxu0
        %v2134 = vadd.f32 %v1964, %v2128
        %v2135 = vadd.f32 %v1965, %v2131
        %v2136 = vld [vmem:[%s27] sm:$0x1]
        %v2138 = vlaneseq
        %v2139 = vshrl.u32 %v2138, 7
        %v2140 = vsub.s32 0, %v2139
        %v2141 = vrot.slane %v2136, %v2140
        %v2143 = vadd.f32 %v2134, %v2141
        %v2144 = vadd.f32 %v2135, %v2141
        %v2145 = vadd.f32 %v1224, %v2143
        %v2146 = vadd.f32 %v1225, %v2144
        %2147 = vadd.xlane.f32.xlu0 %v2145
        %v2148 = vpop.xlane.xlu0 %2147
        %2149 = vadd.xlane.f32.xlu0 %v2146
        %v2150 = vpop.xlane.xlu0 %2149
        %v2151 = vmul.f32 %v2148, %v1189
        %v2152 = vmul.f32 %v2150, %v1189
        %v2153 = vsub.f32 %v2145, %v2151
        %v2154 = vsub.f32 %v2146, %v2152
        %v2155 = vmul.f32 %v2153, %v2153
        %v2156 = vmul.f32 %v2154, %v2154
        %2157 = vadd.xlane.f32.xlu0 %v2155
        %v2158 = vpop.xlane.xlu0 %2157
        %2159 = vadd.xlane.f32.xlu0 %v2156
        %v2160 = vpop.xlane.xlu0 %2159
        %v2161 = vmul.f32 %v2158, %v1189
        %v2162 = vmul.f32 %v2160, %v1189
        %v2163 = vadd.f32 %v2161, 1e-05
        %v2164 = vadd.f32 %v2162, 1e-05
        %v2165 = vrsqrt.pop %v2163
        %v2166 = vrsqrt.pop %v2164
        %v2167 = vmul.f32 %v2153, %v2165
        %v2168 = vmul.f32 %v2154, %v2166
        %v2169 = vld [vmem:[%s29] sm:$0x1]
        %v2171 = vlaneseq
        %v2172 = vshrl.u32 %v2171, 7
        %v2173 = vsub.s32 0, %v2172
        %v2174 = vrot.slane %v2169, %v2173
        %v2176 = vmul.f32 %v2167, %v2174
        %v2177 = vmul.f32 %v2168, %v2174
        %v2178 = vld [vmem:[%s31] sm:$0x1]
        %v2180 = vlaneseq
        %v2181 = vshrl.u32 %v2180, 7
        %v2182 = vsub.s32 0, %v2181
        %v2183 = vrot.slane %v2178, %v2182
        %v2185 = vadd.f32 %v2176, %v2183
        %v2186 = vadd.f32 %v2177, %v2183
        %v2187 = vld [vmem:[%s33] sm:$0xff]
        %v2188 = vld [vmem:[%s33 + $0x8] sm:$0xff]
        %v2189 = vld [vmem:[%s33 + $0x10] sm:$0xff]
        %v2190 = vld [vmem:[%s33 + $0x18] sm:$0xff]
        %v2191 = vld [vmem:[%s33 + $0x20] sm:$0xff]
        %v2192 = vld [vmem:[%s33 + $0x28] sm:$0xff]
        %v2193 = vld [vmem:[%s33 + $0x30] sm:$0xff]
        %v2194 = vld [vmem:[%s33 + $0x38] sm:$0xff]
        %v2195 = vld [vmem:[%s33 + $0x40] sm:$0xff]
        %v2196 = vld [vmem:[%s33 + $0x48] sm:$0xff]
        %v2197 = vld [vmem:[%s33 + $0x50] sm:$0xff]
        %v2198 = vld [vmem:[%s33 + $0x58] sm:$0xff]
        %v2199 = vld [vmem:[%s33 + $0x60] sm:$0xff]
        %v2200 = vld [vmem:[%s33 + $0x68] sm:$0xff]
        %v2201 = vld [vmem:[%s33 + $0x70] sm:$0xff]
        %v2202 = vld [vmem:[%s33 + $0x78] sm:$0xff]
        %v2203 = vpack.c.bf16 %v2186, %v2185
        %v2204 = vpack.c.bf16 %v2188, %v2187
        %v2205 = vpack.c.bf16 %v2190, %v2189
        %v2206 = vpack.c.bf16 %v2192, %v2191
        %v2207 = vpack.c.bf16 %v2194, %v2193
        %v2208 = vpack.c.bf16 %v2196, %v2195
        %v2209 = vpack.c.bf16 %v2198, %v2197
        %v2210 = vpack.c.bf16 %v2200, %v2199
        %v2211 = vpack.c.bf16 %v2202, %v2201
        %v2212 = vld [vmem:[%s35] sm:$0x1]
        %v2214 = vlaneseq
        %v2215 = vshrl.u32 %v2214, 7
        %v2216 = vsub.s32 0, %v2215
        %v2217 = vrot.slane %v2212, %v2216
        %2219 = vmatprep.subr.bf16.mxu0 0
        %2220 = vmatpush1.bf16.msra.mxu0 %v2211
        %2221 = vmatprep.subr.bf16.mxu0 0
        %2222 = vmatpush1.bf16.msra.mxu0 %v2210
        %2223 = vmatprep.subr.bf16.mxu0 0
        %2224 = vmatpush1.bf16.msra.mxu0 %v2209
        %2225 = vmatprep.subr.bf16.mxu0 0
        %2226 = vmatpush1.bf16.msra.mxu0 %v2208
        %2227 = vmatprep.subr.bf16.mxu0 0
        %2228 = vmatpush1.bf16.msra.mxu0 %v2207
        %2229 = vmatprep.subr.bf16.mxu0 0
        %2230 = vmatpush1.bf16.msra.mxu0 %v2206
        %2231 = vmatprep.subr.bf16.mxu0 0
        %2232 = vmatpush1.bf16.msra.mxu0 %v2205
        %2233 = vmatprep.subr.bf16.mxu0 0
        %2234 = vmatpush1.bf16.msra.mxu0 %v2204
        %2235 = vmatprep.subr.bf16.mxu0 0
        %2236 = vmatpush2.bf16.msra.mxu0 0
        %2237 = vmatprep.subr.bf16.mxu0 0
        %2238 = vmatpush2.bf16.msra.mxu0 0
        %2239 = vmatprep.subr.bf16.mxu0 0
        %2240 = vmatpush2.bf16.msra.mxu0 0
        %2241 = vmatprep.subr.bf16.mxu0 0
        %2242 = vmatpush2.bf16.msra.mxu0 0
        %2243 = vmatprep.subr.bf16.mxu0 0
        %2244 = vmatpush2.bf16.msra.mxu0 0
        %2245 = vmatprep.subr.bf16.mxu0 0
        %2246 = vmatpush2.bf16.msra.mxu0 0
        %2247 = vmatprep.subr.bf16.mxu0 0
        %2248 = vmatpush2.bf16.msra.mxu0 0
        %2249 = vmatprep.subr.bf16.mxu0 0
        %2250 = vmatpush2.bf16.msra.mxu0 0
        %2251 = vmatprep.mubr.bf16.mxu0 0
        %2252 = vmatmul.mubr.bf16.gmra.mxu0 %v2203
        %v2253 = vpop.f32.mrf.mxu0
        %v2254 = vadd.f32 %v2217, %v2253
        %v2255 = vpop.f32.mrf.mxu0
        %v2256 = vpop.f32.mrf.mxu0
        %v2257 = vadd.f32 %v2217, %v2256
        %v2258 = vpop.f32.mrf.mxu0
        %2259 = vdwg.mxu0
        %v2260 = vld [vmem:[#allocation13] sm:$0xff]
        %v2261 = vld [vmem:[#allocation13 + $0x8] sm:$0xff]
        %v2262 = vld [vmem:[#allocation13 + $0x10] sm:$0xff]
        %v2263 = vld [vmem:[#allocation13 + $0x18] sm:$0xff]
        %v2264 = vld [vmem:[#allocation13 + $0x20] sm:$0xff]
        %v2265 = vld [vmem:[#allocation13 + $0x28] sm:$0xff]
        %v2266 = vld [vmem:[#allocation13 + $0x30] sm:$0xff]
        %v2267 = vld [vmem:[#allocation13 + $0x38] sm:$0xff]
        %v2268 = vld [vmem:[#allocation13 + $0x40] sm:$0xff]
        %v2269 = vld [vmem:[#allocation13 + $0x48] sm:$0xff]
        %v2270 = vld [vmem:[#allocation13 + $0x50] sm:$0xff]
        %v2271 = vld [vmem:[#allocation13 + $0x58] sm:$0xff]
        %v2272 = vld [vmem:[#allocation13 + $0x60] sm:$0xff]
        %v2273 = vld [vmem:[#allocation13 + $0x68] sm:$0xff]
        %v2274 = vld [vmem:[#allocation13 + $0x70] sm:$0xff]
        %v2275 = vld [vmem:[#allocation13 + $0x78] sm:$0xff]
        %v2276 = vpack.c.bf16 %v1162, %v1161
        %v2277 = vpack.c.bf16 %v1163, %v1163
        %v2278 = vpack.c.bf16 %v2261, %v2260
        %v2279 = vpack.c.bf16 %v2263, %v2262
        %v2280 = vpack.c.bf16 %v2265, %v2264
        %v2281 = vpack.c.bf16 %v2267, %v2266
        %v2282 = vpack.c.bf16 %v2269, %v2268
        %v2283 = vpack.c.bf16 %v2271, %v2270
        %v2284 = vpack.c.bf16 %v2273, %v2272
        %v2285 = vpack.c.bf16 %v2275, %v2274
        %v2286 = vld [vmem:[#allocation14] sm:$0x1]
        %v2288 = vlaneseq
        %v2289 = vshrl.u32 %v2288, 7
        %v2290 = vsub.s32 0, %v2289
        %v2291 = vrot.slane %v2286, %v2290
        %2293 = vmatprep.subr.bf16.mxu0 0
        %2294 = vmatpush1.bf16.msra.mxu0 %v2285
        %2295 = vmatprep.subr.bf16.mxu0 0
        %2296 = vmatpush1.bf16.msra.mxu0 %v2284
        %2297 = vmatprep.subr.bf16.mxu0 0
        %2298 = vmatpush1.bf16.msra.mxu0 %v2283
        %2299 = vmatprep.subr.bf16.mxu0 0
        %2300 = vmatpush1.bf16.msra.mxu0 %v2282
        %2301 = vmatprep.subr.bf16.mxu0 0
        %2302 = vmatpush1.bf16.msra.mxu0 %v2281
        %2303 = vmatprep.subr.bf16.mxu0 0
        %2304 = vmatpush1.bf16.msra.mxu0 %v2280
        %2305 = vmatprep.subr.bf16.mxu0 0
        %2306 = vmatpush1.bf16.msra.mxu0 %v2279
        %2307 = vmatprep.subr.bf16.mxu0 0
        %2308 = vmatpush1.bf16.msra.mxu0 %v2278
        %2309 = vmatprep.subr.bf16.mxu0 0
        %2310 = vmatpush2.bf16.msra.mxu0 0
        %2311 = vmatprep.subr.bf16.mxu0 0
        %2312 = vmatpush2.bf16.msra.mxu0 0
        %2313 = vmatprep.subr.bf16.mxu0 0
        %2314 = vmatpush2.bf16.msra.mxu0 0
        %2315 = vmatprep.subr.bf16.mxu0 0
        %2316 = vmatpush2.bf16.msra.mxu0 0
        %2317 = vmatprep.subr.bf16.mxu0 0
        %2318 = vmatpush2.bf16.msra.mxu0 0
        %2319 = vmatprep.subr.bf16.mxu0 0
        %2320 = vmatpush2.bf16.msra.mxu0 0
        %2321 = vmatprep.subr.bf16.mxu0 0
        %2322 = vmatpush2.bf16.msra.mxu0 0
        %2323 = vmatprep.subr.bf16.mxu0 0
        %2324 = vmatpush2.bf16.msra.mxu0 0
        %2325 = vmatprep.mubr.bf16.mxu0 0
        %2326 = vmatmul.mubr.bf16.gmra.mxu0 %v2276
        %v2327 = vpop.f32.mrf.mxu0
        %v2328 = vadd.f32 %v2291, %v2327
        %v2329 = vpop.f32.mrf.mxu0
        %v2330 = vpop.f32.mrf.mxu0
        %v2331 = vadd.f32 %v2291, %v2330
        %v2332 = vpop.f32.mrf.mxu0
        %2333 = vmatprep.mubr.bf16.mxu0 0
        %2334 = vmatmul.mubr.bf16.gmra.mxu0 %v2277
        %v2335 = vpop.f32.mrf.mxu0
        %v2336 = vadd.f32 %v2291, %v2335
        %v2337 = vpop.f32.mrf.mxu0
        %v2338 = vpop.f32.mrf.mxu0
        %v2339 = vpop.f32.mrf.mxu0
        %2340 = vdwg.mxu0
        %v2341 = vld [vmem:[#allocation16] sm:$0xff]
        %v2342 = vld [vmem:[#allocation16 + $0x8] sm:$0xff]
        %v2343 = vld [vmem:[#allocation16 + $0x10] sm:$0xff]
        %v2344 = vld [vmem:[#allocation16 + $0x18] sm:$0xff]
        %v2345 = vld [vmem:[#allocation16 + $0x20] sm:$0xff]
        %v2346 = vld [vmem:[#allocation16 + $0x28] sm:$0xff]
        %v2347 = vld [vmem:[#allocation16 + $0x30] sm:$0xff]
        %v2348 = vld [vmem:[#allocation16 + $0x38] sm:$0xff]
        %v2349 = vld [vmem:[#allocation16 + $0x40] sm:$0xff]
        %v2350 = vld [vmem:[#allocation16 + $0x48] sm:$0xff]
        %v2351 = vld [vmem:[#allocation16 + $0x50] sm:$0xff]
        %v2352 = vld [vmem:[#allocation16 + $0x58] sm:$0xff]
        %v2353 = vld [vmem:[#allocation16 + $0x60] sm:$0xff]
        %v2354 = vld [vmem:[#allocation16 + $0x68] sm:$0xff]
        %v2355 = vld [vmem:[#allocation16 + $0x70] sm:$0xff]
        %v2356 = vld [vmem:[#allocation16 + $0x78] sm:$0xff]
        %v2357 = vpack.c.bf16 %v2342, %v2341
        %v2358 = vpack.c.bf16 %v2344, %v2343
        %v2359 = vpack.c.bf16 %v2346, %v2345
        %v2360 = vpack.c.bf16 %v2348, %v2347
        %v2361 = vpack.c.bf16 %v2350, %v2349
        %v2362 = vpack.c.bf16 %v2352, %v2351
        %v2363 = vpack.c.bf16 %v2354, %v2353
        %v2364 = vpack.c.bf16 %v2356, %v2355
        %v2365 = vld [vmem:[%s43] sm:$0x1]
        %v2367 = vlaneseq
        %v2368 = vshrl.u32 %v2367, 7
        %v2369 = vsub.s32 0, %v2368
        %v2370 = vrot.slane %v2365, %v2369
        %2372 = vmatprep.subr.bf16.mxu0 0
        %2373 = vmatpush1.bf16.msra.mxu0 %v2364
        %2374 = vmatprep.subr.bf16.mxu0 0
        %2375 = vmatpush1.bf16.msra.mxu0 %v2363
        %2376 = vmatprep.subr.bf16.mxu0 0
        %2377 = vmatpush1.bf16.msra.mxu0 %v2362
        %2378 = vmatprep.subr.bf16.mxu0 0
        %2379 = vmatpush1.bf16.msra.mxu0 %v2361
        %2380 = vmatprep.subr.bf16.mxu0 0
        %2381 = vmatpush1.bf16.msra.mxu0 %v2360
        %2382 = vmatprep.subr.bf16.mxu0 0
        %2383 = vmatpush1.bf16.msra.mxu0 %v2359
        %2384 = vmatprep.subr.bf16.mxu0 0
        %2385 = vmatpush1.bf16.msra.mxu0 %v2358
        %2386 = vmatprep.subr.bf16.mxu0 0
        %2387 = vmatpush1.bf16.msra.mxu0 %v2357
        %2388 = vmatprep.subr.bf16.mxu0 0
        %2389 = vmatpush2.bf16.msra.mxu0 0
        %2390 = vmatprep.subr.bf16.mxu0 0
        %2391 = vmatpush2.bf16.msra.mxu0 0
        %2392 = vmatprep.subr.bf16.mxu0 0
        %2393 = vmatpush2.bf16.msra.mxu0 0
        %2394 = vmatprep.subr.bf16.mxu0 0
        %2395 = vmatpush2.bf16.msra.mxu0 0
        %2396 = vmatprep.subr.bf16.mxu0 0
        %2397 = vmatpush2.bf16.msra.mxu0 0
        %2398 = vmatprep.subr.bf16.mxu0 0
        %2399 = vmatpush2.bf16.msra.mxu0 0
        %2400 = vmatprep.subr.bf16.mxu0 0
        %2401 = vmatpush2.bf16.msra.mxu0 0
        %2402 = vmatprep.subr.bf16.mxu0 0
        %2403 = vmatpush2.bf16.msra.mxu0 0
        %2404 = vmatprep.mubr.bf16.mxu0 0
        %2405 = vmatmul.mubr.bf16.gmra.mxu0 %v2276
        %v2406 = vpop.f32.mrf.mxu0
        %v2407 = vadd.f32 %v2370, %v2406
        %v2408 = vpop.f32.mrf.mxu0
        %v2409 = vpop.f32.mrf.mxu0
        %v2410 = vadd.f32 %v2370, %v2409
        %v2411 = vpop.f32.mrf.mxu0
        %2412 = vmatprep.mubr.bf16.mxu0 0
        %2413 = vmatmul.mubr.bf16.gmra.mxu0 %v2277
        %v2414 = vpop.f32.mrf.mxu0
        %v2415 = vadd.f32 %v2370, %v2414
        %v2416 = vpop.f32.mrf.mxu0
        %v2417 = vpop.f32.mrf.mxu0
        %v2418 = vpop.f32.mrf.mxu0
        %2419 = vdwg.mxu0
        %v2420 = vld [vmem:[#allocation17] sm:$0xff]
        %v2421 = vld [vmem:[#allocation17 + $0x8] sm:$0xff]
        %v2422 = vld [vmem:[#allocation17 + $0x10] sm:$0xff]
        %v2423 = vld [vmem:[#allocation17 + $0x18] sm:$0xff]
        %v2424 = vld [vmem:[#allocation17 + $0x20] sm:$0xff]
        %v2425 = vld [vmem:[#allocation17 + $0x28] sm:$0xff]
        %v2426 = vld [vmem:[#allocation17 + $0x30] sm:$0xff]
        %v2427 = vld [vmem:[#allocation17 + $0x38] sm:$0xff]
        %v2428 = vld [vmem:[#allocation17 + $0x40] sm:$0xff]
        %v2429 = vld [vmem:[#allocation17 + $0x48] sm:$0xff]
        %v2430 = vld [vmem:[#allocation17 + $0x50] sm:$0xff]
        %v2431 = vld [vmem:[#allocation17 + $0x58] sm:$0xff]
        %v2432 = vld [vmem:[#allocation17 + $0x60] sm:$0xff]
        %v2433 = vld [vmem:[#allocation17 + $0x68] sm:$0xff]
        %v2434 = vld [vmem:[#allocation17 + $0x70] sm:$0xff]
        %v2435 = vld [vmem:[#allocation17 + $0x78] sm:$0xff]
        %v2436 = vpack.c.bf16 %v2257, %v2254
        %v2437 = vpack.c.bf16 %v2331, %v2328
        %v2438 = vpack.c.bf16 %v2336, %v2336
        %v2440 = vsel %vm1461, %v2436, 0
        %v2443 = vsel %vm1461, %v2437, 0
        %v2446 = vsel %vm1461, %v2438, 0
        %2448 = vmatprep.subr.bf16.mxu0 0
        %2449 = vmatpush1.bf16.xpose.msra.mxu0 0
        %2450 = vmatprep.subr.bf16.mxu0 0
        %2451 = vmatpush1.bf16.xpose.msra.mxu0 0
        %2452 = vmatprep.subr.bf16.mxu0 0
        %2453 = vmatpush1.bf16.xpose.msra.mxu0 0
        %2454 = vmatprep.subr.bf16.mxu0 0
        %2455 = vmatpush1.bf16.xpose.msra.mxu0 0
        %2456 = vmatprep.subr.bf16.mxu0 0
        %2457 = vmatpush1.bf16.xpose.msra.mxu0 0
        %2458 = vmatprep.subr.bf16.mxu0 0
        %2459 = vmatpush1.bf16.xpose.msra.mxu0 0
        %2460 = vmatprep.subr.bf16.mxu0 0
        %2461 = vmatpush1.bf16.xpose.msra.mxu0 %v2446
        %2462 = vmatprep.subr.bf16.mxu0 0
        %2463 = vmatpush1.bf16.xpose.msra.mxu0 %v2443
        %2464 = vmatprep.subr.bf16.mxu0 0
        %2465 = vmatpush2.bf16.xpose.msra.mxu0 0
        %2466 = vmatprep.subr.bf16.mxu0 0
        %2467 = vmatpush2.bf16.xpose.msra.mxu0 0
        %2468 = vmatprep.subr.bf16.mxu0 0
        %2469 = vmatpush2.bf16.xpose.msra.mxu0 0
        %2470 = vmatprep.subr.bf16.mxu0 0
        %2471 = vmatpush2.bf16.xpose.msra.mxu0 0
        %2472 = vmatprep.subr.bf16.mxu0 0
        %2473 = vmatpush2.bf16.xpose.msra.mxu0 0
        %2474 = vmatprep.subr.bf16.mxu0 0
        %2475 = vmatpush2.bf16.xpose.msra.mxu0 0
        %2476 = vmatprep.subr.bf16.mxu0 0
        %2477 = vmatpush2.bf16.xpose.msra.mxu0 0
        %2478 = vmatprep.subr.bf16.mxu0 0
        %2479 = vmatpush2.bf16.xpose.msra.mxu0 0
        %2480 = vmatprep.mubr.bf16.mxu0 0
        %2481 = vmatmul.mubr.bf16.gmra.mxu0 %v2440
        %v2482 = vpop.f32.mrf.mxu0
        %v2483 = vadd.f32 %v1183, %v2482
        %v2484 = vpop.f32.mrf.mxu0
        %v2485 = vpop.f32.mrf.mxu0
        %v2486 = vadd.f32 %v1184, %v2485
        %v2487 = vpop.f32.mrf.mxu0
        %2488 = vdwg.mxu0
        %vm2489 = vcmask 195584
        %v2490 = vsel %vm2489, %v2483, -inf
        %2491 = vmax.xlane.f32.xlu0 %v2490
        %v2492 = vpop.xlane.xlu0 %2491
        %v2493 = vsel %vm2489, %v2486, -inf
        %2494 = vmax.xlane.f32.xlu0 %v2493
        %v2495 = vpop.xlane.xlu0 %2494
        %v2496 = vsub.f32 %v2483, %v2492
        %v2497 = vsub.f32 %v2486, %v2495
        %v2498 = vmul.f32 %v2496, 1.442695
        %v2499 = vpow.pop %v2498
        %v2500 = vmul.f32 %v2497, 1.442695
        %v2501 = vpow.pop %v2500
        %v2502 = vsel %vm2489, %v2499, 0.0
        %2503 = vadd.xlane.f32.xlu0 %v2502
        %v2504 = vpop.xlane.xlu0 %2503
        %v2505 = vsel %vm2489, %v2501, 0.0
        %2506 = vadd.xlane.f32.xlu0 %v2505
        %v2507 = vpop.xlane.xlu0 %2506
        %v2508 = vpack.c.bf16 %v2501, %v2499
        %v2509 = vpack.c.bf16 %v2410, %v2407
        %v2510 = vpack.c.bf16 %v2415, %v2415
        %v2512 = vsel %vm2489, %v2508, 0
        %vm2514 = vcmask 1043456
        %v2516 = vsel %vm2514, %v2510, 0
        %2518 = vmatprep.subr.bf16.mxu0 0
        %2519 = vmatpush1.bf16.msra.mxu0 0
        %2520 = vmatprep.subr.bf16.mxu0 0
        %2521 = vmatpush1.bf16.msra.mxu0 0
        %2522 = vmatprep.subr.bf16.mxu0 0
        %2523 = vmatpush1.bf16.msra.mxu0 0
        %2524 = vmatprep.subr.bf16.mxu0 0
        %2525 = vmatpush1.bf16.msra.mxu0 0
        %2526 = vmatprep.subr.bf16.mxu0 0
        %2527 = vmatpush1.bf16.msra.mxu0 0
        %2528 = vmatprep.subr.bf16.mxu0 0
        %2529 = vmatpush1.bf16.msra.mxu0 0
        %2530 = vmatprep.subr.bf16.mxu0 0
        %2531 = vmatpush1.bf16.msra.mxu0 %v2516
        %2532 = vmatprep.subr.bf16.mxu0 0
        %2533 = vmatpush1.bf16.msra.mxu0 %v2509
        %2534 = vmatprep.subr.bf16.mxu0 0
        %2535 = vmatpush2.bf16.msra.mxu0 0
        %2536 = vmatprep.subr.bf16.mxu0 0
        %2537 = vmatpush2.bf16.msra.mxu0 0
        %2538 = vmatprep.subr.bf16.mxu0 0
        %2539 = vmatpush2.bf16.msra.mxu0 0
        %2540 = vmatprep.subr.bf16.mxu0 0
        %2541 = vmatpush2.bf16.msra.mxu0 0
        %2542 = vmatprep.subr.bf16.mxu0 0
        %2543 = vmatpush2.bf16.msra.mxu0 0
        %2544 = vmatprep.subr.bf16.mxu0 0
        %2545 = vmatpush2.bf16.msra.mxu0 0
        %2546 = vmatprep.subr.bf16.mxu0 0
        %2547 = vmatpush2.bf16.msra.mxu0 0
        %2548 = vmatprep.subr.bf16.mxu0 0
        %2549 = vmatpush2.bf16.msra.mxu0 0
        %2550 = vmatprep.mubr.bf16.mxu0 0
        %2551 = vmatmul.mubr.bf16.gmra.mxu0 %v2512
        %v2552 = vpop.f32.mrf.mxu0
        %v2553 = vadd.f32 0.0, %v2552
        %v2554 = vpop.f32.mrf.mxu0
        %v2555 = vpop.f32.mrf.mxu0
        %v2556 = vadd.f32 0.0, %v2555
        %v2557 = vpop.f32.mrf.mxu0
        %2558 = vdwg.mxu0
        %v2559 = vrcp.pop %v2504
        %v2560 = vrcp.pop %v2507
        %v2561 = vmul.f32 %v2553, %v2559
        %v2562 = vmul.f32 %v2556, %v2560
        %v2563 = vpack.c.bf16 %v2562, %v2561
        %v2564 = vpack.c.bf16 %v2421, %v2420
        %v2565 = vpack.c.bf16 %v2423, %v2422
        %2567 = vrot.lane.b32.xlu0 %v2436, 96
        %v2568 = vpop.permute.xlu0 %2567
        %2571 = vrot.lane.b32.xlu0 %v2437, 96
        %v2572 = vpop.permute.xlu0 %2571
        %2573 = vrot.lane.b32.xlu0 %v2438, 96
        %v2574 = vpop.permute.xlu0 %2573
        %v2576 = vsel %vm1461, %v2568, 0
        %v2579 = vsel %vm1461, %v2572, 0
        %v2582 = vsel %vm1461, %v2574, 0
        %2584 = vmatprep.subr.bf16.mxu0 0
        %2585 = vmatpush1.bf16.xpose.msra.mxu0 0
        %2586 = vmatprep.subr.bf16.mxu0 0
        %2587 = vmatpush1.bf16.xpose.msra.mxu0 0
        %2588 = vmatprep.subr.bf16.mxu0 0
        %2589 = vmatpush1.bf16.xpose.msra.mxu0 0
        %2590 = vmatprep.subr.bf16.mxu0 0
        %2591 = vmatpush1.bf16.xpose.msra.mxu0 0
        %2592 = vmatprep.subr.bf16.mxu0 0
        %2593 = vmatpush1.bf16.xpose.msra.mxu0 0
        %2594 = vmatprep.subr.bf16.mxu0 0
        %2595 = vmatpush1.bf16.xpose.msra.mxu0 0
        %2596 = vmatprep.subr.bf16.mxu0 0
        %2597 = vmatpush1.bf16.xpose.msra.mxu0 %v2582
        %2598 = vmatprep.subr.bf16.mxu0 0
        %2599 = vmatpush1.bf16.xpose.msra.mxu0 %v2579
        %2600 = vmatprep.subr.bf16.mxu0 0
        %2601 = vmatpush2.bf16.xpose.msra.mxu0 0
        %2602 = vmatprep.subr.bf16.mxu0 0
        %2603 = vmatpush2.bf16.xpose.msra.mxu0 0
        %2604 = vmatprep.subr.bf16.mxu0 0
        %2605 = vmatpush2.bf16.xpose.msra.mxu0 0
        %2606 = vmatprep.subr.bf16.mxu0 0
        %2607 = vmatpush2.bf16.xpose.msra.mxu0 0
        %2608 = vmatprep.subr.bf16.mxu0 0
        %2609 = vmatpush2.bf16.xpose.msra.mxu0 0
        %2610 = vmatprep.subr.bf16.mxu0 0
        %2611 = vmatpush2.bf16.xpose.msra.mxu0 0
        %2612 = vmatprep.subr.bf16.mxu0 0
        %2613 = vmatpush2.bf16.xpose.msra.mxu0 0
        %2614 = vmatprep.subr.bf16.mxu0 0
        %2615 = vmatpush2.bf16.xpose.msra.mxu0 0
        %2616 = vmatprep.mubr.bf16.mxu0 0
        %2617 = vmatmul.mubr.bf16.gmra.mxu0 %v2576
        %v2618 = vpop.f32.mrf.mxu0
        %v2619 = vadd.f32 %v1183, %v2618
        %v2620 = vpop.f32.mrf.mxu0
        %v2621 = vpop.f32.mrf.mxu0
        %v2622 = vadd.f32 %v1184, %v2621
        %v2623 = vpop.f32.mrf.mxu0
        %2624 = vdwg.mxu0
        %v2625 = vsel %vm2489, %v2619, -inf
        %2626 = vmax.xlane.f32.xlu0 %v2625
        %v2627 = vpop.xlane.xlu0 %2626
        %v2628 = vsel %vm2489, %v2622, -inf
        %2629 = vmax.xlane.f32.xlu0 %v2628
        %v2630 = vpop.xlane.xlu0 %2629
        %v2631 = vsub.f32 %v2619, %v2627
        %v2632 = vsub.f32 %v2622, %v2630
        %v2633 = vmul.f32 %v2631, 1.442695
        %v2634 = vpow.pop %v2633
        %v2635 = vmul.f32 %v2632, 1.442695
        %v2636 = vpow.pop %v2635
        %v2637 = vsel %vm2489, %v2634, 0.0
        %2638 = vadd.xlane.f32.xlu0 %v2637
        %v2639 = vpop.xlane.xlu0 %2638
        %v2640 = vsel %vm2489, %v2636, 0.0
        %2641 = vadd.xlane.f32.xlu0 %v2640
        %v2642 = vpop.xlane.xlu0 %2641
        %v2643 = vpack.c.bf16 %v2636, %v2634
        %2646 = vrot.lane.b32.xlu0 %v2509, 96
        %v2647 = vpop.permute.xlu0 %2646
        %2648 = vrot.lane.b32.xlu0 %v2510, 96
        %v2649 = vpop.permute.xlu0 %2648
        %v2652 = vsel %vm2489, %v2643, 0
        %v2655 = vsel %vm2514, %v2649, 0
        %2657 = vmatprep.subr.bf16.mxu0 0
        %2658 = vmatpush1.bf16.msra.mxu0 0
        %2659 = vmatprep.subr.bf16.mxu0 0
        %2660 = vmatpush1.bf16.msra.mxu0 0
        %2661 = vmatprep.subr.bf16.mxu0 0
        %2662 = vmatpush1.bf16.msra.mxu0 0
        %2663 = vmatprep.subr.bf16.mxu0 0
        %2664 = vmatpush1.bf16.msra.mxu0 0
        %2665 = vmatprep.subr.bf16.mxu0 0
        %2666 = vmatpush1.bf16.msra.mxu0 0
        %2667 = vmatprep.subr.bf16.mxu0 0
        %2668 = vmatpush1.bf16.msra.mxu0 0
        %2669 = vmatprep.subr.bf16.mxu0 0
        %2670 = vmatpush1.bf16.msra.mxu0 %v2655
        %2671 = vmatprep.subr.bf16.mxu0 0
        %2672 = vmatpush1.bf16.msra.mxu0 %v2647
        %2673 = vmatprep.subr.bf16.mxu0 0
        %2674 = vmatpush2.bf16.msra.mxu0 0
        %2675 = vmatprep.subr.bf16.mxu0 0
        %2676 = vmatpush2.bf16.msra.mxu0 0
        %2677 = vmatprep.subr.bf16.mxu0 0
        %2678 = vmatpush2.bf16.msra.mxu0 0
        %2679 = vmatprep.subr.bf16.mxu0 0
        %2680 = vmatpush2.bf16.msra.mxu0 0
        %2681 = vmatprep.subr.bf16.mxu0 0
        %2682 = vmatpush2.bf16.msra.mxu0 0
        %2683 = vmatprep.subr.bf16.mxu0 0
        %2684 = vmatpush2.bf16.msra.mxu0 0
        %2685 = vmatprep.subr.bf16.mxu0 0
        %2686 = vmatpush2.bf16.msra.mxu0 0
        %2687 = vmatprep.subr.bf16.mxu0 0
        %2688 = vmatpush2.bf16.msra.mxu0 0
        %2689 = vmatprep.mubr.bf16.mxu0 0
        %2690 = vmatmul.mubr.bf16.gmra.mxu0 %v2652
        %v2691 = vpop.f32.mrf.mxu0
        %v2692 = vadd.f32 0.0, %v2691
        %v2693 = vpop.f32.mrf.mxu0
        %v2694 = vpop.f32.mrf.mxu0
        %v2695 = vadd.f32 0.0, %v2694
        %v2696 = vpop.f32.mrf.mxu0
        %2697 = vdwg.mxu0
        %v2698 = vrcp.pop %v2639
        %v2699 = vrcp.pop %v2642
        %v2700 = vmul.f32 %v2692, %v2698
        %v2701 = vmul.f32 %v2695, %v2699
        %v2702 = vpack.c.bf16 %v2701, %v2700
        %v2703 = vpack.c.bf16 %v2425, %v2424
        %v2704 = vpack.c.bf16 %v2427, %v2426
        %v2706 = vsel %vm1461, %v2702, 0
        %2708 = vmatprep.subr.bf16.mxu0 0
        %2709 = vmatpush1.bf16.msra.mxu0 0
        %2710 = vmatprep.subr.bf16.mxu0 0
        %2711 = vmatpush1.bf16.msra.mxu0 0
        %2712 = vmatprep.subr.bf16.mxu0 0
        %2713 = vmatpush1.bf16.msra.mxu0 0
        %2714 = vmatprep.subr.bf16.mxu0 0
        %2715 = vmatpush1.bf16.msra.mxu0 0
        %2716 = vmatprep.subr.bf16.mxu0 0
        %2717 = vmatpush1.bf16.msra.mxu0 0
        %2718 = vmatprep.subr.bf16.mxu0 0
        %2719 = vmatpush1.bf16.msra.mxu0 0
        %2720 = vmatprep.subr.bf16.mxu0 0
        %2721 = vmatpush1.bf16.msra.mxu0 %v2704
        %2722 = vmatprep.subr.bf16.mxu0 0
        %2723 = vmatpush1.bf16.msra.mxu0 %v2703
        %2724 = vmatprep.subr.bf16.mxu0 0
        %2725 = vmatpush2.bf16.msra.mxu0 0
        %2726 = vmatprep.subr.bf16.mxu0 0
        %2727 = vmatpush2.bf16.msra.mxu0 0
        %2728 = vmatprep.subr.bf16.mxu0 0
        %2729 = vmatpush2.bf16.msra.mxu0 0
        %2730 = vmatprep.subr.bf16.mxu0 0
        %2731 = vmatpush2.bf16.msra.mxu0 0
        %2732 = vmatprep.subr.bf16.mxu0 0
        %2733 = vmatpush2.bf16.msra.mxu0 0
        %2734 = vmatprep.subr.bf16.mxu0 0
        %2735 = vmatpush2.bf16.msra.mxu0 0
        %2736 = vmatprep.subr.bf16.mxu0 0
        %2737 = vmatpush2.bf16.msra.mxu0 0
        %2738 = vmatprep.subr.bf16.mxu0 0
        %2739 = vmatpush2.bf16.msra.mxu0 0
        %2740 = vmatprep.mubr.bf16.mxu0 0
        %2741 = vmatmul.mubr.bf16.gmra.mxu0 %v2706
        %v2742 = vpop.f32.mrf.mxu0
        %v2743 = vadd.f32 0.0, %v2742
        %v2744 = vpop.f32.mrf.mxu0
        %v2745 = vpop.f32.mrf.mxu0
        %v2746 = vadd.f32 0.0, %v2745
        %v2747 = vpop.f32.mrf.mxu0
        %2748 = vdwg.mxu0
        %v2750 = vsel %vm1461, %v2563, 0
        %2752 = vmatprep.subr.bf16.mxu0 0
        %2753 = vmatpush1.bf16.msra.mxu0 0
        %2754 = vmatprep.subr.bf16.mxu0 0
        %2755 = vmatpush1.bf16.msra.mxu0 0
        %2756 = vmatprep.subr.bf16.mxu0 0
        %2757 = vmatpush1.bf16.msra.mxu0 0
        %2758 = vmatprep.subr.bf16.mxu0 0
        %2759 = vmatpush1.bf16.msra.mxu0 0
        %2760 = vmatprep.subr.bf16.mxu0 0
        %2761 = vmatpush1.bf16.msra.mxu0 0
        %2762 = vmatprep.subr.bf16.mxu0 0
        %2763 = vmatpush1.bf16.msra.mxu0 0
        %2764 = vmatprep.subr.bf16.mxu0 0
        %2765 = vmatpush1.bf16.msra.mxu0 %v2565
        %2766 = vmatprep.subr.bf16.mxu0 0
        %2767 = vmatpush1.bf16.msra.mxu0 %v2564
        %2768 = vmatprep.subr.bf16.mxu0 0
        %2769 = vmatpush2.bf16.msra.mxu0 0
        %2770 = vmatprep.subr.bf16.mxu0 0
        %2771 = vmatpush2.bf16.msra.mxu0 0
        %2772 = vmatprep.subr.bf16.mxu0 0
        %2773 = vmatpush2.bf16.msra.mxu0 0
        %2774 = vmatprep.subr.bf16.mxu0 0
        %2775 = vmatpush2.bf16.msra.mxu0 0
        %2776 = vmatprep.subr.bf16.mxu0 0
        %2777 = vmatpush2.bf16.msra.mxu0 0
        %2778 = vmatprep.subr.bf16.mxu0 0
        %2779 = vmatpush2.bf16.msra.mxu0 0
        %2780 = vmatprep.subr.bf16.mxu0 0
        %2781 = vmatpush2.bf16.msra.mxu0 0
        %2782 = vmatprep.subr.bf16.mxu0 0
        %2783 = vmatpush2.bf16.msra.mxu0 0
        %2784 = vmatprep.mubr.bf16.mxu0 0
        %2785 = vmatmul.mubr.bf16.gmra.mxu0 %v2750
        %v2786 = vpop.f32.mrf.mxu0
        %v2787 = vadd.f32 %v2743, %v2786
        %v2788 = vpop.f32.mrf.mxu0
        %v2789 = vpop.f32.mrf.mxu0
        %v2790 = vadd.f32 %v2746, %v2789
        %v2791 = vpop.f32.mrf.mxu0
        %2792 = vdwg.mxu0
        %2793 = vrot.lane.b32.xlu0 %v2436, 64
        %v2794 = vpop.permute.xlu0 %2793
        %2795 = vrot.lane.b32.xlu0 %v2437, 64
        %v2796 = vpop.permute.xlu0 %2795
        %2797 = vrot.lane.b32.xlu0 %v2438, 64
        %v2798 = vpop.permute.xlu0 %2797
        %v2800 = vsel %vm1461, %v2794, 0
        %v2803 = vsel %vm1461, %v2796, 0
        %v2806 = vsel %vm1461, %v2798, 0
        %2808 = vmatprep.subr.bf16.mxu0 0
        %2809 = vmatpush1.bf16.xpose.msra.mxu0 0
        %2810 = vmatprep.subr.bf16.mxu0 0
        %2811 = vmatpush1.bf16.xpose.msra.mxu0 0
        %2812 = vmatprep.subr.bf16.mxu0 0
        %2813 = vmatpush1.bf16.xpose.msra.mxu0 0
        %2814 = vmatprep.subr.bf16.mxu0 0
        %2815 = vmatpush1.bf16.xpose.msra.mxu0 0
        %2816 = vmatprep.subr.bf16.mxu0 0
        %2817 = vmatpush1.bf16.xpose.msra.mxu0 0
        %2818 = vmatprep.subr.bf16.mxu0 0
        %2819 = vmatpush1.bf16.xpose.msra.mxu0 0
        %2820 = vmatprep.subr.bf16.mxu0 0
        %2821 = vmatpush1.bf16.xpose.msra.mxu0 %v2806
        %2822 = vmatprep.subr.bf16.mxu0 0
        %2823 = vmatpush1.bf16.xpose.msra.mxu0 %v2803
        %2824 = vmatprep.subr.bf16.mxu0 0
        %2825 = vmatpush2.bf16.xpose.msra.mxu0 0
        %2826 = vmatprep.subr.bf16.mxu0 0
        %2827 = vmatpush2.bf16.xpose.msra.mxu0 0
        %2828 = vmatprep.subr.bf16.mxu0 0
        %2829 = vmatpush2.bf16.xpose.msra.mxu0 0
        %2830 = vmatprep.subr.bf16.mxu0 0
        %2831 = vmatpush2.bf16.xpose.msra.mxu0 0
        %2832 = vmatprep.subr.bf16.mxu0 0
        %2833 = vmatpush2.bf16.xpose.msra.mxu0 0
        %2834 = vmatprep.subr.bf16.mxu0 0
        %2835 = vmatpush2.bf16.xpose.msra.mxu0 0
        %2836 = vmatprep.subr.bf16.mxu0 0
        %2837 = vmatpush2.bf16.xpose.msra.mxu0 0
        %2838 = vmatprep.subr.bf16.mxu0 0
        %2839 = vmatpush2.bf16.xpose.msra.mxu0 0
        %2840 = vmatprep.mubr.bf16.mxu0 0
        %2841 = vmatmul.mubr.bf16.gmra.mxu0 %v2800
        %v2842 = vpop.f32.mrf.mxu0
        %v2843 = vadd.f32 %v1183, %v2842
        %v2844 = vpop.f32.mrf.mxu0
        %v2845 = vpop.f32.mrf.mxu0
        %v2846 = vadd.f32 %v1184, %v2845
        %v2847 = vpop.f32.mrf.mxu0
        %2848 = vdwg.mxu0
        %v2849 = vsel %vm2489, %v2843, -inf
        %2850 = vmax.xlane.f32.xlu0 %v2849
        %v2851 = vpop.xlane.xlu0 %2850
        %v2852 = vsel %vm2489, %v2846, -inf
        %2853 = vmax.xlane.f32.xlu0 %v2852
        %v2854 = vpop.xlane.xlu0 %2853
        %v2855 = vsub.f32 %v2843, %v2851
        %v2856 = vsub.f32 %v2846, %v2854
        %v2857 = vmul.f32 %v2855, 1.442695
        %v2858 = vpow.pop %v2857
        %v2859 = vmul.f32 %v2856, 1.442695
        %v2860 = vpow.pop %v2859
        %v2861 = vsel %vm2489, %v2858, 0.0
        %2862 = vadd.xlane.f32.xlu0 %v2861
        %v2863 = vpop.xlane.xlu0 %2862
        %v2864 = vsel %vm2489, %v2860, 0.0
        %2865 = vadd.xlane.f32.xlu0 %v2864
        %v2866 = vpop.xlane.xlu0 %2865
        %v2867 = vpack.c.bf16 %v2860, %v2858
        %2868 = vrot.lane.b32.xlu0 %v2509, 64
        %v2869 = vpop.permute.xlu0 %2868
        %2870 = vrot.lane.b32.xlu0 %v2510, 64
        %v2871 = vpop.permute.xlu0 %2870
        %v2874 = vsel %vm2489, %v2867, 0
        %v2877 = vsel %vm2514, %v2871, 0
        %2879 = vmatprep.subr.bf16.mxu0 0
        %2880 = vmatpush1.bf16.msra.mxu0 0
        %2881 = vmatprep.subr.bf16.mxu0 0
        %2882 = vmatpush1.bf16.msra.mxu0 0
        %2883 = vmatprep.subr.bf16.mxu0 0
        %2884 = vmatpush1.bf16.msra.mxu0 0
        %2885 = vmatprep.subr.bf16.mxu0 0
        %2886 = vmatpush1.bf16.msra.mxu0 0
        %2887 = vmatprep.subr.bf16.mxu0 0
        %2888 = vmatpush1.bf16.msra.mxu0 0
        %2889 = vmatprep.subr.bf16.mxu0 0
        %2890 = vmatpush1.bf16.msra.mxu0 0
        %2891 = vmatprep.subr.bf16.mxu0 0
        %2892 = vmatpush1.bf16.msra.mxu0 %v2877
        %2893 = vmatprep.subr.bf16.mxu0 0
        %2894 = vmatpush1.bf16.msra.mxu0 %v2869
        %2895 = vmatprep.subr.bf16.mxu0 0
        %2896 = vmatpush2.bf16.msra.mxu0 0
        %2897 = vmatprep.subr.bf16.mxu0 0
        %2898 = vmatpush2.bf16.msra.mxu0 0
        %2899 = vmatprep.subr.bf16.mxu0 0
        %2900 = vmatpush2.bf16.msra.mxu0 0
        %2901 = vmatprep.subr.bf16.mxu0 0
        %2902 = vmatpush2.bf16.msra.mxu0 0
        %2903 = vmatprep.subr.bf16.mxu0 0
        %2904 = vmatpush2.bf16.msra.mxu0 0
        %2905 = vmatprep.subr.bf16.mxu0 0
        %2906 = vmatpush2.bf16.msra.mxu0 0
        %2907 = vmatprep.subr.bf16.mxu0 0
        %2908 = vmatpush2.bf16.msra.mxu0 0
        %2909 = vmatprep.subr.bf16.mxu0 0
        %2910 = vmatpush2.bf16.msra.mxu0 0
        %2911 = vmatprep.mubr.bf16.mxu0 0
        %2912 = vmatmul.mubr.bf16.gmra.mxu0 %v2874
        %v2913 = vpop.f32.mrf.mxu0
        %v2914 = vadd.f32 0.0, %v2913
        %v2915 = vpop.f32.mrf.mxu0
        %v2916 = vpop.f32.mrf.mxu0
        %v2917 = vadd.f32 0.0, %v2916
        %v2918 = vpop.f32.mrf.mxu0
        %2919 = vdwg.mxu0
        %v2920 = vrcp.pop %v2863
        %v2921 = vrcp.pop %v2866
        %v2922 = vmul.f32 %v2914, %v2920
        %v2923 = vmul.f32 %v2917, %v2921
        %v2924 = vpack.c.bf16 %v2923, %v2922
        %v2925 = vpack.c.bf16 %v2429, %v2428
        %v2926 = vpack.c.bf16 %v2431, %v2430
        %v2928 = vsel %vm1461, %v2924, 0
        %2930 = vmatprep.subr.bf16.mxu0 0
        %2931 = vmatpush1.bf16.msra.mxu0 0
        %2932 = vmatprep.subr.bf16.mxu0 0
        %2933 = vmatpush1.bf16.msra.mxu0 0
        %2934 = vmatprep.subr.bf16.mxu0 0
        %2935 = vmatpush1.bf16.msra.mxu0 0
        %2936 = vmatprep.subr.bf16.mxu0 0
        %2937 = vmatpush1.bf16.msra.mxu0 0
        %2938 = vmatprep.subr.bf16.mxu0 0
        %2939 = vmatpush1.bf16.msra.mxu0 0
        %2940 = vmatprep.subr.bf16.mxu0 0
        %2941 = vmatpush1.bf16.msra.mxu0 0
        %2942 = vmatprep.subr.bf16.mxu0 0
        %2943 = vmatpush1.bf16.msra.mxu0 %v2926
        %2944 = vmatprep.subr.bf16.mxu0 0
        %2945 = vmatpush1.bf16.msra.mxu0 %v2925
        %2946 = vmatprep.subr.bf16.mxu0 0
        %2947 = vmatpush2.bf16.msra.mxu0 0
        %2948 = vmatprep.subr.bf16.mxu0 0
        %2949 = vmatpush2.bf16.msra.mxu0 0
        %2950 = vmatprep.subr.bf16.mxu0 0
        %2951 = vmatpush2.bf16.msra.mxu0 0
        %2952 = vmatprep.subr.bf16.mxu0 0
        %2953 = vmatpush2.bf16.msra.mxu0 0
        %2954 = vmatprep.subr.bf16.mxu0 0
        %2955 = vmatpush2.bf16.msra.mxu0 0
        %2956 = vmatprep.subr.bf16.mxu0 0
        %2957 = vmatpush2.bf16.msra.mxu0 0
        %2958 = vmatprep.subr.bf16.mxu0 0
        %2959 = vmatpush2.bf16.msra.mxu0 0
        %2960 = vmatprep.subr.bf16.mxu0 0
        %2961 = vmatpush2.bf16.msra.mxu0 0
        %2962 = vmatprep.mubr.bf16.mxu0 0
        %2963 = vmatmul.mubr.bf16.gmra.mxu0 %v2928
        %v2964 = vpop.f32.mrf.mxu0
        %v2965 = vadd.f32 0.0, %v2964
        %v2966 = vpop.f32.mrf.mxu0
        %v2967 = vpop.f32.mrf.mxu0
        %v2968 = vadd.f32 0.0, %v2967
        %v2969 = vpop.f32.mrf.mxu0
        %2970 = vdwg.mxu0
        %v2971 = vadd.f32 %v2787, %v2965
        %v2972 = vadd.f32 %v2790, %v2968
        %2973 = vrot.lane.b32.xlu0 %v2436, 32
        %v2974 = vpop.permute.xlu0 %2973
        %2975 = vrot.lane.b32.xlu0 %v2437, 32
        %v2976 = vpop.permute.xlu0 %2975
        %2977 = vrot.lane.b32.xlu0 %v2438, 32
        %v2978 = vpop.permute.xlu0 %2977
        %v2980 = vsel %vm1461, %v2974, 0
        %v2983 = vsel %vm1461, %v2976, 0
        %v2986 = vsel %vm1461, %v2978, 0
        %2988 = vmatprep.subr.bf16.mxu0 0
        %2989 = vmatpush1.bf16.xpose.msra.mxu0 0
        %2990 = vmatprep.subr.bf16.mxu0 0
        %2991 = vmatpush1.bf16.xpose.msra.mxu0 0
        %2992 = vmatprep.subr.bf16.mxu0 0
        %2993 = vmatpush1.bf16.xpose.msra.mxu0 0
        %2994 = vmatprep.subr.bf16.mxu0 0
        %2995 = vmatpush1.bf16.xpose.msra.mxu0 0
        %2996 = vmatprep.subr.bf16.mxu0 0
        %2997 = vmatpush1.bf16.xpose.msra.mxu0 0
        %2998 = vmatprep.subr.bf16.mxu0 0
        %2999 = vmatpush1.bf16.xpose.msra.mxu0 0
        %3000 = vmatprep.subr.bf16.mxu0 0
        %3001 = vmatpush1.bf16.xpose.msra.mxu0 %v2986
        %3002 = vmatprep.subr.bf16.mxu0 0
        %3003 = vmatpush1.bf16.xpose.msra.mxu0 %v2983
        %3004 = vmatprep.subr.bf16.mxu0 0
        %3005 = vmatpush2.bf16.xpose.msra.mxu0 0
        %3006 = vmatprep.subr.bf16.mxu0 0
        %3007 = vmatpush2.bf16.xpose.msra.mxu0 0
        %3008 = vmatprep.subr.bf16.mxu0 0
        %3009 = vmatpush2.bf16.xpose.msra.mxu0 0
        %3010 = vmatprep.subr.bf16.mxu0 0
        %3011 = vmatpush2.bf16.xpose.msra.mxu0 0
        %3012 = vmatprep.subr.bf16.mxu0 0
        %3013 = vmatpush2.bf16.xpose.msra.mxu0 0
        %3014 = vmatprep.subr.bf16.mxu0 0
        %3015 = vmatpush2.bf16.xpose.msra.mxu0 0
        %3016 = vmatprep.subr.bf16.mxu0 0
        %3017 = vmatpush2.bf16.xpose.msra.mxu0 0
        %3018 = vmatprep.subr.bf16.mxu0 0
        %3019 = vmatpush2.bf16.xpose.msra.mxu0 0
        %3020 = vmatprep.mubr.bf16.mxu0 0
        %3021 = vmatmul.mubr.bf16.gmra.mxu0 %v2980
        %v3022 = vpop.f32.mrf.mxu0
        %v3023 = vadd.f32 %v1183, %v3022
        %v3024 = vpop.f32.mrf.mxu0
        %v3025 = vpop.f32.mrf.mxu0
        %v3026 = vadd.f32 %v1184, %v3025
        %v3027 = vpop.f32.mrf.mxu0
        %3028 = vdwg.mxu0
        %v3029 = vsel %vm2489, %v3023, -inf
        %3030 = vmax.xlane.f32.xlu0 %v3029
        %v3031 = vpop.xlane.xlu0 %3030
        %v3032 = vsel %vm2489, %v3026, -inf
        %3033 = vmax.xlane.f32.xlu0 %v3032
        %v3034 = vpop.xlane.xlu0 %3033
        %v3035 = vsub.f32 %v3023, %v3031
        %v3036 = vsub.f32 %v3026, %v3034
        %v3037 = vmul.f32 %v3035, 1.442695
        %v3038 = vpow.pop %v3037
        %v3039 = vmul.f32 %v3036, 1.442695
        %v3040 = vpow.pop %v3039
        %v3041 = vsel %vm2489, %v3038, 0.0
        %3042 = vadd.xlane.f32.xlu0 %v3041
        %v3043 = vpop.xlane.xlu0 %3042
        %v3044 = vsel %vm2489, %v3040, 0.0
        %3045 = vadd.xlane.f32.xlu0 %v3044
        %v3046 = vpop.xlane.xlu0 %3045
        %v3047 = vpack.c.bf16 %v3040, %v3038
        %3048 = vrot.lane.b32.xlu0 %v2509, 32
        %v3049 = vpop.permute.xlu0 %3048
        %3050 = vrot.lane.b32.xlu0 %v2510, 32
        %v3051 = vpop.permute.xlu0 %3050
        %v3054 = vsel %vm2489, %v3047, 0
        %v3057 = vsel %vm2514, %v3051, 0
        %3059 = vmatprep.subr.bf16.mxu0 0
        %3060 = vmatpush1.bf16.msra.mxu0 0
        %3061 = vmatprep.subr.bf16.mxu0 0
        %3062 = vmatpush1.bf16.msra.mxu0 0
        %3063 = vmatprep.subr.bf16.mxu0 0
        %3064 = vmatpush1.bf16.msra.mxu0 0
        %3065 = vmatprep.subr.bf16.mxu0 0
        %3066 = vmatpush1.bf16.msra.mxu0 0
        %3067 = vmatprep.subr.bf16.mxu0 0
        %3068 = vmatpush1.bf16.msra.mxu0 0
        %3069 = vmatprep.subr.bf16.mxu0 0
        %3070 = vmatpush1.bf16.msra.mxu0 0
        %3071 = vmatprep.subr.bf16.mxu0 0
        %3072 = vmatpush1.bf16.msra.mxu0 %v3057
        %3073 = vmatprep.subr.bf16.mxu0 0
        %3074 = vmatpush1.bf16.msra.mxu0 %v3049
        %3075 = vmatprep.subr.bf16.mxu0 0
        %3076 = vmatpush2.bf16.msra.mxu0 0
        %3077 = vmatprep.subr.bf16.mxu0 0
        %3078 = vmatpush2.bf16.msra.mxu0 0
        %3079 = vmatprep.subr.bf16.mxu0 0
        %3080 = vmatpush2.bf16.msra.mxu0 0
        %3081 = vmatprep.subr.bf16.mxu0 0
        %3082 = vmatpush2.bf16.msra.mxu0 0
        %3083 = vmatprep.subr.bf16.mxu0 0
        %3084 = vmatpush2.bf16.msra.mxu0 0
        %3085 = vmatprep.subr.bf16.mxu0 0
        %3086 = vmatpush2.bf16.msra.mxu0 0
        %3087 = vmatprep.subr.bf16.mxu0 0
        %3088 = vmatpush2.bf16.msra.mxu0 0
        %3089 = vmatprep.subr.bf16.mxu0 0
        %3090 = vmatpush2.bf16.msra.mxu0 0
        %3091 = vmatprep.mubr.bf16.mxu0 0
        %3092 = vmatmul.mubr.bf16.gmra.mxu0 %v3054
        %v3093 = vpop.f32.mrf.mxu0
        %v3094 = vadd.f32 0.0, %v3093
        %v3095 = vpop.f32.mrf.mxu0
        %v3096 = vpop.f32.mrf.mxu0
        %v3097 = vadd.f32 0.0, %v3096
        %v3098 = vpop.f32.mrf.mxu0
        %3099 = vdwg.mxu0
        %v3100 = vrcp.pop %v3043
        %v3101 = vrcp.pop %v3046
        %v3102 = vmul.f32 %v3094, %v3100
        %v3103 = vmul.f32 %v3097, %v3101
        %v3104 = vpack.c.bf16 %v3103, %v3102
        %v3105 = vpack.c.bf16 %v2433, %v2432
        %v3106 = vpack.c.bf16 %v2435, %v2434
        %v3108 = vsel %vm1461, %v3104, 0
        %3110 = vmatprep.subr.bf16.mxu0 0
        %3111 = vmatpush1.bf16.msra.mxu0 0
        %3112 = vmatprep.subr.bf16.mxu0 0
        %3113 = vmatpush1.bf16.msra.mxu0 0
        %3114 = vmatprep.subr.bf16.mxu0 0
        %3115 = vmatpush1.bf16.msra.mxu0 0
        %3116 = vmatprep.subr.bf16.mxu0 0
        %3117 = vmatpush1.bf16.msra.mxu0 0
        %3118 = vmatprep.subr.bf16.mxu0 0
        %3119 = vmatpush1.bf16.msra.mxu0 0
        %3120 = vmatprep.subr.bf16.mxu0 0
        %3121 = vmatpush1.bf16.msra.mxu0 0
        %3122 = vmatprep.subr.bf16.mxu0 0
        %3123 = vmatpush1.bf16.msra.mxu0 %v3106
        %3124 = vmatprep.subr.bf16.mxu0 0
        %3125 = vmatpush1.bf16.msra.mxu0 %v3105
        %3126 = vmatprep.subr.bf16.mxu0 0
        %3127 = vmatpush2.bf16.msra.mxu0 0
        %3128 = vmatprep.subr.bf16.mxu0 0
        %3129 = vmatpush2.bf16.msra.mxu0 0
        %3130 = vmatprep.subr.bf16.mxu0 0
        %3131 = vmatpush2.bf16.msra.mxu0 0
        %3132 = vmatprep.subr.bf16.mxu0 0
        %3133 = vmatpush2.bf16.msra.mxu0 0
        %3134 = vmatprep.subr.bf16.mxu0 0
        %3135 = vmatpush2.bf16.msra.mxu0 0
        %3136 = vmatprep.subr.bf16.mxu0 0
        %3137 = vmatpush2.bf16.msra.mxu0 0
        %3138 = vmatprep.subr.bf16.mxu0 0
        %3139 = vmatpush2.bf16.msra.mxu0 0
        %3140 = vmatprep.subr.bf16.mxu0 0
        %3141 = vmatpush2.bf16.msra.mxu0 0
        %3142 = vmatprep.mubr.bf16.mxu0 0
        %3143 = vmatmul.mubr.bf16.gmra.mxu0 %v3108
        %v3144 = vpop.f32.mrf.mxu0
        %v3145 = vadd.f32 0.0, %v3144
        %v3146 = vpop.f32.mrf.mxu0
        %v3147 = vpop.f32.mrf.mxu0
        %v3148 = vadd.f32 0.0, %v3147
        %v3149 = vpop.f32.mrf.mxu0
        %3150 = vdwg.mxu0
        %v3151 = vadd.f32 %v2971, %v3145
        %v3152 = vadd.f32 %v2972, %v3148
        %v3153 = vld [vmem:[#allocation19] sm:$0x1]
        %v3155 = vlaneseq
        %v3156 = vshrl.u32 %v3155, 7
        %v3157 = vsub.s32 0, %v3156
        %v3158 = vrot.slane %v3153, %v3157
        %v3160 = vadd.f32 %v3151, %v3158
        %v3161 = vadd.f32 %v3152, %v3158
        %v3162 = vadd.f32 %v2185, %v3160
        %v3163 = vadd.f32 %v2186, %v3161
        %3164 = vadd.xlane.f32.xlu0 %v3162
        %v3165 = vpop.xlane.xlu0 %3164
        %3166 = vadd.xlane.f32.xlu0 %v3163
        %v3167 = vpop.xlane.xlu0 %3166
        %v3168 = vmul.f32 %v3165, %v1189
        %v3169 = vmul.f32 %v3167, %v1189
        %v3170 = vsub.f32 %v3162, %v3168
        %v3171 = vsub.f32 %v3163, %v3169
        %v3172 = vmul.f32 %v3170, %v3170
        %v3173 = vmul.f32 %v3171, %v3171
        %3174 = vadd.xlane.f32.xlu0 %v3172
        %v3175 = vpop.xlane.xlu0 %3174
        %3176 = vadd.xlane.f32.xlu0 %v3173
        %v3177 = vpop.xlane.xlu0 %3176
        %v3178 = vmul.f32 %v3175, %v1189
        %v3179 = vmul.f32 %v3177, %v1189
        %v3180 = vadd.f32 %v3178, 1e-05
        %v3181 = vadd.f32 %v3179, 1e-05
        %v3182 = vrsqrt.pop %v3180
        %v3183 = vrsqrt.pop %v3181
        %v3184 = vmul.f32 %v3170, %v3182
        %v3185 = vmul.f32 %v3171, %v3183
        %v3186 = vld [vmem:[%s49] sm:$0x1]
        %v3188 = vlaneseq
        %v3189 = vshrl.u32 %v3188, 7
        %v3190 = vsub.s32 0, %v3189
        %v3191 = vrot.slane %v3186, %v3190
        %v3193 = vmul.f32 %v3184, %v3191
        %v3194 = vmul.f32 %v3185, %v3191
        %v3195 = vld [vmem:[%s51] sm:$0x1]
        %v3197 = vlaneseq
        %v3198 = vshrl.u32 %v3197, 7
        %v3199 = vsub.s32 0, %v3198
        %v3200 = vrot.slane %v3195, %v3199
        %v3202 = vadd.f32 %v3193, %v3200
        %v3203 = vadd.f32 %v3194, %v3200
        %v3204 = vld [vmem:[%s53] sm:$0xff]
        %v3205 = vld [vmem:[%s53 + $0x8] sm:$0xff]
        %v3206 = vld [vmem:[%s53 + $0x10] sm:$0xff]
        %v3207 = vld [vmem:[%s53 + $0x18] sm:$0xff]
        %v3208 = vld [vmem:[%s53 + $0x20] sm:$0xff]
        %v3209 = vld [vmem:[%s53 + $0x28] sm:$0xff]
        %v3210 = vld [vmem:[%s53 + $0x30] sm:$0xff]
        %v3211 = vld [vmem:[%s53 + $0x38] sm:$0xff]
        %v3212 = vld [vmem:[%s53 + $0x40] sm:$0xff]
        %v3213 = vld [vmem:[%s53 + $0x48] sm:$0xff]
        %v3214 = vld [vmem:[%s53 + $0x50] sm:$0xff]
        %v3215 = vld [vmem:[%s53 + $0x58] sm:$0xff]
        %v3216 = vld [vmem:[%s53 + $0x60] sm:$0xff]
        %v3217 = vld [vmem:[%s53 + $0x68] sm:$0xff]
        %v3218 = vld [vmem:[%s53 + $0x70] sm:$0xff]
        %v3219 = vld [vmem:[%s53 + $0x78] sm:$0xff]
        %v3220 = vld [vmem:[%s53 + $0x80] sm:$0xff]
        %v3221 = vld [vmem:[%s53 + $0x88] sm:$0xff]
        %v3222 = vld [vmem:[%s53 + $0x90] sm:$0xff]
        %v3223 = vld [vmem:[%s53 + $0x98] sm:$0xff]
        %v3224 = vld [vmem:[%s53 + $0xa0] sm:$0xff]
        %v3225 = vld [vmem:[%s53 + $0xa8] sm:$0xff]
        %v3226 = vld [vmem:[%s53 + $0xb0] sm:$0xff]
        %v3227 = vld [vmem:[%s53 + $0xb8] sm:$0xff]
        %v3228 = vld [vmem:[%s53 + $0xc0] sm:$0xff]
        %v3229 = vld [vmem:[%s53 + $0xc8] sm:$0xff]
        %v3230 = vld [vmem:[%s53 + $0xd0] sm:$0xff]
        %v3231 = vld [vmem:[%s53 + $0xd8] sm:$0xff]
        %v3232 = vld [vmem:[%s53 + $0xe0] sm:$0xff]
        %v3233 = vld [vmem:[%s53 + $0xe8] sm:$0xff]
        %v3234 = vld [vmem:[%s53 + $0xf0] sm:$0xff]
        %v3235 = vld [vmem:[%s53 + $0xf8] sm:$0xff]
        %v3236 = vpack.c.bf16 %v3203, %v3202
        %v3237 = vpack.c.bf16 %v3206, %v3204
        %v3238 = vpack.c.bf16 %v3207, %v3205
        %v3239 = vpack.c.bf16 %v3210, %v3208
        %v3240 = vpack.c.bf16 %v3211, %v3209
        %v3241 = vpack.c.bf16 %v3214, %v3212
        %v3242 = vpack.c.bf16 %v3215, %v3213
        %v3243 = vpack.c.bf16 %v3218, %v3216
        %v3244 = vpack.c.bf16 %v3219, %v3217
        %v3245 = vpack.c.bf16 %v3222, %v3220
        %v3246 = vpack.c.bf16 %v3223, %v3221
        %v3247 = vpack.c.bf16 %v3226, %v3224
        %v3248 = vpack.c.bf16 %v3227, %v3225
        %v3249 = vpack.c.bf16 %v3230, %v3228
        %v3250 = vpack.c.bf16 %v3231, %v3229
        %v3251 = vpack.c.bf16 %v3234, %v3232
        %v3252 = vpack.c.bf16 %v3235, %v3233
        %v3253 = vld [vmem:[%s55] sm:$0x3]
        %v3255 = vlaneseq
        %v3256 = vshrl.u32 %v3255, 7
        %v3257 = vsub.s32 0, %v3256
        %v3258 = vrot.slane %v3253, %v3257
        %v3259 = vlaneseq
        %v3260 = vshrl.u32 %v3259, 7
        %v3261 = vsub.s32 1, %v3260
        %v3262 = vrot.slane %v3253, %v3261
        %3265 = vmatprep.subr.bf16.mxu0 %v3252
        %3266 = vmatpush1.bf16.msra.mxu0 %v3251
        %3267 = vmatprep.subr.bf16.mxu0 %v3250
        %3268 = vmatpush1.bf16.msra.mxu0 %v3249
        %3269 = vmatprep.subr.bf16.mxu0 %v3248
        %3270 = vmatpush1.bf16.msra.mxu0 %v3247
        %3271 = vmatprep.subr.bf16.mxu0 %v3246
        %3272 = vmatpush1.bf16.msra.mxu0 %v3245
        %3273 = vmatprep.subr.bf16.mxu0 %v3244
        %3274 = vmatpush1.bf16.msra.mxu0 %v3243
        %3275 = vmatprep.subr.bf16.mxu0 %v3242
        %3276 = vmatpush1.bf16.msra.mxu0 %v3241
        %3277 = vmatprep.subr.bf16.mxu0 %v3240
        %3278 = vmatpush1.bf16.msra.mxu0 %v3239
        %3279 = vmatprep.subr.bf16.mxu0 %v3238
        %3280 = vmatpush1.bf16.msra.mxu0 %v3237
        %3281 = vmatprep.subr.bf16.mxu0 0
        %3282 = vmatpush2.bf16.msra.mxu0 0
        %3283 = vmatprep.subr.bf16.mxu0 0
        %3284 = vmatpush2.bf16.msra.mxu0 0
        %3285 = vmatprep.subr.bf16.mxu0 0
        %3286 = vmatpush2.bf16.msra.mxu0 0
        %3287 = vmatprep.subr.bf16.mxu0 0
        %3288 = vmatpush2.bf16.msra.mxu0 0
        %3289 = vmatprep.subr.bf16.mxu0 0
        %3290 = vmatpush2.bf16.msra.mxu0 0
        %3291 = vmatprep.subr.bf16.mxu0 0
        %3292 = vmatpush2.bf16.msra.mxu0 0
        %3293 = vmatprep.subr.bf16.mxu0 0
        %3294 = vmatpush2.bf16.msra.mxu0 0
        %3295 = vmatprep.subr.bf16.mxu0 0
        %3296 = vmatpush2.bf16.msra.mxu0 0
        %3297 = vmatprep.mubr.bf16.mxu0 0
        %3298 = vmatmul.mubr.bf16.gmra.mxu0 %v3236
        %v3299 = vpop.f32.mrf.mxu0
        %v3300 = vadd.f32 %v3258, %v3299
        %v3301 = vpop.f32.mrf.mxu0
        %v3302 = vadd.f32 %v3262, %v3301
        %v3303 = vpop.f32.mrf.mxu0
        %v3304 = vadd.f32 %v3258, %v3303
        %v3305 = vpop.f32.mrf.mxu0
        %v3306 = vadd.f32 %v3262, %v3305
        %3307 = vdwg.mxu0
        %v3308 = vmax.f32 %v3300, 0.0
        %v3309 = vmax.f32 %v3302, 0.0
        %v3310 = vmax.f32 %v3304, 0.0
        %v3311 = vmax.f32 %v3306, 0.0
        %v3312 = vld [vmem:[%s57] sm:$0xff]
        %v3313 = vld [vmem:[%s57 + $0x8] sm:$0xff]
        %v3314 = vld [vmem:[%s57 + $0x10] sm:$0xff]
        %v3315 = vld [vmem:[%s57 + $0x18] sm:$0xff]
        %v3316 = vld [vmem:[%s57 + $0x20] sm:$0xff]
        %v3317 = vld [vmem:[%s57 + $0x28] sm:$0xff]
        %v3318 = vld [vmem:[%s57 + $0x30] sm:$0xff]
        %v3319 = vld [vmem:[%s57 + $0x38] sm:$0xff]
        %v3320 = vld [vmem:[%s57 + $0x40] sm:$0xff]
        %v3321 = vld [vmem:[%s57 + $0x48] sm:$0xff]
        %v3322 = vld [vmem:[%s57 + $0x50] sm:$0xff]
        %v3323 = vld [vmem:[%s57 + $0x58] sm:$0xff]
        %v3324 = vld [vmem:[%s57 + $0x60] sm:$0xff]
        %v3325 = vld [vmem:[%s57 + $0x68] sm:$0xff]
        %v3326 = vld [vmem:[%s57 + $0x70] sm:$0xff]
        %v3327 = vld [vmem:[%s57 + $0x78] sm:$0xff]
        %v3328 = vld [vmem:[%s57 + $0x80] sm:$0xff]
        %v3329 = vld [vmem:[%s57 + $0x88] sm:$0xff]
        %v3330 = vld [vmem:[%s57 + $0x90] sm:$0xff]
        %v3331 = vld [vmem:[%s57 + $0x98] sm:$0xff]
        %v3332 = vld [vmem:[%s57 + $0xa0] sm:$0xff]
        %v3333 = vld [vmem:[%s57 + $0xa8] sm:$0xff]
        %v3334 = vld [vmem:[%s57 + $0xb0] sm:$0xff]
        %v3335 = vld [vmem:[%s57 + $0xb8] sm:$0xff]
        %v3336 = vld [vmem:[%s57 + $0xc0] sm:$0xff]
        %v3337 = vld [vmem:[%s57 + $0xc8] sm:$0xff]
        %v3338 = vld [vmem:[%s57 + $0xd0] sm:$0xff]
        %v3339 = vld [vmem:[%s57 + $0xd8] sm:$0xff]
        %v3340 = vld [vmem:[%s57 + $0xe0] sm:$0xff]
        %v3341 = vld [vmem:[%s57 + $0xe8] sm:$0xff]
        %v3342 = vld [vmem:[%s57 + $0xf0] sm:$0xff]
        %v3343 = vld [vmem:[%s57 + $0xf8] sm:$0xff]
        %v3344 = vpack.c.bf16 %v3310, %v3308
        %v3345 = vpack.c.bf16 %v3311, %v3309
        %v3346 = vpack.c.bf16 %v3313, %v3312
        %v3347 = vpack.c.bf16 %v3315, %v3314
        %v3348 = vpack.c.bf16 %v3317, %v3316
        %v3349 = vpack.c.bf16 %v3319, %v3318
        %v3350 = vpack.c.bf16 %v3321, %v3320
        %v3351 = vpack.c.bf16 %v3323, %v3322
        %v3352 = vpack.c.bf16 %v3325, %v3324
        %v3353 = vpack.c.bf16 %v3327, %v3326
        %v3354 = vpack.c.bf16 %v3329, %v3328
        %v3355 = vpack.c.bf16 %v3331, %v3330
        %v3356 = vpack.c.bf16 %v3333, %v3332
        %v3357 = vpack.c.bf16 %v3335, %v3334
        %v3358 = vpack.c.bf16 %v3337, %v3336
        %v3359 = vpack.c.bf16 %v3339, %v3338
        %v3360 = vpack.c.bf16 %v3341, %v3340
        %v3361 = vpack.c.bf16 %v3343, %v3342
        %v3362 = vld [vmem:[%s59] sm:$0x1]
        %v3364 = vlaneseq
        %v3365 = vshrl.u32 %v3364, 7
        %v3366 = vsub.s32 0, %v3365
        %v3367 = vrot.slane %v3362, %v3366
        %3369 = vmatprep.subr.bf16.mxu0 0
        %3370 = vmatpush1.bf16.msra.mxu0 %v3353
        %3371 = vmatprep.subr.bf16.mxu0 0
        %3372 = vmatpush1.bf16.msra.mxu0 %v3352
        %3373 = vmatprep.subr.bf16.mxu0 0
        %3374 = vmatpush1.bf16.msra.mxu0 %v3351
        %3375 = vmatprep.subr.bf16.mxu0 0
        %3376 = vmatpush1.bf16.msra.mxu0 %v3350
        %3377 = vmatprep.subr.bf16.mxu0 0
        %3378 = vmatpush1.bf16.msra.mxu0 %v3349
        %3379 = vmatprep.subr.bf16.mxu0 0
        %3380 = vmatpush1.bf16.msra.mxu0 %v3348
        %3381 = vmatprep.subr.bf16.mxu0 0
        %3382 = vmatpush1.bf16.msra.mxu0 %v3347
        %3383 = vmatprep.subr.bf16.mxu0 0
        %3384 = vmatpush1.bf16.msra.mxu0 %v3346
        %3385 = vmatprep.subr.bf16.mxu0 0
        %3386 = vmatpush2.bf16.msra.mxu0 %v3361
        %3387 = vmatprep.subr.bf16.mxu0 0
        %3388 = vmatpush2.bf16.msra.mxu0 %v3360
        %3389 = vmatprep.subr.bf16.mxu0 0
        %3390 = vmatpush2.bf16.msra.mxu0 %v3359
        %3391 = vmatprep.subr.bf16.mxu0 0
        %3392 = vmatpush2.bf16.msra.mxu0 %v3358
        %3393 = vmatprep.subr.bf16.mxu0 0
        %3394 = vmatpush2.bf16.msra.mxu0 %v3357
        %3395 = vmatprep.subr.bf16.mxu0 0
        %3396 = vmatpush2.bf16.msra.mxu0 %v3356
        %3397 = vmatprep.subr.bf16.mxu0 0
        %3398 = vmatpush2.bf16.msra.mxu0 %v3355
        %3399 = vmatprep.subr.bf16.mxu0 0
        %3400 = vmatpush2.bf16.msra.mxu0 %v3354
        %3401 = vmatprep.mubr.bf16.mxu0 %v3345
        %3402 = vmatmul.mubr.bf16.gmra.mxu0 %v3344
        %v3403 = vpop.f32.mrf.mxu0
        %v3404 = vadd.f32 %v3367, %v3403
        %v3405 = vpop.f32.mrf.mxu0
        %v3406 = vpop.f32.mrf.mxu0
        %v3407 = vadd.f32 %v3367, %v3406
        %v3408 = vpop.f32.mrf.mxu0
        %3409 = vdwg.mxu0
        %v3410 = vadd.f32 %v3202, %v3404
        %v3411 = vadd.f32 %v3203, %v3407
        %3412 = vst [vmem:[%s1152] sm:$0xff] %v3410
        %3413 = vst [vmem:[%s1152 + $0x8] sm:$0xff] %v3411
        %s3414 = sand.u32 %s743, 1
        %s3415 = scalar_lea.sflag [#allocation4], %s3414
        %s3416 = sand.u32 %s743, 1
        %s3417 = smul.addr %s3416, 16
        %s3418 = scalar_lea.vmem [#allocation20], %s3417
        // Predicated region
        $region185: #{decoder_layer.1} parent=139 // pred_check
          %p3419 = pneg %p753
        $region186: #{decoder_layer.1} parent=139 // pred_check_branch
          %3421 = sbr.rel (%p3419) target = $region188
        $region187: #{decoder_layer.1} parent=139 // pred_region
          %s3423 = ssub.s32 256, 256
          %3424 = vsyncadd %s3415, %s3423
          %s3425 = smul.addr %s85, 2
          %s3426 = smul.addr %s3425, 128
          %s3427 = scalar_lea.hbm %s61, %s3426
          %s3428 = sshll.u32 %s3418, 4
          %s3429 = int_to_ptr.vmem [resolvable:$true] %s3428
          %3434 = dma.vmem_to_hbm [thread:$0]  %s3429, 256, %s3427, %s3415, 128, 128, 8
        $region188: #{decoder_layer.1} parent=139 // pred_fallthru
          _
      $region140: #{decoder_layer.1} parent=5 // pred_fallthru
        _
      %p3435 = scmp.le.s32.totalorder 2, %s80
      // Predicated region
      $region189: #{decoder_layer.1} parent=5 // pred_check
        %p3436 = pneg %p3435
      $region190: #{decoder_layer.1} parent=5 // pred_check_branch
        %3438 = sbr.rel (%p3436) target = $region192
      $region191: #{decoder_layer.1} parent=5 // pred_region
        %s3439 = ssub.s32 %s80, 2
        // Predicated region
        $region193: #{decoder_layer.1} parent=191 // pred_check
          %p3440 = pneg %p759
        $region194: #{decoder_layer.1} parent=191 // pred_check_branch
          %3442 = sbr.rel (%p3440) target = $region196
        $region195: #{decoder_layer.1} parent=191 // pred_region
          %s3443 = sand.u32 %s744, 1
          %s3444 = scalar_lea.sflag [#allocation4], %s3443
          %s3445 = sand.u32 %s744, 1
          %s3446 = smul.addr %s3445, 16
          %s3447 = scalar_lea.vmem [#allocation20], %s3446
          %3448 = dma.done %s3444, 256
        $region196: #{decoder_layer.1} parent=191 // pred_fallthru
          _
      $region192: #{decoder_layer.1} parent=5 // pred_fallthru
        _
    $region6: #{decoder_layer.1} parent=1 // loop_footer
      %s84 = sadd.s32 1, %s80
    $region7: #{decoder_layer.1} parent=1 // loop_footer_branch
      %79 = sbr.rel target = $region3
    $region8: #{decoder_layer.1} parent=1 // loop_exit
      _
    %3449 = vsyncpa [#allocation3], 1
    %s3450 = scalar_lea.sflag [#allocation3], 1
    %3451 = vsyncpa %s3450, 1
    %3452 = vsyncpa [#allocation6], 1
    %s3453 = scalar_lea.sflag [#allocation6], 1
    %3454 = vsyncpa %s3453, 1
    %3455 = vsyncpa [#allocation9], 1
    %3456 = vsyncpa [#allocation12], 1
    %3457 = vsyncpa [#allocation15], 1
    %3458 = vsyncpa [#allocation18], 1
    %3459 = vsyncpa [#allocation4], 1
    %s3460 = scalar_lea.sflag [#allocation4], 1
    %3461 = vsyncpa %s3460, 1

</llo_original>
